<compile_context>
chip_gen: v7x
topology: tpu7x:2x2x1
jax: 0.10.0
libtpu: 0.0.40
codegen_flags: <defaults>
</compile_context>

<pallas_src>
import numpy as np
import jax
import jax.numpy as jnp
from jax.experimental import pallas as pl
from jax.experimental.pallas import tpu as pltpu


def sw_matricize(x, *, num_heads, head_dim, grid_size, patch_size,
                 vmem_budget_bytes=24 * 1024 * 1024):
    """x: (B, C, H, W) with C = num_heads*head_dim, H = g0*p0, W = g1*p1.

    Returns (2*B*num_heads, g0*g1, head_dim, p0*p1), matching
    SWMatricize(...).forward(x) with default shifts.
    """
    B, C, H, W = x.shape
    nh, hd = num_heads, head_dim
    g0, g1 = grid_size
    p0, p1 = patch_size
    assert C == nh * hd and H == g0 * p0 and W == g1 * p1
    sh0, sh1 = p0 // 2, p1 // 2              # default SWMatricize shift (patch//2)
    G, P = g0 * g1, p0 * p1
    BH = B * nh
    itemsize = x.dtype.itemsize

    # dtype-aware sublane quantum: 8 (f32), 16 (bf16/f16), 32 (int8/fp8).
    SUB = 8 * max(1, 4 // itemsize)

    def lane_pad(n):
        return -(-n // 128) * 128

    row_lanes = lane_pad(hd * H * W)         # padded lanes per bh row (in & out)
    # Double-buffered bytes per bh row: 2 * (input row + 2x-sized output row).
    per_row_bytes = 2 * (row_lanes + 2 * row_lanes) * itemsize

    if BH < 2 * SUB:
        bh_blk = BH                          # single full-dim block (always legal)
    else:
        cap_budget = max(SUB, (vmem_budget_bytes // per_row_bytes) // SUB * SUB)
        cap_split = max(SUB, (BH // 2) // SUB * SUB)   # >= 2 steps for v7x megacore
        bh_blk = min(cap_budget, cap_split)
    n_steps = pl.cdiv(BH, bh_blk)

    # Actual (padded) footprint drives vmem_limit_bytes, with headroom for
    # Mosaic internal scratch; stays well under v7x's 64 MiB physical VMEM.
    sub_pad = -(-bh_blk // SUB) * SUB
    in_block_bytes = sub_pad * row_lanes * itemsize
    out_block_bytes = 2 * sub_pad * row_lanes * itemsize
    footprint = 2 * (in_block_bytes + out_block_bytes)          # double buffering
    vmem_limit = int(min(max(footprint + (4 << 20), 16 << 20), 96 << 20))

    # Free contiguous view: (B, nh*hd, H, W) -> (B*nh, hd*H*W).
    # bh -> sublane axis, flattened (d, row, col) -> lane axis.
    xk = x.reshape(BH, hd * H * W)

    shifts = ((0, 0), (sh0, sh1))            # window 0 (unshifted), window 1

    # Keep hoisted per-(gi) bands only while they fit comfortably in vregs.
    band_vregs = -(-(p0 * W) // 128)
    hoist_bands = hd * band_vregs <= 16

    def kernel(x_ref, o_ref):
        # x_ref: (bh_blk, hd*H*W)    o_ref: (2, bh_blk, G*hd*P)  [= hd*H*W lanes]
        for w, (s0, s1) in enumerate(shifts):
            for gi in range(g0):
                r0 = (gi * p0 - s0) % H                   # static row roll

                def load_band(d, _r0=r0):
                    # p0 consecutive (rolled) rows of the d-th channel plane,
                    # as one (bh_blk, p0*W) lane band; <=2 chunks if wrapping.
                    plane = d * H * W
                    if _r0 + p0 <= H:
                        return x_ref[:, plane + _r0 * W: plane + (_r0 + p0) * W]
                    k = H - _r0
                    return jnp.concatenate(
                        [x_ref[:, plane + _r0 * W: plane + H * W],
                         x_ref[:, plane: plane + (p0 - k) * W]], axis=-1)

                bands = [load_band(d) for d in range(hd)] if hoist_bands else None

                for gj in range(g1):
                    c0 = (gj * p1 - s1) % W               # static col roll
                    dregs = []
                    for d in range(hd):
                        band = bands[d] if hoist_bands else load_band(d)
                        pieces = []
                        for r in range(p0):
                            lo = r * W + c0
                            if c0 + p1 <= W:              # contiguous run
                                pieces.append(band[:, lo: lo + p1])
                            else:                         # wraps around W
                                k = W - c0
                                pieces.append(jnp.concatenate(
                                    [band[:, lo: r * W + W],
                                     band[:, r * W: r * W + (p1 - k)]], axis=-1))
                        dregs.append(jnp.concatenate(pieces, axis=-1))   # (bh, P)
                    slab = jnp.concatenate(dregs, axis=-1)               # (bh, hd*P)
                    off = (gi * g1 + gj) * hd * P
                    # Full-width, 128-aligned lane-dense store.
                    o_ref[w, :, off: off + hd * P] = slab

    out3 = pl.pallas_call(
        kernel,
        out_shape=jax.ShapeDtypeStruct((2, BH, hd * H * W), x.dtype),
        grid_spec=pltpu.PrefetchScalarGridSpec(
            num_scalar_prefetch=0,
            grid=(n_steps,),
            in_specs=[pl.BlockSpec((bh_blk, hd * H * W), lambda i: (i, 0))],
            out_specs=pl.BlockSpec((2, bh_blk, hd * H * W), lambda i: (0, i, 0)),
        ),
        compiler_params=pltpu.CompilerParams(
            dimension_semantics=("parallel",),
            vmem_limit_bytes=vmem_limit),
    )(xk)

    # Free contiguous view: (2, BH, G*hd*P) -> (2*BH, G, hd, P)
    # == cat([window0, window1], dim=0).
    return out3.reshape(2 * BH, G, hd, P)


def sw_matricize_reference(x, *, num_heads, head_dim, grid_size, patch_size):
    """Pure-JAX reference mirroring the PyTorch module (for verification)."""
    B, C, H, W = x.shape
    nh, hd = num_heads, head_dim
    g0, g1 = grid_size
    p0, p1 = patch_size

    def matricize(xx):
        r = xx.reshape(B, nh, hd, g0, p0, g1, p1)
        r = r.transpose(0, 1, 3, 5, 2, 4, 6)      # b h g0 g1 d p0 p1
        return r.reshape(B * nh, g0 * g1, hd, p0 * p1)

    out0 = matricize(x)
    out1 = matricize(jnp.roll(x, (p0 // 2, p1 // 2), axis=(2, 3)))
    return jnp.concatenate([out0, out1], axis=0)


if __name__ == "__main__":
    # Small config consistent with the module:
    #   input_size = (B, nh*hd, g0*p0, g1*p1); BH = 16 -> two grid steps.
    B = 2
    num_heads, head_dim = 8, 8       # C = 64
    grid_size = (2, 2)
    patch_size = (8, 8)              # H = W = 16
    C = num_heads * head_dim
    H = grid_size[0] * patch_size[0]
    W = grid_size[1] * patch_size[1]

    key = jax.random.PRNGKey(0)
    x = jax.random.normal(key, (B, C, H, W), dtype=jnp.float32)

    out = sw_matricize(x, num_heads=num_heads, head_dim=head_dim,
                       grid_size=grid_size, patch_size=patch_size)
    out = jax.block_until_ready(out)

    ref = sw_matricize_reference(x, num_heads=num_heads, head_dim=head_dim,
                                 grid_size=grid_size, patch_size=patch_size)
    ref = jax.block_until_ready(ref)

    assert out.shape == (2 * B * num_heads, grid_size[0] * grid_size[1],
                         head_dim, patch_size[0] * patch_size[1])
    np.testing.assert_allclose(np.asarray(out), np.asarray(ref),
                               rtol=0.0, atol=0.0)
    print("KERNEL_OK")
</pallas_src>

<mosaic_0001>
module attributes {stable_mosaic.version = 11 : i64} {
  func.func @kernel(%arg0: i32, %arg1: memref<8x2048xf32, #tpu.memory_space<vmem>>, %arg2: memref<2x8x2048xf32, #tpu.memory_space<vmem>>) attributes {dimension_semantics = [#tpu.dimension_semantics<parallel>], iteration_bounds = array<i64: 2>, scalar_prefetch = 0 : i64, scratch_operands = 0 : i64, tpu.core_type = #tpu.core_type<tc>, window_params = [{transform_indices = @transform_0, window_bounds = array<i64: 8, 2048>}, {transform_indices = @transform_1, window_bounds = array<i64: 2, 8, 2048>}]} {
    %c0 = arith.constant 0 : index
    %c0_0 = arith.constant 0 : index
    %0 = vector.load %arg1[%c0, %c0_0] : memref<8x2048xf32, #tpu.memory_space<vmem>>, vector<8x128xf32>
    %c0_1 = arith.constant 0 : index
    %c256 = arith.constant 256 : index
    %1 = vector.load %arg1[%c0_1, %c256] : memref<8x2048xf32, #tpu.memory_space<vmem>>, vector<8x128xf32>
    %c0_2 = arith.constant 0 : index
    %c512 = arith.constant 512 : index
    %2 = vector.load %arg1[%c0_2, %c512] : memref<8x2048xf32, #tpu.memory_space<vmem>>, vector<8x128xf32>
    %c0_3 = arith.constant 0 : index
    %c768 = arith.constant 768 : index
    %3 = vector.load %arg1[%c0_3, %c768] : memref<8x2048xf32, #tpu.memory_space<vmem>>, vector<8x128xf32>
    %c0_4 = arith.constant 0 : index
    %c1024 = arith.constant 1024 : index
    %4 = vector.load %arg1[%c0_4, %c1024] : memref<8x2048xf32, #tpu.memory_space<vmem>>, vector<8x128xf32>
    %c0_5 = arith.constant 0 : index
    %c1280 = arith.constant 1280 : index
    %5 = vector.load %arg1[%c0_5, %c1280] : memref<8x2048xf32, #tpu.memory_space<vmem>>, vector<8x128xf32>
    %c0_6 = arith.constant 0 : index
    %c1536 = arith.constant 1536 : index
    %6 = vector.load %arg1[%c0_6, %c1536] : memref<8x2048xf32, #tpu.memory_space<vmem>>, vector<8x128xf32>
    %c0_7 = arith.constant 0 : index
    %c1792 = arith.constant 1792 : index
    %7 = vector.load %arg1[%c0_7, %c1792] : memref<8x2048xf32, #tpu.memory_space<vmem>>, vector<8x128xf32>
    %8 = vector.extract_strided_slice %0 {offsets = [0, 0], sizes = [8, 8], strides = [1, 1]} : vector<8x128xf32> to vector<8x8xf32>
    %9 = vector.extract_strided_slice %0 {offsets = [0, 16], sizes = [8, 8], strides = [1, 1]} : vector<8x128xf32> to vector<8x8xf32>
    %10 = vector.extract_strided_slice %0 {offsets = [0, 32], sizes = [8, 8], strides = [1, 1]} : vector<8x128xf32> to vector<8x8xf32>
    %11 = vector.extract_strided_slice %0 {offsets = [0, 48], sizes = [8, 8], strides = [1, 1]} : vector<8x128xf32> to vector<8x8xf32>
    %12 = vector.extract_strided_slice %0 {offsets = [0, 64], sizes = [8, 8], strides = [1, 1]} : vector<8x128xf32> to vector<8x8xf32>
    %13 = vector.extract_strided_slice %0 {offsets = [0, 80], sizes = [8, 8], strides = [1, 1]} : vector<8x128xf32> to vector<8x8xf32>
    %14 = vector.extract_strided_slice %0 {offsets = [0, 96], sizes = [8, 8], strides = [1, 1]} : vector<8x128xf32> to vector<8x8xf32>
    %15 = vector.extract_strided_slice %0 {offsets = [0, 112], sizes = [8, 8], strides = [1, 1]} : vector<8x128xf32> to vector<8x8xf32>
    %16 = tpu.concatenate %8, %9, %10, %11, %12, %13, %14, %15 in 1 : vector<8x8xf32>, vector<8x8xf32>, vector<8x8xf32>, vector<8x8xf32>, vector<8x8xf32>, vector<8x8xf32>, vector<8x8xf32>, vector<8x8xf32> -> vector<8x64xf32>
    %17 = vector.extract_strided_slice %1 {offsets = [0, 0], sizes = [8, 8], strides = [1, 1]} : vector<8x128xf32> to vector<8x8xf32>
    %18 = vector.extract_strided_slice %1 {offsets = [0, 16], sizes = [8, 8], strides = [1, 1]} : vector<8x128xf32> to vector<8x8xf32>
    %19 = vector.extract_strided_slice %1 {offsets = [0, 32], sizes = [8, 8], strides = [1, 1]} : vector<8x128xf32> to vector<8x8xf32>
    %20 = vector.extract_strided_slice %1 {offsets = [0, 48], sizes = [8, 8], strides = [1, 1]} : vector<8x128xf32> to vector<8x8xf32>
    %21 = vector.extract_strided_slice %1 {offsets = [0, 64], sizes = [8, 8], strides = [1, 1]} : vector<8x128xf32> to vector<8x8xf32>
    %22 = vector.extract_strided_slice %1 {offsets = [0, 80], sizes = [8, 8], strides = [1, 1]} : vector<8x128xf32> to vector<8x8xf32>
    %23 = vector.extract_strided_slice %1 {offsets = [0, 96], sizes = [8, 8], strides = [1, 1]} : vector<8x128xf32> to vector<8x8xf32>
    %24 = vector.extract_strided_slice %1 {offsets = [0, 112], sizes = [8, 8], strides = [1, 1]} : vector<8x128xf32> to vector<8x8xf32>
    %25 = tpu.concatenate %17, %18, %19, %20, %21, %22, %23, %24 in 1 : vector<8x8xf32>, vector<8x8xf32>, vector<8x8xf32>, vector<8x8xf32>, vector<8x8xf32>, vector<8x8xf32>, vector<8x8xf32>, vector<8x8xf32> -> vector<8x64xf32>
    %26 = vector.extract_strided_slice %2 {offsets = [0, 0], sizes = [8, 8], strides = [1, 1]} : vector<8x128xf32> to vector<8x8xf32>
    %27 = vector.extract_strided_slice %2 {offsets = [0, 16], sizes = [8, 8], strides = [1, 1]} : vector<8x128xf32> to vector<8x8xf32>
    %28 = vector.extract_strided_slice %2 {offsets = [0, 32], sizes = [8, 8], strides = [1, 1]} : vector<8x128xf32> to vector<8x8xf32>
    %29 = vector.extract_strided_slice %2 {offsets = [0, 48], sizes = [8, 8], strides = [1, 1]} : vector<8x128xf32> to vector<8x8xf32>
    %30 = vector.extract_strided_slice %2 {offsets = [0, 64], sizes = [8, 8], strides = [1, 1]} : vector<8x128xf32> to vector<8x8xf32>
    %31 = vector.extract_strided_slice %2 {offsets = [0, 80], sizes = [8, 8], strides = [1, 1]} : vector<8x128xf32> to vector<8x8xf32>
    %32 = vector.extract_strided_slice %2 {offsets = [0, 96], sizes = [8, 8], strides = [1, 1]} : vector<8x128xf32> to vector<8x8xf32>
    %33 = vector.extract_strided_slice %2 {offsets = [0, 112], sizes = [8, 8], strides = [1, 1]} : vector<8x128xf32> to vector<8x8xf32>
    %34 = tpu.concatenate %26, %27, %28, %29, %30, %31, %32, %33 in 1 : vector<8x8xf32>, vector<8x8xf32>, vector<8x8xf32>, vector<8x8xf32>, vector<8x8xf32>, vector<8x8xf32>, vector<8x8xf32>, vector<8x8xf32> -> vector<8x64xf32>
    %35 = vector.extract_strided_slice %3 {offsets = [0, 0], sizes = [8, 8], strides = [1, 1]} : vector<8x128xf32> to vector<8x8xf32>
    %36 = vector.extract_strided_slice %3 {offsets = [0, 16], sizes = [8, 8], strides = [1, 1]} : vector<8x128xf32> to vector<8x8xf32>
    %37 = vector.extract_strided_slice %3 {offsets = [0, 32], sizes = [8, 8], strides = [1, 1]} : vector<8x128xf32> to vector<8x8xf32>
    %38 = vector.extract_strided_slice %3 {offsets = [0, 48], sizes = [8, 8], strides = [1, 1]} : vector<8x128xf32> to vector<8x8xf32>
    %39 = vector.extract_strided_slice %3 {offsets = [0, 64], sizes = [8, 8], strides = [1, 1]} : vector<8x128xf32> to vector<8x8xf32>
    %40 = vector.extract_strided_slice %3 {offsets = [0, 80], sizes = [8, 8], strides = [1, 1]} : vector<8x128xf32> to vector<8x8xf32>
    %41 = vector.extract_strided_slice %3 {offsets = [0, 96], sizes = [8, 8], strides = [1, 1]} : vector<8x128xf32> to vector<8x8xf32>
    %42 = vector.extract_strided_slice %3 {offsets = [0, 112], sizes = [8, 8], strides = [1, 1]} : vector<8x128xf32> to vector<8x8xf32>
    %43 = tpu.concatenate %35, %36, %37, %38, %39, %40, %41, %42 in 1 : vector<8x8xf32>, vector<8x8xf32>, vector<8x8xf32>, vector<8x8xf32>, vector<8x8xf32>, vector<8x8xf32>, vector<8x8xf32>, vector<8x8xf32> -> vector<8x64xf32>
    %44 = vector.extract_strided_slice %4 {offsets = [0, 0], sizes = [8, 8], strides = [1, 1]} : vector<8x128xf32> to vector<8x8xf32>
    %45 = vector.extract_strided_slice %4 {offsets = [0, 16], sizes = [8, 8], strides = [1, 1]} : vector<8x128xf32> to vector<8x8xf32>
    %46 = vector.extract_strided_slice %4 {offsets = [0, 32], sizes = [8, 8], strides = [1, 1]} : vector<8x128xf32> to vector<8x8xf32>
    %47 = vector.extract_strided_slice %4 {offsets = [0, 48], sizes = [8, 8], strides = [1, 1]} : vector<8x128xf32> to vector<8x8xf32>
    %48 = vector.extract_strided_slice %4 {offsets = [0, 64], sizes = [8, 8], strides = [1, 1]} : vector<8x128xf32> to vector<8x8xf32>
    %49 = vector.extract_strided_slice %4 {offsets = [0, 80], sizes = [8, 8], strides = [1, 1]} : vector<8x128xf32> to vector<8x8xf32>
    %50 = vector.extract_strided_slice %4 {offsets = [0, 96], sizes = [8, 8], strides = [1, 1]} : vector<8x128xf32> to vector<8x8xf32>
    %51 = vector.extract_strided_slice %4 {offsets = [0, 112], sizes = [8, 8], strides = [1, 1]} : vector<8x128xf32> to vector<8x8xf32>
    %52 = tpu.concatenate %44, %45, %46, %47, %48, %49, %50, %51 in 1 : vector<8x8xf32>, vector<8x8xf32>, vector<8x8xf32>, vector<8x8xf32>, vector<8x8xf32>, vector<8x8xf32>, vector<8x8xf32>, vector<8x8xf32> -> vector<8x64xf32>
    %53 = vector.extract_strided_slice %5 {offsets = [0, 0], sizes = [8, 8], strides = [1, 1]} : vector<8x128xf32> to vector<8x8xf32>
    %54 = vector.extract_strided_slice %5 {offsets = [0, 16], sizes = [8, 8], strides = [1, 1]} : vector<8x128xf32> to vector<8x8xf32>
    %55 = vector.extract_strided_slice %5 {offsets = [0, 32], sizes = [8, 8], strides = [1, 1]} : vector<8x128xf32> to vector<8x8xf32>
    %56 = vector.extract_strided_slice %5 {offsets = [0, 48], sizes = [8, 8], strides = [1, 1]} : vector<8x128xf32> to vector<8x8xf32>
    %57 = vector.extract_strided_slice %5 {offsets = [0, 64], sizes = [8, 8], strides = [1, 1]} : vector<8x128xf32> to vector<8x8xf32>
    %58 = vector.extract_strided_slice %5 {offsets = [0, 80], sizes = [8, 8], strides = [1, 1]} : vector<8x128xf32> to vector<8x8xf32>
    %59 = vector.extract_strided_slice %5 {offsets = [0, 96], sizes = [8, 8], strides = [1, 1]} : vector<8x128xf32> to vector<8x8xf32>
    %60 = vector.extract_strided_slice %5 {offsets = [0, 112], sizes = [8, 8], strides = [1, 1]} : vector<8x128xf32> to vector<8x8xf32>
    %61 = tpu.concatenate %53, %54, %55, %56, %57, %58, %59, %60 in 1 : vector<8x8xf32>, vector<8x8xf32>, vector<8x8xf32>, vector<8x8xf32>, vector<8x8xf32>, vector<8x8xf32>, vector<8x8xf32>, vector<8x8xf32> -> vector<8x64xf32>
    %62 = vector.extract_strided_slice %6 {offsets = [0, 0], sizes = [8, 8], strides = [1, 1]} : vector<8x128xf32> to vector<8x8xf32>
    %63 = vector.extract_strided_slice %6 {offsets = [0, 16], sizes = [8, 8], strides = [1, 1]} : vector<8x128xf32> to vector<8x8xf32>
    %64 = vector.extract_strided_slice %6 {offsets = [0, 32], sizes = [8, 8], strides = [1, 1]} : vector<8x128xf32> to vector<8x8xf32>
    %65 = vector.extract_strided_slice %6 {offsets = [0, 48], sizes = [8, 8], strides = [1, 1]} : vector<8x128xf32> to vector<8x8xf32>
    %66 = vector.extract_strided_slice %6 {offsets = [0, 64], sizes = [8, 8], strides = [1, 1]} : vector<8x128xf32> to vector<8x8xf32>
    %67 = vector.extract_strided_slice %6 {offsets = [0, 80], sizes = [8, 8], strides = [1, 1]} : vector<8x128xf32> to vector<8x8xf32>
    %68 = vector.extract_strided_slice %6 {offsets = [0, 96], sizes = [8, 8], strides = [1, 1]} : vector<8x128xf32> to vector<8x8xf32>
    %69 = vector.extract_strided_slice %6 {offsets = [0, 112], sizes = [8, 8], strides = [1, 1]} : vector<8x128xf32> to vector<8x8xf32>
    %70 = tpu.concatenate %62, %63, %64, %65, %66, %67, %68, %69 in 1 : vector<8x8xf32>, vector<8x8xf32>, vector<8x8xf32>, vector<8x8xf32>, vector<8x8xf32>, vector<8x8xf32>, vector<8x8xf32>, vector<8x8xf32> -> vector<8x64xf32>
    %71 = vector.extract_strided_slice %7 {offsets = [0, 0], sizes = [8, 8], strides = [1, 1]} : vector<8x128xf32> to vector<8x8xf32>
    %72 = vector.extract_strided_slice %7 {offsets = [0, 16], sizes = [8, 8], strides = [1, 1]} : vector<8x128xf32> to vector<8x8xf32>
    %73 = vector.extract_strided_slice %7 {offsets = [0, 32], sizes = [8, 8], strides = [1, 1]} : vector<8x128xf32> to vector<8x8xf32>
    %74 = vector.extract_strided_slice %7 {offsets = [0, 48], sizes = [8, 8], strides = [1, 1]} : vector<8x128xf32> to vector<8x8xf32>
    %75 = vector.extract_strided_slice %7 {offsets = [0, 64], sizes = [8, 8], strides = [1, 1]} : vector<8x128xf32> to vector<8x8xf32>
    %76 = vector.extract_strided_slice %7 {offsets = [0, 80], sizes = [8, 8], strides = [1, 1]} : vector<8x128xf32> to vector<8x8xf32>
    %77 = vector.extract_strided_slice %7 {offsets = [0, 96], sizes = [8, 8], strides = [1, 1]} : vector<8x128xf32> to vector<8x8xf32>
    %78 = vector.extract_strided_slice %7 {offsets = [0, 112], sizes = [8, 8], strides = [1, 1]} : vector<8x128xf32> to vector<8x8xf32>
    %79 = tpu.concatenate %71, %72, %73, %74, %75, %76, %77, %78 in 1 : vector<8x8xf32>, vector<8x8xf32>, vector<8x8xf32>, vector<8x8xf32>, vector<8x8xf32>, vector<8x8xf32>, vector<8x8xf32>, vector<8x8xf32> -> vector<8x64xf32>
    %80 = tpu.concatenate %16, %25, %34, %43, %52, %61, %70, %79 in 1 : vector<8x64xf32>, vector<8x64xf32>, vector<8x64xf32>, vector<8x64xf32>, vector<8x64xf32>, vector<8x64xf32>, vector<8x64xf32>, vector<8x64xf32> -> vector<8x512xf32>
    %c0_8 = arith.constant 0 : index
    %c0_9 = arith.constant 0 : index
    %c0_10 = arith.constant 0 : index
    %81 = vector.load %arg2[%c0_8, %c0_9, %c0_10] : memref<2x8x2048xf32, #tpu.memory_space<vmem>>, vector<1x8x512xf32>
    %82 = vector.shape_cast %81 : vector<1x8x512xf32> to vector<8x512xf32>
    %83 = vector.shape_cast %80 : vector<8x512xf32> to vector<1x8x512xf32>
    tpu.vector_store %arg2[%c0_8, %c0_9, %c0_10], %83 {strides = array<i32>} : memref<2x8x2048xf32, #tpu.memory_space<vmem>>, vector<1x8x512xf32>,
    %84 = vector.extract_strided_slice %0 {offsets = [0, 8], sizes = [8, 8], strides = [1, 1]} : vector<8x128xf32> to vector<8x8xf32>
    %85 = vector.extract_strided_slice %0 {offsets = [0, 24], sizes = [8, 8], strides = [1, 1]} : vector<8x128xf32> to vector<8x8xf32>
    %86 = vector.extract_strided_slice %0 {offsets = [0, 40], sizes = [8, 8], strides = [1, 1]} : vector<8x128xf32> to vector<8x8xf32>
    %87 = vector.extract_strided_slice %0 {offsets = [0, 56], sizes = [8, 8], strides = [1, 1]} : vector<8x128xf32> to vector<8x8xf32>
    %88 = vector.extract_strided_slice %0 {offsets = [0, 72], sizes = [8, 8], strides = [1, 1]} : vector<8x128xf32> to vector<8x8xf32>
    %89 = vector.extract_strided_slice %0 {offsets = [0, 88], sizes = [8, 8], strides = [1, 1]} : vector<8x128xf32> to vector<8x8xf32>
    %90 = vector.extract_strided_slice %0 {offsets = [0, 104], sizes = [8, 8], strides = [1, 1]} : vector<8x128xf32> to vector<8x8xf32>
    %91 = vector.extract_strided_slice %0 {offsets = [0, 120], sizes = [8, 8], strides = [1, 1]} : vector<8x128xf32> to vector<8x8xf32>
    %92 = tpu.concatenate %84, %85, %86, %87, %88, %89, %90, %91 in 1 : vector<8x8xf32>, vector<8x8xf32>, vector<8x8xf32>, vector<8x8xf32>, vector<8x8xf32>, vector<8x8xf32>, vector<8x8xf32>, vector<8x8xf32> -> vector<8x64xf32>
    %93 = vector.extract_strided_slice %1 {offsets = [0, 8], sizes = [8, 8], strides = [1, 1]} : vector<8x128xf32> to vector<8x8xf32>
    %94 = vector.extract_strided_slice %1 {offsets = [0, 24], sizes = [8, 8], strides = [1, 1]} : vector<8x128xf32> to vector<8x8xf32>
    %95 = vector.extract_strided_slice %1 {offsets = [0, 40], sizes = [8, 8], strides = [1, 1]} : vector<8x128xf32> to vector<8x8xf32>
    %96 = vector.extract_strided_slice %1 {offsets = [0, 56], sizes = [8, 8], strides = [1, 1]} : vector<8x128xf32> to vector<8x8xf32>
    %97 = vector.extract_strided_slice %1 {offsets = [0, 72], sizes = [8, 8], strides = [1, 1]} : vector<8x128xf32> to vector<8x8xf32>
    %98 = vector.extract_strided_slice %1 {offsets = [0, 88], sizes = [8, 8], strides = [1, 1]} : vector<8x128xf32> to vector<8x8xf32>
    %99 = vector.extract_strided_slice %1 {offsets = [0, 104], sizes = [8, 8], strides = [1, 1]} : vector<8x128xf32> to vector<8x8xf32>
    %100 = vector.extract_strided_slice %1 {offsets = [0, 120], sizes = [8, 8], strides = [1, 1]} : vector<8x128xf32> to vector<8x8xf32>
    %101 = tpu.concatenate %93, %94, %95, %96, %97, %98, %99, %100 in 1 : vector<8x8xf32>, vector<8x8xf32>, vector<8x8xf32>, vector<8x8xf32>, vector<8x8xf32>, vector<8x8xf32>, vector<8x8xf32>, vector<8x8xf32> -> vector<8x64xf32>
    %102 = vector.extract_strided_slice %2 {offsets = [0, 8], sizes = [8, 8], strides = [1, 1]} : vector<8x128xf32> to vector<8x8xf32>
    %103 = vector.extract_strided_slice %2 {offsets = [0, 24], sizes = [8, 8], strides = [1, 1]} : vector<8x128xf32> to vector<8x8xf32>
    %104 = vector.extract_strided_slice %2 {offsets = [0, 40], sizes = [8, 8], strides = [1, 1]} : vector<8x128xf32> to vector<8x8xf32>
    %105 = vector.extract_strided_slice %2 {offsets = [0, 56], sizes = [8, 8], strides = [1, 1]} : vector<8x128xf32> to vector<8x8xf32>
    %106 = vector.extract_strided_slice %2 {offsets = [0, 72], sizes = [8, 8], strides = [1, 1]} : vector<8x128xf32> to vector<8x8xf32>
    %107 = vector.extract_strided_slice %2 {offsets = [0, 88], sizes = [8, 8], strides = [1, 1]} : vector<8x128xf32> to vector<8x8xf32>
    %108 = vector.extract_strided_slice %2 {offsets = [0, 104], sizes = [8, 8], strides = [1, 1]} : vector<8x128xf32> to vector<8x8xf32>
    %109 = vector.extract_strided_slice %2 {offsets = [0, 120], sizes = [8, 8], strides = [1, 1]} : vector<8x128xf32> to vector<8x8xf32>
    %110 = tpu.concatenate %102, %103, %104, %105, %106, %107, %108, %109 in 1 : vector<8x8xf32>, vector<8x8xf32>, vector<8x8xf32>, vector<8x8xf32>, vector<8x8xf32>, vector<8x8xf32>, vector<8x8xf32>, vector<8x8xf32> -> vector<8x64xf32>
    %111 = vector.extract_strided_slice %3 {offsets = [0, 8], sizes = [8, 8], strides = [1, 1]} : vector<8x128xf32> to vector<8x8xf32>
    %112 = vector.extract_strided_slice %3 {offsets = [0, 24], sizes = [8, 8], strides = [1, 1]} : vector<8x128xf32> to vector<8x8xf32>
    %113 = vector.extract_strided_slice %3 {offsets = [0, 40], sizes = [8, 8], strides = [1, 1]} : vector<8x128xf32> to vector<8x8xf32>
    %114 = vector.extract_strided_slice %3 {offsets = [0, 56], sizes = [8, 8], strides = [1, 1]} : vector<8x128xf32> to vector<8x8xf32>
    %115 = vector.extract_strided_slice %3 {offsets = [0, 72], sizes = [8, 8], strides = [1, 1]} : vector<8x128xf32> to vector<8x8xf32>
    %116 = vector.extract_strided_slice %3 {offsets = [0, 88], sizes = [8, 8], strides = [1, 1]} : vector<8x128xf32> to vector<8x8xf32>
    %117 = vector.extract_strided_slice %3 {offsets = [0, 104], sizes = [8, 8], strides = [1, 1]} : vector<8x128xf32> to vector<8x8xf32>
    %118 = vector.extract_strided_slice %3 {offsets = [0, 120], sizes = [8, 8], strides = [1, 1]} : vector<8x128xf32> to vector<8x8xf32>
    %119 = tpu.concatenate %111, %112, %113, %114, %115, %116, %117, %118 in 1 : vector<8x8xf32>, vector<8x8xf32>, vector<8x8xf32>, vector<8x8xf32>, vector<8x8xf32>, vector<8x8xf32>, vector<8x8xf32>, vector<8x8xf32> -> vector<8x64xf32>
    %120 = vector.extract_strided_slice %4 {offsets = [0, 8], sizes = [8, 8], strides = [1, 1]} : vector<8x128xf32> to vector<8x8xf32>
    %121 = vector.extract_strided_slice %4 {offsets = [0, 24], sizes = [8, 8], strides = [1, 1]} : vector<8x128xf32> to vector<8x8xf32>
    %122 = vector.extract_strided_slice %4 {offsets = [0, 40], sizes = [8, 8], strides = [1, 1]} : vector<8x128xf32> to vector<8x8xf32>
    %123 = vector.extract_strided_slice %4 {offsets = [0, 56], sizes = [8, 8], strides = [1, 1]} : vector<8x128xf32> to vector<8x8xf32>
    %124 = vector.extract_strided_slice %4 {offsets = [0, 72], sizes = [8, 8], strides = [1, 1]} : vector<8x128xf32> to vector<8x8xf32>
    %125 = vector.extract_strided_slice %4 {offsets = [0, 88], sizes = [8, 8], strides = [1, 1]} : vector<8x128xf32> to vector<8x8xf32>
    %126 = vector.extract_strided_slice %4 {offsets = [0, 104], sizes = [8, 8], strides = [1, 1]} : vector<8x128xf32> to vector<8x8xf32>
    %127 = vector.extract_strided_slice %4 {offsets = [0, 120], sizes = [8, 8], strides = [1, 1]} : vector<8x128xf32> to vector<8x8xf32>
    %128 = tpu.concatenate %120, %121, %122, %123, %124, %125, %126, %127 in 1 : vector<8x8xf32>, vector<8x8xf32>, vector<8x8xf32>, vector<8x8xf32>, vector<8x8xf32>, vector<8x8xf32>, vector<8x8xf32>, vector<8x8xf32> -> vector<8x64xf32>
    %129 = vector.extract_strided_slice %5 {offsets = [0, 8], sizes = [8, 8], strides = [1, 1]} : vector<8x128xf32> to vector<8x8xf32>
    %130 = vector.extract_strided_slice %5 {offsets = [0, 24], sizes = [8, 8], strides = [1, 1]} : vector<8x128xf32> to vector<8x8xf32>
    %131 = vector.extract_strided_slice %5 {offsets = [0, 40], sizes = [8, 8], strides = [1, 1]} : vector<8x128xf32> to vector<8x8xf32>
    %132 = vector.extract_strided_slice %5 {offsets = [0, 56], sizes = [8, 8], strides = [1, 1]} : vector<8x128xf32> to vector<8x8xf32>
    %133 = vector.extract_strided_slice %5 {offsets = [0, 72], sizes = [8, 8], strides = [1, 1]} : vector<8x128xf32> to vector<8x8xf32>
    %134 = vector.extract_strided_slice %5 {offsets = [0, 88], sizes = [8, 8], strides = [1, 1]} : vector<8x128xf32> to vector<8x8xf32>
    %135 = vector.extract_strided_slice %5 {offsets = [0, 104], sizes = [8, 8], strides = [1, 1]} : vector<8x128xf32> to vector<8x8xf32>
    %136 = vector.extract_strided_slice %5 {offsets = [0, 120], sizes = [8, 8], strides = [1, 1]} : vector<8x128xf32> to vector<8x8xf32>
    %137 = tpu.concatenate %129, %130, %131, %132, %133, %134, %135, %136 in 1 : vector<8x8xf32>, vector<8x8xf32>, vector<8x8xf32>, vector<8x8xf32>, vector<8x8xf32>, vector<8x8xf32>, vector<8x8xf32>, vector<8x8xf32> -> vector<8x64xf32>
    %138 = vector.extract_strided_slice %6 {offsets = [0, 8], sizes = [8, 8], strides = [1, 1]} : vector<8x128xf32> to vector<8x8xf32>
    %139 = vector.extract_strided_slice %6 {offsets = [0, 24], sizes = [8, 8], strides = [1, 1]} : vector<8x128xf32> to vector<8x8xf32>
    %140 = vector.extract_strided_slice %6 {offsets = [0, 40], sizes = [8, 8], strides = [1, 1]} : vector<8x128xf32> to vector<8x8xf32>
    %141 = vector.extract_strided_slice %6 {offsets = [0, 56], sizes = [8, 8], strides = [1, 1]} : vector<8x128xf32> to vector<8x8xf32>
    %142 = vector.extract_strided_slice %6 {offsets = [0, 72], sizes = [8, 8], strides = [1, 1]} : vector<8x128xf32> to vector<8x8xf32>
    %143 = vector.extract_strided_slice %6 {offsets = [0, 88], sizes = [8, 8], strides = [1, 1]} : vector<8x128xf32> to vector<8x8xf32>
    %144 = vector.extract_strided_slice %6 {offsets = [0, 104], sizes = [8, 8], strides = [1, 1]} : vector<8x128xf32> to vector<8x8xf32>
    %145 = vector.extract_strided_slice %6 {offsets = [0, 120], sizes = [8, 8], strides = [1, 1]} : vector<8x128xf32> to vector<8x8xf32>
    %146 = tpu.concatenate %138, %139, %140, %141, %142, %143, %144, %145 in 1 : vector<8x8xf32>, vector<8x8xf32>, vector<8x8xf32>, vector<8x8xf32>, vector<8x8xf32>, vector<8x8xf32>, vector<8x8xf32>, vector<8x8xf32> -> vector<8x64xf32>
    %147 = vector.extract_strided_slice %7 {offsets = [0, 8], sizes = [8, 8], strides = [1, 1]} : vector<8x128xf32> to vector<8x8xf32>
    %148 = vector.extract_strided_slice %7 {offsets = [0, 24], sizes = [8, 8], strides = [1, 1]} : vector<8x128xf32> to vector<8x8xf32>
    %149 = vector.extract_strided_slice %7 {offsets = [0, 40], sizes = [8, 8], strides = [1, 1]} : vector<8x128xf32> to vector<8x8xf32>
    %150 = vector.extract_strided_slice %7 {offsets = [0, 56], sizes = [8, 8], strides = [1, 1]} : vector<8x128xf32> to vector<8x8xf32>
    %151 = vector.extract_strided_slice %7 {offsets = [0, 72], sizes = [8, 8], strides = [1, 1]} : vector<8x128xf32> to vector<8x8xf32>
    %152 = vector.extract_strided_slice %7 {offsets = [0, 88], sizes = [8, 8], strides = [1, 1]} : vector<8x128xf32> to vector<8x8xf32>
    %153 = vector.extract_strided_slice %7 {offsets = [0, 104], sizes = [8, 8], strides = [1, 1]} : vector<8x128xf32> to vector<8x8xf32>
    %154 = vector.extract_strided_slice %7 {offsets = [0, 120], sizes = [8, 8], strides = [1, 1]} : vector<8x128xf32> to vector<8x8xf32>
    %155 = tpu.concatenate %147, %148, %149, %150, %151, %152, %153, %154 in 1 : vector<8x8xf32>, vector<8x8xf32>, vector<8x8xf32>, vector<8x8xf32>, vector<8x8xf32>, vector<8x8xf32>, vector<8x8xf32>, vector<8x8xf32> -> vector<8x64xf32>
    %156 = tpu.concatenate %92, %101, %110, %119, %128, %137, %146, %155 in 1 : vector<8x64xf32>, vector<8x64xf32>, vector<8x64xf32>, vector<8x64xf32>, vector<8x64xf32>, vector<8x64xf32>, vector<8x64xf32>, vector<8x64xf32> -> vector<8x512xf32>
    %c0_11 = arith.constant 0 : index
    %c0_12 = arith.constant 0 : index
    %c512_13 = arith.constant 512 : index
    %157 = vector.load %arg2[%c0_11, %c0_12, %c512_13] : memref<2x8x2048xf32, #tpu.memory_space<vmem>>, vector<1x8x512xf32>
    %158 = vector.shape_cast %157 : vector<1x8x512xf32> to vector<8x512xf32>
    %159 = vector.shape_cast %156 : vector<8x512xf32> to vector<1x8x512xf32>
    tpu.vector_store %arg2[%c0_11, %c0_12, %c512_13], %159 {strides = array<i32>} : memref<2x8x2048xf32, #tpu.memory_space<vmem>>, vector<1x8x512xf32>,
    %c0_14 = arith.constant 0 : index
    %c128 = arith.constant 128 : index
    %160 = vector.load %arg1[%c0_14, %c128] : memref<8x2048xf32, #tpu.memory_space<vmem>>, vector<8x128xf32>
    %c0_15 = arith.constant 0 : index
    %c384 = arith.constant 384 : index
    %161 = vector.load %arg1[%c0_15, %c384] : memref<8x2048xf32, #tpu.memory_space<vmem>>, vector<8x128xf32>
    %c0_16 = arith.constant 0 : index
    %c640 = arith.constant 640 : index
    %162 = vector.load %arg1[%c0_16, %c640] : memref<8x2048xf32, #tpu.memory_space<vmem>>, vector<8x128xf32>
    %c0_17 = arith.constant 0 : index
    %c896 = arith.constant 896 : index
    %163 = vector.load %arg1[%c0_17, %c896] : memref<8x2048xf32, #tpu.memory_space<vmem>>, vector<8x128xf32>
    %c0_18 = arith.constant 0 : index
    %c1152 = arith.constant 1152 : index
    %164 = vector.load %arg1[%c0_18, %c1152] : memref<8x2048xf32, #tpu.memory_space<vmem>>, vector<8x128xf32>
    %c0_19 = arith.constant 0 : index
    %c1408 = arith.constant 1408 : index
    %165 = vector.load %arg1[%c0_19, %c1408] : memref<8x2048xf32, #tpu.memory_space<vmem>>, vector<8x128xf32>
    %c0_20 = arith.constant 0 : index
    %c1664 = arith.constant 1664 : index
    %166 = vector.load %arg1[%c0_20, %c1664] : memref<8x2048xf32, #tpu.memory_space<vmem>>, vector<8x128xf32>
    %c0_21 = arith.constant 0 : index
    %c1920 = arith.constant 1920 : index
    %167 = vector.load %arg1[%c0_21, %c1920] : memref<8x2048xf32, #tpu.memory_space<vmem>>, vector<8x128xf32>
    %168 = vector.extract_strided_slice %160 {offsets = [0, 0], sizes = [8, 8], strides = [1, 1]} : vector<8x128xf32> to vector<8x8xf32>
    %169 = vector.extract_strided_slice %160 {offsets = [0, 16], sizes = [8, 8], strides = [1, 1]} : vector<8x128xf32> to vector<8x8xf32>
    %170 = vector.extract_strided_slice %160 {offsets = [0, 32], sizes = [8, 8], strides = [1, 1]} : vector<8x128xf32> to vector<8x8xf32>
    %171 = vector.extract_strided_slice %160 {offsets = [0, 48], sizes = [8, 8], strides = [1, 1]} : vector<8x128xf32> to vector<8x8xf32>
    %172 = vector.extract_strided_slice %160 {offsets = [0, 64], sizes = [8, 8], strides = [1, 1]} : vector<8x128xf32> to vector<8x8xf32>
    %173 = vector.extract_strided_slice %160 {offsets = [0, 80], sizes = [8, 8], strides = [1, 1]} : vector<8x128xf32> to vector<8x8xf32>
    %174 = vector.extract_strided_slice %160 {offsets = [0, 96], sizes = [8, 8], strides = [1, 1]} : vector<8x128xf32> to vector<8x8xf32>
    %175 = vector.extract_strided_slice %160 {offsets = [0, 112], sizes = [8, 8], strides = [1, 1]} : vector<8x128xf32> to vector<8x8xf32>
    %176 = tpu.concatenate %168, %169, %170, %171, %172, %173, %174, %175 in 1 : vector<8x8xf32>, vector<8x8xf32>, vector<8x8xf32>, vector<8x8xf32>, vector<8x8xf32>, vector<8x8xf32>, vector<8x8xf32>, vector<8x8xf32> -> vector<8x64xf32>
    %177 = vector.extract_strided_slice %161 {offsets = [0, 0], sizes = [8, 8], strides = [1, 1]} : vector<8x128xf32> to vector<8x8xf32>
    %178 = vector.extract_strided_slice %161 {offsets = [0, 16], sizes = [8, 8], strides = [1, 1]} : vector<8x128xf32> to vector<8x8xf32>
    %179 = vector.extract_strided_slice %161 {offsets = [0, 32], sizes = [8, 8], strides = [1, 1]} : vector<8x128xf32> to vector<8x8xf32>
    %180 = vector.extract_strided_slice %161 {offsets = [0, 48], sizes = [8, 8], strides = [1, 1]} : vector<8x128xf32> to vector<8x8xf32>
    %181 = vector.extract_strided_slice %161 {offsets = [0, 64], sizes = [8, 8], strides = [1, 1]} : vector<8x128xf32> to vector<8x8xf32>
    %182 = vector.extract_strided_slice %161 {offsets = [0, 80], sizes = [8, 8], strides = [1, 1]} : vector<8x128xf32> to vector<8x8xf32>
    %183 = vector.extract_strided_slice %161 {offsets = [0, 96], sizes = [8, 8], strides = [1, 1]} : vector<8x128xf32> to vector<8x8xf32>
    %184 = vector.extract_strided_slice %161 {offsets = [0, 112], sizes = [8, 8], strides = [1, 1]} : vector<8x128xf32> to vector<8x8xf32>
    %185 = tpu.concatenate %177, %178, %179, %180, %181, %182, %183, %184 in 1 : vector<8x8xf32>, vector<8x8xf32>, vector<8x8xf32>, vector<8x8xf32>, vector<8x8xf32>, vector<8x8xf32>, vector<8x8xf32>, vector<8x8xf32> -> vector<8x64xf32>
    %186 = vector.extract_strided_slice %162 {offsets = [0, 0], sizes = [8, 8], strides = [1, 1]} : vector<8x128xf32> to vector<8x8xf32>
    %187 = vector.extract_strided_slice %162 {offsets = [0, 16], sizes = [8, 8], strides = [1, 1]} : vector<8x128xf32> to vector<8x8xf32>
    %188 = vector.extract_strided_slice %162 {offsets = [0, 32], sizes = [8, 8], strides = [1, 1]} : vector<8x128xf32> to vector<8x8xf32>
    %189 = vector.extract_strided_slice %162 {offsets = [0, 48], sizes = [8, 8], strides = [1, 1]} : vector<8x128xf32> to vector<8x8xf32>
    %190 = vector.extract_strided_slice %162 {offsets = [0, 64], sizes = [8, 8], strides = [1, 1]} : vector<8x128xf32> to vector<8x8xf32>
    %191 = vector.extract_strided_slice %162 {offsets = [0, 80], sizes = [8, 8], strides = [1, 1]} : vector<8x128xf32> to vector<8x8xf32>
    %192 = vector.extract_strided_slice %162 {offsets = [0, 96], sizes = [8, 8], strides = [1, 1]} : vector<8x128xf32> to vector<8x8xf32>
    %193 = vector.extract_strided_slice %162 {offsets = [0, 112], sizes = [8, 8], strides = [1, 1]} : vector<8x128xf32> to vector<8x8xf32>
    %194 = tpu.concatenate %186, %187, %188, %189, %190, %191, %192, %193 in 1 : vector<8x8xf32>, vector<8x8xf32>, vector<8x8xf32>, vector<8x8xf32>, vector<8x8xf32>, vector<8x8xf32>, vector<8x8xf32>, vector<8x8xf32> -> vector<8x64xf32>
    %195 = vector.extract_strided_slice %163 {offsets = [0, 0], sizes = [8, 8], strides = [1, 1]} : vector<8x128xf32> to vector<8x8xf32>
    %196 = vector.extract_strided_slice %163 {offsets = [0, 16], sizes = [8, 8], strides = [1, 1]} : vector<8x128xf32> to vector<8x8xf32>
    %197 = vector.extract_strided_slice %163 {offsets = [0, 32], sizes = [8, 8], strides = [1, 1]} : vector<8x128xf32> to vector<8x8xf32>
    %198 = vector.extract_strided_slice %163 {offsets = [0, 48], sizes = [8, 8], strides = [1, 1]} : vector<8x128xf32> to vector<8x8xf32>
    %199 = vector.extract_strided_slice %163 {offsets = [0, 64], sizes = [8, 8], strides = [1, 1]} : vector<8x128xf32> to vector<8x8xf32>
    %200 = vector.extract_strided_slice %163 {offsets = [0, 80], sizes = [8, 8], strides = [1, 1]} : vector<8x128xf32> to vector<8x8xf32>
    %201 = vector.extract_strided_slice %163 {offsets = [0, 96], sizes = [8, 8], strides = [1, 1]} : vector<8x128xf32> to vector<8x8xf32>
    %202 = vector.extract_strided_slice %163 {offsets = [0, 112], sizes = [8, 8], strides = [1, 1]} : vector<8x128xf32> to vector<8x8xf32>
    %203 = tpu.concatenate %195, %196, %197, %198, %199, %200, %201, %202 in 1 : vector<8x8xf32>, vector<8x8xf32>, vector<8x8xf32>, vector<8x8xf32>, vector<8x8xf32>, vector<8x8xf32>, vector<8x8xf32>, vector<8x8xf32> -> vector<8x64xf32>
    %204 = vector.extract_strided_slice %164 {offsets = [0, 0], sizes = [8, 8], strides = [1, 1]} : vector<8x128xf32> to vector<8x8xf32>
    %205 = vector.extract_strided_slice %164 {offsets = [0, 16], sizes = [8, 8], strides = [1, 1]} : vector<8x128xf32> to vector<8x8xf32>
    %206 = vector.extract_strided_slice %164 {offsets = [0, 32], sizes = [8, 8], strides = [1, 1]} : vector<8x128xf32> to vector<8x8xf32>
    %207 = vector.extract_strided_slice %164 {offsets = [0, 48], sizes = [8, 8], strides = [1, 1]} : vector<8x128xf32> to vector<8x8xf32>
    %208 = vector.extract_strided_slice %164 {offsets = [0, 64], sizes = [8, 8], strides = [1, 1]} : vector<8x128xf32> to vector<8x8xf32>
    %209 = vector.extract_strided_slice %164 {offsets = [0, 80], sizes = [8, 8], strides = [1, 1]} : vector<8x128xf32> to vector<8x8xf32>
    %210 = vector.extract_strided_slice %164 {offsets = [0, 96], sizes = [8, 8], strides = [1, 1]} : vector<8x128xf32> to vector<8x8xf32>
    %211 = vector.extract_strided_slice %164 {offsets = [0, 112], sizes = [8, 8], strides = [1, 1]} : vector<8x128xf32> to vector<8x8xf32>
    %212 = tpu.concatenate %204, %205, %206, %207, %208, %209, %210, %211 in 1 : vector<8x8xf32>, vector<8x8xf32>, vector<8x8xf32>, vector<8x8xf32>, vector<8x8xf32>, vector<8x8xf32>, vector<8x8xf32>, vector<8x8xf32> -> vector<8x64xf32>
    %213 = vector.extract_strided_slice %165 {offsets = [0, 0], sizes = [8, 8], strides = [1, 1]} : vector<8x128xf32> to vector<8x8xf32>
    %214 = vector.extract_strided_slice %165 {offsets = [0, 16], sizes = [8, 8], strides = [1, 1]} : vector<8x128xf32> to vector<8x8xf32>
    %215 = vector.extract_strided_slice %165 {offsets = [0, 32], sizes = [8, 8], strides = [1, 1]} : vector<8x128xf32> to vector<8x8xf32>
    %216 = vector.extract_strided_slice %165 {offsets = [0, 48], sizes = [8, 8], strides = [1, 1]} : vector<8x128xf32> to vector<8x8xf32>
    %217 = vector.extract_strided_slice %165 {offsets = [0, 64], sizes = [8, 8], strides = [1, 1]} : vector<8x128xf32> to vector<8x8xf32>
    %218 = vector.extract_strided_slice %165 {offsets = [0, 80], sizes = [8, 8], strides = [1, 1]} : vector<8x128xf32> to vector<8x8xf32>
    %219 = vector.extract_strided_slice %165 {offsets = [0, 96], sizes = [8, 8], strides = [1, 1]} : vector<8x128xf32> to vector<8x8xf32>
    %220 = vector.extract_strided_slice %165 {offsets = [0, 112], sizes = [8, 8], strides = [1, 1]} : vector<8x128xf32> to vector<8x8xf32>
    %221 = tpu.concatenate %213, %214, %215, %216, %217, %218, %219, %220 in 1 : vector<8x8xf32>, vector<8x8xf32>, vector<8x8xf32>, vector<8x8xf32>, vector<8x8xf32>, vector<8x8xf32>, vector<8x8xf32>, vector<8x8xf32> -> vector<8x64xf32>
    %222 = vector.extract_strided_slice %166 {offsets = [0, 0], sizes = [8, 8], strides = [1, 1]} : vector<8x128xf32> to vector<8x8xf32>
    %223 = vector.extract_strided_slice %166 {offsets = [0, 16], sizes = [8, 8], strides = [1, 1]} : vector<8x128xf32> to vector<8x8xf32>
    %224 = vector.extract_strided_slice %166 {offsets = [0, 32], sizes = [8, 8], strides = [1, 1]} : vector<8x128xf32> to vector<8x8xf32>
    %225 = vector.extract_strided_slice %166 {offsets = [0, 48], sizes = [8, 8], strides = [1, 1]} : vector<8x128xf32> to vector<8x8xf32>
    %226 = vector.extract_strided_slice %166 {offsets = [0, 64], sizes = [8, 8], strides = [1, 1]} : vector<8x128xf32> to vector<8x8xf32>
    %227 = vector.extract_strided_slice %166 {offsets = [0, 80], sizes = [8, 8], strides = [1, 1]} : vector<8x128xf32> to vector<8x8xf32>
    %228 = vector.extract_strided_slice %166 {offsets = [0, 96], sizes = [8, 8], strides = [1, 1]} : vector<8x128xf32> to vector<8x8xf32>
    %229 = vector.extract_strided_slice %166 {offsets = [0, 112], sizes = [8, 8], strides = [1, 1]} : vector<8x128xf32> to vector<8x8xf32>
    %230 = tpu.concatenate %222, %223, %224, %225, %226, %227, %228, %229 in 1 : vector<8x8xf32>, vector<8x8xf32>, vector<8x8xf32>, vector<8x8xf32>, vector<8x8xf32>, vector<8x8xf32>, vector<8x8xf32>, vector<8x8xf32> -> vector<8x64xf32>
    %231 = vector.extract_strided_slice %167 {offsets = [0, 0], sizes = [8, 8], strides = [1, 1]} : vector<8x128xf32> to vector<8x8xf32>
    %232 = vector.extract_strided_slice %167 {offsets = [0, 16], sizes = [8, 8], strides = [1, 1]} : vector<8x128xf32> to vector<8x8xf32>
    %233 = vector.extract_strided_slice %167 {offsets = [0, 32], sizes = [8, 8], strides = [1, 1]} : vector<8x128xf32> to vector<8x8xf32>
    %234 = vector.extract_strided_slice %167 {offsets = [0, 48], sizes = [8, 8], strides = [1, 1]} : vector<8x128xf32> to vector<8x8xf32>
    %235 = vector.extract_strided_slice %167 {offsets = [0, 64], sizes = [8, 8], strides = [1, 1]} : vector<8x128xf32> to vector<8x8xf32>
    %236 = vector.extract_strided_slice %167 {offsets = [0, 80], sizes = [8, 8], strides = [1, 1]} : vector<8x128xf32> to vector<8x8xf32>
    %237 = vector.extract_strided_slice %167 {offsets = [0, 96], sizes = [8, 8], strides = [1, 1]} : vector<8x128xf32> to vector<8x8xf32>
    %238 = vector.extract_strided_slice %167 {offsets = [0, 112], sizes = [8, 8], strides = [1, 1]} : vector<8x128xf32> to vector<8x8xf32>
    %239 = tpu.concatenate %231, %232, %233, %234, %235, %236, %237, %238 in 1 : vector<8x8xf32>, vector<8x8xf32>, vector<8x8xf32>, vector<8x8xf32>, vector<8x8xf32>, vector<8x8xf32>, vector<8x8xf32>, vector<8x8xf32> -> vector<8x64xf32>
    %240 = tpu.concatenate %176, %185, %194, %203, %212, %221, %230, %239 in 1 : vector<8x64xf32>, vector<8x64xf32>, vector<8x64xf32>, vector<8x64xf32>, vector<8x64xf32>, vector<8x64xf32>, vector<8x64xf32>, vector<8x64xf32> -> vector<8x512xf32>
    %c0_22 = arith.constant 0 : index
    %c0_23 = arith.constant 0 : index
    %c1024_24 = arith.constant 1024 : index
    %241 = vector.load %arg2[%c0_22, %c0_23, %c1024_24] : memref<2x8x2048xf32, #tpu.memory_space<vmem>>, vector<1x8x512xf32>
    %242 = vector.shape_cast %241 : vector<1x8x512xf32> to vector<8x512xf32>
    %243 = vector.shape_cast %240 : vector<8x512xf32> to vector<1x8x512xf32>
    tpu.vector_store %arg2[%c0_22, %c0_23, %c1024_24], %243 {strides = array<i32>} : memref<2x8x2048xf32, #tpu.memory_space<vmem>>, vector<1x8x512xf32>,
    %244 = vector.extract_strided_slice %160 {offsets = [0, 8], sizes = [8, 8], strides = [1, 1]} : vector<8x128xf32> to vector<8x8xf32>
    %245 = vector.extract_strided_slice %160 {offsets = [0, 24], sizes = [8, 8], strides = [1, 1]} : vector<8x128xf32> to vector<8x8xf32>
    %246 = vector.extract_strided_slice %160 {offsets = [0, 40], sizes = [8, 8], strides = [1, 1]} : vector<8x128xf32> to vector<8x8xf32>
    %247 = vector.extract_strided_slice %160 {offsets = [0, 56], sizes = [8, 8], strides = [1, 1]} : vector<8x128xf32> to vector<8x8xf32>
    %248 = vector.extract_strided_slice %160 {offsets = [0, 72], sizes = [8, 8], strides = [1, 1]} : vector<8x128xf32> to vector<8x8xf32>
    %249 = vector.extract_strided_slice %160 {offsets = [0, 88], sizes = [8, 8], strides = [1, 1]} : vector<8x128xf32> to vector<8x8xf32>
    %250 = vector.extract_strided_slice %160 {offsets = [0, 104], sizes = [8, 8], strides = [1, 1]} : vector<8x128xf32> to vector<8x8xf32>
    %251 = vector.extract_strided_slice %160 {offsets = [0, 120], sizes = [8, 8], strides = [1, 1]} : vector<8x128xf32> to vector<8x8xf32>
    %252 = tpu.concatenate %244, %245, %246, %247, %248, %249, %250, %251 in 1 : vector<8x8xf32>, vector<8x8xf32>, vector<8x8xf32>, vector<8x8xf32>, vector<8x8xf32>, vector<8x8xf32>, vector<8x8xf32>, vector<8x8xf32> -> vector<8x64xf32>
    %253 = vector.extract_strided_slice %161 {offsets = [0, 8], sizes = [8, 8], strides = [1, 1]} : vector<8x128xf32> to vector<8x8xf32>
    %254 = vector.extract_strided_slice %161 {offsets = [0, 24], sizes = [8, 8], strides = [1, 1]} : vector<8x128xf32> to vector<8x8xf32>
    %255 = vector.extract_strided_slice %161 {offsets = [0, 40], sizes = [8, 8], strides = [1, 1]} : vector<8x128xf32> to vector<8x8xf32>
    %256 = vector.extract_strided_slice %161 {offsets = [0, 56], sizes = [8, 8], strides = [1, 1]} : vector<8x128xf32> to vector<8x8xf32>
    %257 = vector.extract_strided_slice %161 {offsets = [0, 72], sizes = [8, 8], strides = [1, 1]} : vector<8x128xf32> to vector<8x8xf32>
    %258 = vector.extract_strided_slice %161 {offsets = [0, 88], sizes = [8, 8], strides = [1, 1]} : vector<8x128xf32> to vector<8x8xf32>
    %259 = vector.extract_strided_slice %161 {offsets = [0, 104], sizes = [8, 8], strides = [1, 1]} : vector<8x128xf32> to vector<8x8xf32>
    %260 = vector.extract_strided_slice %161 {offsets = [0, 120], sizes = [8, 8], strides = [1, 1]} : vector<8x128xf32> to vector<8x8xf32>
    %261 = tpu.concatenate %253, %254, %255, %256, %257, %258, %259, %260 in 1 : vector<8x8xf32>, vector<8x8xf32>, vector<8x8xf32>, vector<8x8xf32>, vector<8x8xf32>, vector<8x8xf32>, vector<8x8xf32>, vector<8x8xf32> -> vector<8x64xf32>
    %262 = vector.extract_strided_slice %162 {offsets = [0, 8], sizes = [8, 8], strides = [1, 1]} : vector<8x128xf32> to vector<8x8xf32>
    %263 = vector.extract_strided_slice %162 {offsets = [0, 24], sizes = [8, 8], strides = [1, 1]} : vector<8x128xf32> to vector<8x8xf32>
    %264 = vector.extract_strided_slice %162 {offsets = [0, 40], sizes = [8, 8], strides = [1, 1]} : vector<8x128xf32> to vector<8x8xf32>
    %265 = vector.extract_strided_slice %162 {offsets = [0, 56], sizes = [8, 8], strides = [1, 1]} : vector<8x128xf32> to vector<8x8xf32>
    %266 = vector.extract_strided_slice %162 {offsets = [0, 72], sizes = [8, 8], strides = [1, 1]} : vector<8x128xf32> to vector<8x8xf32>
    %267 = vector.extract_strided_slice %162 {offsets = [0, 88], sizes = [8, 8], strides = [1, 1]} : vector<8x128xf32> to vector<8x8xf32>
    %268 = vector.extract_strided_slice %162 {offsets = [0, 104], sizes = [8, 8], strides = [1, 1]} : vector<8x128xf32> to vector<8x8xf32>
    %269 = vector.extract_strided_slice %162 {offsets = [0, 120], sizes = [8, 8], strides = [1, 1]} : vector<8x128xf32> to vector<8x8xf32>
    %270 = tpu.concatenate %262, %263, %264, %265, %266, %267, %268, %269 in 1 : vector<8x8xf32>, vector<8x8xf32>, vector<8x8xf32>, vector<8x8xf32>, vector<8x8xf32>, vector<8x8xf32>, vector<8x8xf32>, vector<8x8xf32> -> vector<8x64xf32>
    %271 = vector.extract_strided_slice %163 {offsets = [0, 8], sizes = [8, 8], strides = [1, 1]} : vector<8x128xf32> to vector<8x8xf32>
    %272 = vector.extract_strided_slice %163 {offsets = [0, 24], sizes = [8, 8], strides = [1, 1]} : vector<8x128xf32> to vector<8x8xf32>
    %273 = vector.extract_strided_slice %163 {offsets = [0, 40], sizes = [8, 8], strides = [1, 1]} : vector<8x128xf32> to vector<8x8xf32>
    %274 = vector.extract_strided_slice %163 {offsets = [0, 56], sizes = [8, 8], strides = [1, 1]} : vector<8x128xf32> to vector<8x8xf32>
    %275 = vector.extract_strided_slice %163 {offsets = [0, 72], sizes = [8, 8], strides = [1, 1]} : vector<8x128xf32> to vector<8x8xf32>
    %276 = vector.extract_strided_slice %163 {offsets = [0, 88], sizes = [8, 8], strides = [1, 1]} : vector<8x128xf32> to vector<8x8xf32>
    %277 = vector.extract_strided_slice %163 {offsets = [0, 104], sizes = [8, 8], strides = [1, 1]} : vector<8x128xf32> to vector<8x8xf32>
    %278 = vector.extract_strided_slice %163 {offsets = [0, 120], sizes = [8, 8], strides = [1, 1]} : vector<8x128xf32> to vector<8x8xf32>
    %279 = tpu.concatenate %271, %272, %273, %274, %275, %276, %277, %278 in 1 : vector<8x8xf32>, vector<8x8xf32>, vector<8x8xf32>, vector<8x8xf32>, vector<8x8xf32>, vector<8x8xf32>, vector<8x8xf32>, vector<8x8xf32> -> vector<8x64xf32>
    %280 = vector.extract_strided_slice %164 {offsets = [0, 8], sizes = [8, 8], strides = [1, 1]} : vector<8x128xf32> to vector<8x8xf32>
    %281 = vector.extract_strided_slice %164 {offsets = [0, 24], sizes = [8, 8], strides = [1, 1]} : vector<8x128xf32> to vector<8x8xf32>
    %282 = vector.extract_strided_slice %164 {offsets = [0, 40], sizes = [8, 8], strides = [1, 1]} : vector<8x128xf32> to vector<8x8xf32>
    %283 = vector.extract_strided_slice %164 {offsets = [0, 56], sizes = [8, 8], strides = [1, 1]} : vector<8x128xf32> to vector<8x8xf32>
    %284 = vector.extract_strided_slice %164 {offsets = [0, 72], sizes = [8, 8], strides = [1, 1]} : vector<8x128xf32> to vector<8x8xf32>
    %285 = vector.extract_strided_slice %164 {offsets = [0, 88], sizes = [8, 8], strides = [1, 1]} : vector<8x128xf32> to vector<8x8xf32>
    %286 = vector.extract_strided_slice %164 {offsets = [0, 104], sizes = [8, 8], strides = [1, 1]} : vector<8x128xf32> to vector<8x8xf32>
    %287 = vector.extract_strided_slice %164 {offsets = [0, 120], sizes = [8, 8], strides = [1, 1]} : vector<8x128xf32> to vector<8x8xf32>
    %288 = tpu.concatenate %280, %281, %282, %283, %284, %285, %286, %287 in 1 : vector<8x8xf32>, vector<8x8xf32>, vector<8x8xf32>, vector<8x8xf32>, vector<8x8xf32>, vector<8x8xf32>, vector<8x8xf32>, vector<8x8xf32> -> vector<8x64xf32>
    %289 = vector.extract_strided_slice %165 {offsets = [0, 8], sizes = [8, 8], strides = [1, 1]} : vector<8x128xf32> to vector<8x8xf32>
    %290 = vector.extract_strided_slice %165 {offsets = [0, 24], sizes = [8, 8], strides = [1, 1]} : vector<8x128xf32> to vector<8x8xf32>
    %291 = vector.extract_strided_slice %165 {offsets = [0, 40], sizes = [8, 8], strides = [1, 1]} : vector<8x128xf32> to vector<8x8xf32>
    %292 = vector.extract_strided_slice %165 {offsets = [0, 56], sizes = [8, 8], strides = [1, 1]} : vector<8x128xf32> to vector<8x8xf32>
    %293 = vector.extract_strided_slice %165 {offsets = [0, 72], sizes = [8, 8], strides = [1, 1]} : vector<8x128xf32> to vector<8x8xf32>
    %294 = vector.extract_strided_slice %165 {offsets = [0, 88], sizes = [8, 8], strides = [1, 1]} : vector<8x128xf32> to vector<8x8xf32>
    %295 = vector.extract_strided_slice %165 {offsets = [0, 104], sizes = [8, 8], strides = [1, 1]} : vector<8x128xf32> to vector<8x8xf32>
    %296 = vector.extract_strided_slice %165 {offsets = [0, 120], sizes = [8, 8], strides = [1, 1]} : vector<8x128xf32> to vector<8x8xf32>
    %297 = tpu.concatenate %289, %290, %291, %292, %293, %294, %295, %296 in 1 : vector<8x8xf32>, vector<8x8xf32>, vector<8x8xf32>, vector<8x8xf32>, vector<8x8xf32>, vector<8x8xf32>, vector<8x8xf32>, vector<8x8xf32> -> vector<8x64xf32>
    %298 = vector.extract_strided_slice %166 {offsets = [0, 8], sizes = [8, 8], strides = [1, 1]} : vector<8x128xf32> to vector<8x8xf32>
    %299 = vector.extract_strided_slice %166 {offsets = [0, 24], sizes = [8, 8], strides = [1, 1]} : vector<8x128xf32> to vector<8x8xf32>
    %300 = vector.extract_strided_slice %166 {offsets = [0, 40], sizes = [8, 8], strides = [1, 1]} : vector<8x128xf32> to vector<8x8xf32>
    %301 = vector.extract_strided_slice %166 {offsets = [0, 56], sizes = [8, 8], strides = [1, 1]} : vector<8x128xf32> to vector<8x8xf32>
    %302 = vector.extract_strided_slice %166 {offsets = [0, 72], sizes = [8, 8], strides = [1, 1]} : vector<8x128xf32> to vector<8x8xf32>
    %303 = vector.extract_strided_slice %166 {offsets = [0, 88], sizes = [8, 8], strides = [1, 1]} : vector<8x128xf32> to vector<8x8xf32>
    %304 = vector.extract_strided_slice %166 {offsets = [0, 104], sizes = [8, 8], strides = [1, 1]} : vector<8x128xf32> to vector<8x8xf32>
    %305 = vector.extract_strided_slice %166 {offsets = [0, 120], sizes = [8, 8], strides = [1, 1]} : vector<8x128xf32> to vector<8x8xf32>
    %306 = tpu.concatenate %298, %299, %300, %301, %302, %303, %304, %305 in 1 : vector<8x8xf32>, vector<8x8xf32>, vector<8x8xf32>, vector<8x8xf32>, vector<8x8xf32>, vector<8x8xf32>, vector<8x8xf32>, vector<8x8xf32> -> vector<8x64xf32>
    %307 = vector.extract_strided_slice %167 {offsets = [0, 8], sizes = [8, 8], strides = [1, 1]} : vector<8x128xf32> to vector<8x8xf32>
    %308 = vector.extract_strided_slice %167 {offsets = [0, 24], sizes = [8, 8], strides = [1, 1]} : vector<8x128xf32> to vector<8x8xf32>
    %309 = vector.extract_strided_slice %167 {offsets = [0, 40], sizes = [8, 8], strides = [1, 1]} : vector<8x128xf32> to vector<8x8xf32>
    %310 = vector.extract_strided_slice %167 {offsets = [0, 56], sizes = [8, 8], strides = [1, 1]} : vector<8x128xf32> to vector<8x8xf32>
    %311 = vector.extract_strided_slice %167 {offsets = [0, 72], sizes = [8, 8], strides = [1, 1]} : vector<8x128xf32> to vector<8x8xf32>
    %312 = vector.extract_strided_slice %167 {offsets = [0, 88], sizes = [8, 8], strides = [1, 1]} : vector<8x128xf32> to vector<8x8xf32>
    %313 = vector.extract_strided_slice %167 {offsets = [0, 104], sizes = [8, 8], strides = [1, 1]} : vector<8x128xf32> to vector<8x8xf32>
    %314 = vector.extract_strided_slice %167 {offsets = [0, 120], sizes = [8, 8], strides = [1, 1]} : vector<8x128xf32> to vector<8x8xf32>
    %315 = tpu.concatenate %307, %308, %309, %310, %311, %312, %313, %314 in 1 : vector<8x8xf32>, vector<8x8xf32>, vector<8x8xf32>, vector<8x8xf32>, vector<8x8xf32>, vector<8x8xf32>, vector<8x8xf32>, vector<8x8xf32> -> vector<8x64xf32>
    %316 = tpu.concatenate %252, %261, %270, %279, %288, %297, %306, %315 in 1 : vector<8x64xf32>, vector<8x64xf32>, vector<8x64xf32>, vector<8x64xf32>, vector<8x64xf32>, vector<8x64xf32>, vector<8x64xf32>, vector<8x64xf32> -> vector<8x512xf32>
    %c0_25 = arith.constant 0 : index
    %c0_26 = arith.constant 0 : index
    %c1536_27 = arith.constant 1536 : index
    %317 = vector.load %arg2[%c0_25, %c0_26, %c1536_27] : memref<2x8x2048xf32, #tpu.memory_space<vmem>>, vector<1x8x512xf32>
    %318 = vector.shape_cast %317 : vector<1x8x512xf32> to vector<8x512xf32>
    %319 = vector.shape_cast %316 : vector<8x512xf32> to vector<1x8x512xf32>
    tpu.vector_store %arg2[%c0_25, %c0_26, %c1536_27], %319 {strides = array<i32>} : memref<2x8x2048xf32, #tpu.memory_space<vmem>>, vector<1x8x512xf32>,
    %c0_28 = arith.constant 0 : index
    %c192 = arith.constant 192 : index
    %320 = vector.load %arg1[%c0_28, %c192] : memref<8x2048xf32, #tpu.memory_space<vmem>>, vector<8x64xf32>
    %c0_29 = arith.constant 0 : index
    %c0_30 = arith.constant 0 : index
    %321 = vector.load %arg1[%c0_29, %c0_30] : memref<8x2048xf32, #tpu.memory_space<vmem>>, vector<8x64xf32>
    %322 = tpu.concatenate %320, %321 in 1 : vector<8x64xf32>, vector<8x64xf32> -> vector<8x128xf32>
    %c0_31 = arith.constant 0 : index
    %c448 = arith.constant 448 : index
    %323 = vector.load %arg1[%c0_31, %c448] : memref<8x2048xf32, #tpu.memory_space<vmem>>, vector<8x64xf32>
    %c0_32 = arith.constant 0 : index
    %c256_33 = arith.constant 256 : index
    %324 = vector.load %arg1[%c0_32, %c256_33] : memref<8x2048xf32, #tpu.memory_space<vmem>>, vector<8x64xf32>
    %325 = tpu.concatenate %323, %324 in 1 : vector<8x64xf32>, vector<8x64xf32> -> vector<8x128xf32>
    %c0_34 = arith.constant 0 : index
    %c704 = arith.constant 704 : index
    %326 = vector.load %arg1[%c0_34, %c704] : memref<8x2048xf32, #tpu.memory_space<vmem>>, vector<8x64xf32>
    %c0_35 = arith.constant 0 : index
    %c512_36 = arith.constant 512 : index
    %327 = vector.load %arg1[%c0_35, %c512_36] : memref<8x2048xf32, #tpu.memory_space<vmem>>, vector<8x64xf32>
    %328 = tpu.concatenate %326, %327 in 1 : vector<8x64xf32>, vector<8x64xf32> -> vector<8x128xf32>
    %c0_37 = arith.constant 0 : index
    %c960 = arith.constant 960 : index
    %329 = vector.load %arg1[%c0_37, %c960] : memref<8x2048xf32, #tpu.memory_space<vmem>>, vector<8x64xf32>
    %c0_38 = arith.constant 0 : index
    %c768_39 = arith.constant 768 : index
    %330 = vector.load %arg1[%c0_38, %c768_39] : memref<8x2048xf32, #tpu.memory_space<vmem>>, vector<8x64xf32>
    %331 = tpu.concatenate %329, %330 in 1 : vector<8x64xf32>, vector<8x64xf32> -> vector<8x128xf32>
    %c0_40 = arith.constant 0 : index
    %c1216 = arith.constant 1216 : index
    %332 = vector.load %arg1[%c0_40, %c1216] : memref<8x2048xf32, #tpu.memory_space<vmem>>, vector<8x64xf32>
    %c0_41 = arith.constant 0 : index
    %c1024_42 = arith.constant 1024 : index
    %333 = vector.load %arg1[%c0_41, %c1024_42] : memref<8x2048xf32, #tpu.memory_space<vmem>>, vector<8x64xf32>
    %334 = tpu.concatenate %332, %333 in 1 : vector<8x64xf32>, vector<8x64xf32> -> vector<8x128xf32>
    %c0_43 = arith.constant 0 : index
    %c1472 = arith.constant 1472 : index
    %335 = vector.load %arg1[%c0_43, %c1472] : memref<8x2048xf32, #tpu.memory_space<vmem>>, vector<8x64xf32>
    %c0_44 = arith.constant 0 : index
    %c1280_45 = arith.constant 1280 : index
    %336 = vector.load %arg1[%c0_44, %c1280_45] : memref<8x2048xf32, #tpu.memory_space<vmem>>, vector<8x64xf32>
    %337 = tpu.concatenate %335, %336 in 1 : vector<8x64xf32>, vector<8x64xf32> -> vector<8x128xf32>
    %c0_46 = arith.constant 0 : index
    %c1728 = arith.constant 1728 : index
    %338 = vector.load %arg1[%c0_46, %c1728] : memref<8x2048xf32, #tpu.memory_space<vmem>>, vector<8x64xf32>
    %c0_47 = arith.constant 0 : index
    %c1536_48 = arith.constant 1536 : index
    %339 = vector.load %arg1[%c0_47, %c1536_48] : memref<8x2048xf32, #tpu.memory_space<vmem>>, vector<8x64xf32>
    %340 = tpu.concatenate %338, %339 in 1 : vector<8x64xf32>, vector<8x64xf32> -> vector<8x128xf32>
    %c0_49 = arith.constant 0 : index
    %c1984 = arith.constant 1984 : index
    %341 = vector.load %arg1[%c0_49, %c1984] : memref<8x2048xf32, #tpu.memory_space<vmem>>, vector<8x64xf32>
    %c0_50 = arith.constant 0 : index
    %c1792_51 = arith.constant 1792 : index
    %342 = vector.load %arg1[%c0_50, %c1792_51] : memref<8x2048xf32, #tpu.memory_space<vmem>>, vector<8x64xf32>
    %343 = tpu.concatenate %341, %342 in 1 : vector<8x64xf32>, vector<8x64xf32> -> vector<8x128xf32>
    %344 = vector.extract_strided_slice %322 {offsets = [0, 12], sizes = [8, 4], strides = [1, 1]} : vector<8x128xf32> to vector<8x4xf32>
    %345 = vector.extract_strided_slice %322 {offsets = [0, 0], sizes = [8, 4], strides = [1, 1]} : vector<8x128xf32> to vector<8x4xf32>
    %346 = tpu.concatenate %344, %345 in 1 : vector<8x4xf32>, vector<8x4xf32> -> vector<8x8xf32>
    %347 = vector.extract_strided_slice %322 {offsets = [0, 28], sizes = [8, 4], strides = [1, 1]} : vector<8x128xf32> to vector<8x4xf32>
    %348 = vector.extract_strided_slice %322 {offsets = [0, 16], sizes = [8, 4], strides = [1, 1]} : vector<8x128xf32> to vector<8x4xf32>
    %349 = tpu.concatenate %347, %348 in 1 : vector<8x4xf32>, vector<8x4xf32> -> vector<8x8xf32>
    %350 = vector.extract_strided_slice %322 {offsets = [0, 44], sizes = [8, 4], strides = [1, 1]} : vector<8x128xf32> to vector<8x4xf32>
    %351 = vector.extract_strided_slice %322 {offsets = [0, 32], sizes = [8, 4], strides = [1, 1]} : vector<8x128xf32> to vector<8x4xf32>
    %352 = tpu.concatenate %350, %351 in 1 : vector<8x4xf32>, vector<8x4xf32> -> vector<8x8xf32>
    %353 = vector.extract_strided_slice %322 {offsets = [0, 60], sizes = [8, 4], strides = [1, 1]} : vector<8x128xf32> to vector<8x4xf32>
    %354 = vector.extract_strided_slice %322 {offsets = [0, 48], sizes = [8, 4], strides = [1, 1]} : vector<8x128xf32> to vector<8x4xf32>
    %355 = tpu.concatenate %353, %354 in 1 : vector<8x4xf32>, vector<8x4xf32> -> vector<8x8xf32>
    %356 = vector.extract_strided_slice %322 {offsets = [0, 76], sizes = [8, 4], strides = [1, 1]} : vector<8x128xf32> to vector<8x4xf32>
    %357 = vector.extract_strided_slice %322 {offsets = [0, 64], sizes = [8, 4], strides = [1, 1]} : vector<8x128xf32> to vector<8x4xf32>
    %358 = tpu.concatenate %356, %357 in 1 : vector<8x4xf32>, vector<8x4xf32> -> vector<8x8xf32>
    %359 = vector.extract_strided_slice %322 {offsets = [0, 92], sizes = [8, 4], strides = [1, 1]} : vector<8x128xf32> to vector<8x4xf32>
    %360 = vector.extract_strided_slice %322 {offsets = [0, 80], sizes = [8, 4], strides = [1, 1]} : vector<8x128xf32> to vector<8x4xf32>
    %361 = tpu.concatenate %359, %360 in 1 : vector<8x4xf32>, vector<8x4xf32> -> vector<8x8xf32>
    %362 = vector.extract_strided_slice %322 {offsets = [0, 108], sizes = [8, 4], strides = [1, 1]} : vector<8x128xf32> to vector<8x4xf32>
    %363 = vector.extract_strided_slice %322 {offsets = [0, 96], sizes = [8, 4], strides = [1, 1]} : vector<8x128xf32> to vector<8x4xf32>
    %364 = tpu.concatenate %362, %363 in 1 : vector<8x4xf32>, vector<8x4xf32> -> vector<8x8xf32>
    %365 = vector.extract_strided_slice %322 {offsets = [0, 124], sizes = [8, 4], strides = [1, 1]} : vector<8x128xf32> to vector<8x4xf32>
    %366 = vector.extract_strided_slice %322 {offsets = [0, 112], sizes = [8, 4], strides = [1, 1]} : vector<8x128xf32> to vector<8x4xf32>
    %367 = tpu.concatenate %365, %366 in 1 : vector<8x4xf32>, vector<8x4xf32> -> vector<8x8xf32>
    %368 = tpu.concatenate %346, %349, %352, %355, %358, %361, %364, %367 in 1 : vector<8x8xf32>, vector<8x8xf32>, vector<8x8xf32>, vector<8x8xf32>, vector<8x8xf32>, vector<8x8xf32>, vector<8x8xf32>, vector<8x8xf32> -> vector<8x64xf32>
    %369 = vector.extract_strided_slice %325 {offsets = [0, 12], sizes = [8, 4], strides = [1, 1]} : vector<8x128xf32> to vector<8x4xf32>
    %370 = vector.extract_strided_slice %325 {offsets = [0, 0], sizes = [8, 4], strides = [1, 1]} : vector<8x128xf32> to vector<8x4xf32>
    %371 = tpu.concatenate %369, %370 in 1 : vector<8x4xf32>, vector<8x4xf32> -> vector<8x8xf32>
    %372 = vector.extract_strided_slice %325 {offsets = [0, 28], sizes = [8, 4], strides = [1, 1]} : vector<8x128xf32> to vector<8x4xf32>
    %373 = vector.extract_strided_slice %325 {offsets = [0, 16], sizes = [8, 4], strides = [1, 1]} : vector<8x128xf32> to vector<8x4xf32>
    %374 = tpu.concatenate %372, %373 in 1 : vector<8x4xf32>, vector<8x4xf32> -> vector<8x8xf32>
    %375 = vector.extract_strided_slice %325 {offsets = [0, 44], sizes = [8, 4], strides = [1, 1]} : vector<8x128xf32> to vector<8x4xf32>
    %376 = vector.extract_strided_slice %325 {offsets = [0, 32], sizes = [8, 4], strides = [1, 1]} : vector<8x128xf32> to vector<8x4xf32>
    %377 = tpu.concatenate %375, %376 in 1 : vector<8x4xf32>, vector<8x4xf32> -> vector<8x8xf32>
    %378 = vector.extract_strided_slice %325 {offsets = [0, 60], sizes = [8, 4], strides = [1, 1]} : vector<8x128xf32> to vector<8x4xf32>
    %379 = vector.extract_strided_slice %325 {offsets = [0, 48], sizes = [8, 4], strides = [1, 1]} : vector<8x128xf32> to vector<8x4xf32>
    %380 = tpu.concatenate %378, %379 in 1 : vector<8x4xf32>, vector<8x4xf32> -> vector<8x8xf32>
    %381 = vector.extract_strided_slice %325 {offsets = [0, 76], sizes = [8, 4], strides = [1, 1]} : vector<8x128xf32> to vector<8x4xf32>
    %382 = vector.extract_strided_slice %325 {offsets = [0, 64], sizes = [8, 4], strides = [1, 1]} : vector<8x128xf32> to vector<8x4xf32>
    %383 = tpu.concatenate %381, %382 in 1 : vector<8x4xf32>, vector<8x4xf32> -> vector<8x8xf32>
    %384 = vector.extract_strided_slice %325 {offsets = [0, 92], sizes = [8, 4], strides = [1, 1]} : vector<8x128xf32> to vector<8x4xf32>
    %385 = vector.extract_strided_slice %325 {offsets = [0, 80], sizes = [8, 4], strides = [1, 1]} : vector<8x128xf32> to vector<8x4xf32>
    %386 = tpu.concatenate %384, %385 in 1 : vector<8x4xf32>, vector<8x4xf32> -> vector<8x8xf32>
    %387 = vector.extract_strided_slice %325 {offsets = [0, 108], sizes = [8, 4], strides = [1, 1]} : vector<8x128xf32> to vector<8x4xf32>
    %388 = vector.extract_strided_slice %325 {offsets = [0, 96], sizes = [8, 4], strides = [1, 1]} : vector<8x128xf32> to vector<8x4xf32>
    %389 = tpu.concatenate %387, %388 in 1 : vector<8x4xf32>, vector<8x4xf32> -> vector<8x8xf32>
    %390 = vector.extract_strided_slice %325 {offsets = [0, 124], sizes = [8, 4], strides = [1, 1]} : vector<8x128xf32> to vector<8x4xf32>
    %391 = vector.extract_strided_slice %325 {offsets = [0, 112], sizes = [8, 4], strides = [1, 1]} : vector<8x128xf32> to vector<8x4xf32>
    %392 = tpu.concatenate %390, %391 in 1 : vector<8x4xf32>, vector<8x4xf32> -> vector<8x8xf32>
    %393 = tpu.concatenate %371, %374, %377, %380, %383, %386, %389, %392 in 1 : vector<8x8xf32>, vector<8x8xf32>, vector<8x8xf32>, vector<8x8xf32>, vector<8x8xf32>, vector<8x8xf32>, vector<8x8xf32>, vector<8x8xf32> -> vector<8x64xf32>
    %394 = vector.extract_strided_slice %328 {offsets = [0, 12], sizes = [8, 4], strides = [1, 1]} : vector<8x128xf32> to vector<8x4xf32>
    %395 = vector.extract_strided_slice %328 {offsets = [0, 0], sizes = [8, 4], strides = [1, 1]} : vector<8x128xf32> to vector<8x4xf32>
    %396 = tpu.concatenate %394, %395 in 1 : vector<8x4xf32>, vector<8x4xf32> -> vector<8x8xf32>
    %397 = vector.extract_strided_slice %328 {offsets = [0, 28], sizes = [8, 4], strides = [1, 1]} : vector<8x128xf32> to vector<8x4xf32>
    %398 = vector.extract_strided_slice %328 {offsets = [0, 16], sizes = [8, 4], strides = [1, 1]} : vector<8x128xf32> to vector<8x4xf32>
    %399 = tpu.concatenate %397, %398 in 1 : vector<8x4xf32>, vector<8x4xf32> -> vector<8x8xf32>
    %400 = vector.extract_strided_slice %328 {offsets = [0, 44], sizes = [8, 4], strides = [1, 1]} : vector<8x128xf32> to vector<8x4xf32>
    %401 = vector.extract_strided_slice %328 {offsets = [0, 32], sizes = [8, 4], strides = [1, 1]} : vector<8x128xf32> to vector<8x4xf32>
    %402 = tpu.concatenate %400, %401 in 1 : vector<8x4xf32>, vector<8x4xf32> -> vector<8x8xf32>
    %403 = vector.extract_strided_slice %328 {offsets = [0, 60], sizes = [8, 4], strides = [1, 1]} : vector<8x128xf32> to vector<8x4xf32>
    %404 = vector.extract_strided_slice %328 {offsets = [0, 48], sizes = [8, 4], strides = [1, 1]} : vector<8x128xf32> to vector<8x4xf32>
    %405 = tpu.concatenate %403, %404 in 1 : vector<8x4xf32>, vector<8x4xf32> -> vector<8x8xf32>
    %406 = vector.extract_strided_slice %328 {offsets = [0, 76], sizes = [8, 4], strides = [1, 1]} : vector<8x128xf32> to vector<8x4xf32>
    %407 = vector.extract_strided_slice %328 {offsets = [0, 64], sizes = [8, 4], strides = [1, 1]} : vector<8x128xf32> to vector<8x4xf32>
    %408 = tpu.concatenate %406, %407 in 1 : vector<8x4xf32>, vector<8x4xf32> -> vector<8x8xf32>
    %409 = vector.extract_strided_slice %328 {offsets = [0, 92], sizes = [8, 4], strides = [1, 1]} : vector<8x128xf32> to vector<8x4xf32>
    %410 = vector.extract_strided_slice %328 {offsets = [0, 80], sizes = [8, 4], strides = [1, 1]} : vector<8x128xf32> to vector<8x4xf32>
    %411 = tpu.concatenate %409, %410 in 1 : vector<8x4xf32>, vector<8x4xf32> -> vector<8x8xf32>
    %412 = vector.extract_strided_slice %328 {offsets = [0, 108], sizes = [8, 4], strides = [1, 1]} : vector<8x128xf32> to vector<8x4xf32>
    %413 = vector.extract_strided_slice %328 {offsets = [0, 96], sizes = [8, 4], strides = [1, 1]} : vector<8x128xf32> to vector<8x4xf32>
    %414 = tpu.concatenate %412, %413 in 1 : vector<8x4xf32>, vector<8x4xf32> -> vector<8x8xf32>
    %415 = vector.extract_strided_slice %328 {offsets = [0, 124], sizes = [8, 4], strides = [1, 1]} : vector<8x128xf32> to vector<8x4xf32>
    %416 = vector.extract_strided_slice %328 {offsets = [0, 112], sizes = [8, 4], strides = [1, 1]} : vector<8x128xf32> to vector<8x4xf32>
    %417 = tpu.concatenate %415, %416 in 1 : vector<8x4xf32>, vector<8x4xf32> -> vector<8x8xf32>
    %418 = tpu.concatenate %396, %399, %402, %405, %408, %411, %414, %417 in 1 : vector<8x8xf32>, vector<8x8xf32>, vector<8x8xf32>, vector<8x8xf32>, vector<8x8xf32>, vector<8x8xf32>, vector<8x8xf32>, vector<8x8xf32> -> vector<8x64xf32>
    %419 = vector.extract_strided_slice %331 {offsets = [0, 12], sizes = [8, 4], strides = [1, 1]} : vector<8x128xf32> to vector<8x4xf32>
    %420 = vector.extract_strided_slice %331 {offsets = [0, 0], sizes = [8, 4], strides = [1, 1]} : vector<8x128xf32> to vector<8x4xf32>
    %421 = tpu.concatenate %419, %420 in 1 : vector<8x4xf32>, vector<8x4xf32> -> vector<8x8xf32>
    %422 = vector.extract_strided_slice %331 {offsets = [0, 28], sizes = [8, 4], strides = [1, 1]} : vector<8x128xf32> to vector<8x4xf32>
    %423 = vector.extract_strided_slice %331 {offsets = [0, 16], sizes = [8, 4], strides = [1, 1]} : vector<8x128xf32> to vector<8x4xf32>
    %424 = tpu.concatenate %422, %423 in 1 : vector<8x4xf32>, vector<8x4xf32> -> vector<8x8xf32>
    %425 = vector.extract_strided_slice %331 {offsets = [0, 44], sizes = [8, 4], strides = [1, 1]} : vector<8x128xf32> to vector<8x4xf32>
    %426 = vector.extract_strided_slice %331 {offsets = [0, 32], sizes = [8, 4], strides = [1, 1]} : vector<8x128xf32> to vector<8x4xf32>
    %427 = tpu.concatenate %425, %426 in 1 : vector<8x4xf32>, vector<8x4xf32> -> vector<8x8xf32>
    %428 = vector.extract_strided_slice %331 {offsets = [0, 60], sizes = [8, 4], strides = [1, 1]} : vector<8x128xf32> to vector<8x4xf32>
    %429 = vector.extract_strided_slice %331 {offsets = [0, 48], sizes = [8, 4], strides = [1, 1]} : vector<8x128xf32> to vector<8x4xf32>
    %430 = tpu.concatenate %428, %429 in 1 : vector<8x4xf32>, vector<8x4xf32> -> vector<8x8xf32>
    %431 = vector.extract_strided_slice %331 {offsets = [0, 76], sizes = [8, 4], strides = [1, 1]} : vector<8x128xf32> to vector<8x4xf32>
    %432 = vector.extract_strided_slice %331 {offsets = [0, 64], sizes = [8, 4], strides = [1, 1]} : vector<8x128xf32> to vector<8x4xf32>
    %433 = tpu.concatenate %431, %432 in 1 : vector<8x4xf32>, vector<8x4xf32> -> vector<8x8xf32>
    %434 = vector.extract_strided_slice %331 {offsets = [0, 92], sizes = [8, 4], strides = [1, 1]} : vector<8x128xf32> to vector<8x4xf32>
    %435 = vector.extract_strided_slice %331 {offsets = [0, 80], sizes = [8, 4], strides = [1, 1]} : vector<8x128xf32> to vector<8x4xf32>
    %436 = tpu.concatenate %434, %435 in 1 : vector<8x4xf32>, vector<8x4xf32> -> vector<8x8xf32>
    %437 = vector.extract_strided_slice %331 {offsets = [0, 108], sizes = [8, 4], strides = [1, 1]} : vector<8x128xf32> to vector<8x4xf32>
    %438 = vector.extract_strided_slice %331 {offsets = [0, 96], sizes = [8, 4], strides = [1, 1]} : vector<8x128xf32> to vector<8x4xf32>
    %439 = tpu.concatenate %437, %438 in 1 : vector<8x4xf32>, vector<8x4xf32> -> vector<8x8xf32>
    %440 = vector.extract_strided_slice %331 {offsets = [0, 124], sizes = [8, 4], strides = [1, 1]} : vector<8x128xf32> to vector<8x4xf32>
    %441 = vector.extract_strided_slice %331 {offsets = [0, 112], sizes = [8, 4], strides = [1, 1]} : vector<8x128xf32> to vector<8x4xf32>
    %442 = tpu.concatenate %440, %441 in 1 : vector<8x4xf32>, vector<8x4xf32> -> vector<8x8xf32>
    %443 = tpu.concatenate %421, %424, %427, %430, %433, %436, %439, %442 in 1 : vector<8x8xf32>, vector<8x8xf32>, vector<8x8xf32>, vector<8x8xf32>, vector<8x8xf32>, vector<8x8xf32>, vector<8x8xf32>, vector<8x8xf32> -> vector<8x64xf32>
    %444 = vector.extract_strided_slice %334 {offsets = [0, 12], sizes = [8, 4], strides = [1, 1]} : vector<8x128xf32> to vector<8x4xf32>
    %445 = vector.extract_strided_slice %334 {offsets = [0, 0], sizes = [8, 4], strides = [1, 1]} : vector<8x128xf32> to vector<8x4xf32>
    %446 = tpu.concatenate %444, %445 in 1 : vector<8x4xf32>, vector<8x4xf32> -> vector<8x8xf32>
    %447 = vector.extract_strided_slice %334 {offsets = [0, 28], sizes = [8, 4], strides = [1, 1]} : vector<8x128xf32> to vector<8x4xf32>
    %448 = vector.extract_strided_slice %334 {offsets = [0, 16], sizes = [8, 4], strides = [1, 1]} : vector<8x128xf32> to vector<8x4xf32>
    %449 = tpu.concatenate %447, %448 in 1 : vector<8x4xf32>, vector<8x4xf32> -> vector<8x8xf32>
    %450 = vector.extract_strided_slice %334 {offsets = [0, 44], sizes = [8, 4], strides = [1, 1]} : vector<8x128xf32> to vector<8x4xf32>
    %451 = vector.extract_strided_slice %334 {offsets = [0, 32], sizes = [8, 4], strides = [1, 1]} : vector<8x128xf32> to vector<8x4xf32>
    %452 = tpu.concatenate %450, %451 in 1 : vector<8x4xf32>, vector<8x4xf32> -> vector<8x8xf32>
    %453 = vector.extract_strided_slice %334 {offsets = [0, 60], sizes = [8, 4], strides = [1, 1]} : vector<8x128xf32> to vector<8x4xf32>
    %454 = vector.extract_strided_slice %334 {offsets = [0, 48], sizes = [8, 4], strides = [1, 1]} : vector<8x128xf32> to vector<8x4xf32>
    %455 = tpu.concatenate %453, %454 in 1 : vector<8x4xf32>, vector<8x4xf32> -> vector<8x8xf32>
    %456 = vector.extract_strided_slice %334 {offsets = [0, 76], sizes = [8, 4], strides = [1, 1]} : vector<8x128xf32> to vector<8x4xf32>
    %457 = vector.extract_strided_slice %334 {offsets = [0, 64], sizes = [8, 4], strides = [1, 1]} : vector<8x128xf32> to vector<8x4xf32>
    %458 = tpu.concatenate %456, %457 in 1 : vector<8x4xf32>, vector<8x4xf32> -> vector<8x8xf32>
    %459 = vector.extract_strided_slice %334 {offsets = [0, 92], sizes = [8, 4], strides = [1, 1]} : vector<8x128xf32> to vector<8x4xf32>
    %460 = vector.extract_strided_slice %334 {offsets = [0, 80], sizes = [8, 4], strides = [1, 1]} : vector<8x128xf32> to vector<8x4xf32>
    %461 = tpu.concatenate %459, %460 in 1 : vector<8x4xf32>, vector<8x4xf32> -> vector<8x8xf32>
    %462 = vector.extract_strided_slice %334 {offsets = [0, 108], sizes = [8, 4], strides = [1, 1]} : vector<8x128xf32> to vector<8x4xf32>
    %463 = vector.extract_strided_slice %334 {offsets = [0, 96], sizes = [8, 4], strides = [1, 1]} : vector<8x128xf32> to vector<8x4xf32>
    %464 = tpu.concatenate %462, %463 in 1 : vector<8x4xf32>, vector<8x4xf32> -> vector<8x8xf32>
    %465 = vector.extract_strided_slice %334 {offsets = [0, 124], sizes = [8, 4], strides = [1, 1]} : vector<8x128xf32> to vector<8x4xf32>
    %466 = vector.extract_strided_slice %334 {offsets = [0, 112], sizes = [8, 4], strides = [1, 1]} : vector<8x128xf32> to vector<8x4xf32>
    %467 = tpu.concatenate %465, %466 in 1 : vector<8x4xf32>, vector<8x4xf32> -> vector<8x8xf32>
    %468 = tpu.concatenate %446, %449, %452, %455, %458, %461, %464, %467 in 1 : vector<8x8xf32>, vector<8x8xf32>, vector<8x8xf32>, vector<8x8xf32>, vector<8x8xf32>, vector<8x8xf32>, vector<8x8xf32>, vector<8x8xf32> -> vector<8x64xf32>
    %469 = vector.extract_strided_slice %337 {offsets = [0, 12], sizes = [8, 4], strides = [1, 1]} : vector<8x128xf32> to vector<8x4xf32>
    %470 = vector.extract_strided_slice %337 {offsets = [0, 0], sizes = [8, 4], strides = [1, 1]} : vector<8x128xf32> to vector<8x4xf32>
    %471 = tpu.concatenate %469, %470 in 1 : vector<8x4xf32>, vector<8x4xf32> -> vector<8x8xf32>
    %472 = vector.extract_strided_slice %337 {offsets = [0, 28], sizes = [8, 4], strides = [1, 1]} : vector<8x128xf32> to vector<8x4xf32>
    %473 = vector.extract_strided_slice %337 {offsets = [0, 16], sizes = [8, 4], strides = [1, 1]} : vector<8x128xf32> to vector<8x4xf32>
    %474 = tpu.concatenate %472, %473 in 1 : vector<8x4xf32>, vector<8x4xf32> -> vector<8x8xf32>
    %475 = vector.extract_strided_slice %337 {offsets = [0, 44], sizes = [8, 4], strides = [1, 1]} : vector<8x128xf32> to vector<8x4xf32>
    %476 = vector.extract_strided_slice %337 {offsets = [0, 32], sizes = [8, 4], strides = [1, 1]} : vector<8x128xf32> to vector<8x4xf32>
    %477 = tpu.concatenate %475, %476 in 1 : vector<8x4xf32>, vector<8x4xf32> -> vector<8x8xf32>
    %478 = vector.extract_strided_slice %337 {offsets = [0, 60], sizes = [8, 4], strides = [1, 1]} : vector<8x128xf32> to vector<8x4xf32>
    %479 = vector.extract_strided_slice %337 {offsets = [0, 48], sizes = [8, 4], strides = [1, 1]} : vector<8x128xf32> to vector<8x4xf32>
    %480 = tpu.concatenate %478, %479 in 1 : vector<8x4xf32>, vector<8x4xf32> -> vector<8x8xf32>
    %481 = vector.extract_strided_slice %337 {offsets = [0, 76], sizes = [8, 4], strides = [1, 1]} : vector<8x128xf32> to vector<8x4xf32>
    %482 = vector.extract_strided_slice %337 {offsets = [0, 64], sizes = [8, 4], strides = [1, 1]} : vector<8x128xf32> to vector<8x4xf32>
    %483 = tpu.concatenate %481, %482 in 1 : vector<8x4xf32>, vector<8x4xf32> -> vector<8x8xf32>
    %484 = vector.extract_strided_slice %337 {offsets = [0, 92], sizes = [8, 4], strides = [1, 1]} : vector<8x128xf32> to vector<8x4xf32>
    %485 = vector.extract_strided_slice %337 {offsets = [0, 80], sizes = [8, 4], strides = [1, 1]} : vector<8x128xf32> to vector<8x4xf32>
    %486 = tpu.concatenate %484, %485 in 1 : vector<8x4xf32>, vector<8x4xf32> -> vector<8x8xf32>
    %487 = vector.extract_strided_slice %337 {offsets = [0, 108], sizes = [8, 4], strides = [1, 1]} : vector<8x128xf32> to vector<8x4xf32>
    %488 = vector.extract_strided_slice %337 {offsets = [0, 96], sizes = [8, 4], strides = [1, 1]} : vector<8x128xf32> to vector<8x4xf32>
    %489 = tpu.concatenate %487, %488 in 1 : vector<8x4xf32>, vector<8x4xf32> -> vector<8x8xf32>
    %490 = vector.extract_strided_slice %337 {offsets = [0, 124], sizes = [8, 4], strides = [1, 1]} : vector<8x128xf32> to vector<8x4xf32>
    %491 = vector.extract_strided_slice %337 {offsets = [0, 112], sizes = [8, 4], strides = [1, 1]} : vector<8x128xf32> to vector<8x4xf32>
    %492 = tpu.concatenate %490, %491 in 1 : vector<8x4xf32>, vector<8x4xf32> -> vector<8x8xf32>
    %493 = tpu.concatenate %471, %474, %477, %480, %483, %486, %489, %492 in 1 : vector<8x8xf32>, vector<8x8xf32>, vector<8x8xf32>, vector<8x8xf32>, vector<8x8xf32>, vector<8x8xf32>, vector<8x8xf32>, vector<8x8xf32> -> vector<8x64xf32>
    %494 = vector.extract_strided_slice %340 {offsets = [0, 12], sizes = [8, 4], strides = [1, 1]} : vector<8x128xf32> to vector<8x4xf32>
    %495 = vector.extract_strided_slice %340 {offsets = [0, 0], sizes = [8, 4], strides = [1, 1]} : vector<8x128xf32> to vector<8x4xf32>
    %496 = tpu.concatenate %494, %495 in 1 : vector<8x4xf32>, vector<8x4xf32> -> vector<8x8xf32>
    %497 = vector.extract_strided_slice %340 {offsets = [0, 28], sizes = [8, 4], strides = [1, 1]} : vector<8x128xf32> to vector<8x4xf32>
    %498 = vector.extract_strided_slice %340 {offsets = [0, 16], sizes = [8, 4], strides = [1, 1]} : vector<8x128xf32> to vector<8x4xf32>
    %499 = tpu.concatenate %497, %498 in 1 : vector<8x4xf32>, vector<8x4xf32> -> vector<8x8xf32>
    %500 = vector.extract_strided_slice %340 {offsets = [0, 44], sizes = [8, 4], strides = [1, 1]} : vector<8x128xf32> to vector<8x4xf32>
    %501 = vector.extract_strided_slice %340 {offsets = [0, 32], sizes = [8, 4], strides = [1, 1]} : vector<8x128xf32> to vector<8x4xf32>
    %502 = tpu.concatenate %500, %501 in 1 : vector<8x4xf32>, vector<8x4xf32> -> vector<8x8xf32>
    %503 = vector.extract_strided_slice %340 {offsets = [0, 60], sizes = [8, 4], strides = [1, 1]} : vector<8x128xf32> to vector<8x4xf32>
    %504 = vector.extract_strided_slice %340 {offsets = [0, 48], sizes = [8, 4], strides = [1, 1]} : vector<8x128xf32> to vector<8x4xf32>
    %505 = tpu.concatenate %503, %504 in 1 : vector<8x4xf32>, vector<8x4xf32> -> vector<8x8xf32>
    %506 = vector.extract_strided_slice %340 {offsets = [0, 76], sizes = [8, 4], strides = [1, 1]} : vector<8x128xf32> to vector<8x4xf32>
    %507 = vector.extract_strided_slice %340 {offsets = [0, 64], sizes = [8, 4], strides = [1, 1]} : vector<8x128xf32> to vector<8x4xf32>
    %508 = tpu.concatenate %506, %507 in 1 : vector<8x4xf32>, vector<8x4xf32> -> vector<8x8xf32>
    %509 = vector.extract_strided_slice %340 {offsets = [0, 92], sizes = [8, 4], strides = [1, 1]} : vector<8x128xf32> to vector<8x4xf32>
    %510 = vector.extract_strided_slice %340 {offsets = [0, 80], sizes = [8, 4], strides = [1, 1]} : vector<8x128xf32> to vector<8x4xf32>
    %511 = tpu.concatenate %509, %510 in 1 : vector<8x4xf32>, vector<8x4xf32> -> vector<8x8xf32>
    %512 = vector.extract_strided_slice %340 {offsets = [0, 108], sizes = [8, 4], strides = [1, 1]} : vector<8x128xf32> to vector<8x4xf32>
    %513 = vector.extract_strided_slice %340 {offsets = [0, 96], sizes = [8, 4], strides = [1, 1]} : vector<8x128xf32> to vector<8x4xf32>
    %514 = tpu.concatenate %512, %513 in 1 : vector<8x4xf32>, vector<8x4xf32> -> vector<8x8xf32>
    %515 = vector.extract_strided_slice %340 {offsets = [0, 124], sizes = [8, 4], strides = [1, 1]} : vector<8x128xf32> to vector<8x4xf32>
    %516 = vector.extract_strided_slice %340 {offsets = [0, 112], sizes = [8, 4], strides = [1, 1]} : vector<8x128xf32> to vector<8x4xf32>
    %517 = tpu.concatenate %515, %516 in 1 : vector<8x4xf32>, vector<8x4xf32> -> vector<8x8xf32>
    %518 = tpu.concatenate %496, %499, %502, %505, %508, %511, %514, %517 in 1 : vector<8x8xf32>, vector<8x8xf32>, vector<8x8xf32>, vector<8x8xf32>, vector<8x8xf32>, vector<8x8xf32>, vector<8x8xf32>, vector<8x8xf32> -> vector<8x64xf32>
    %519 = vector.extract_strided_slice %343 {offsets = [0, 12], sizes = [8, 4], strides = [1, 1]} : vector<8x128xf32> to vector<8x4xf32>
    %520 = vector.extract_strided_slice %343 {offsets = [0, 0], sizes = [8, 4], strides = [1, 1]} : vector<8x128xf32> to vector<8x4xf32>
    %521 = tpu.concatenate %519, %520 in 1 : vector<8x4xf32>, vector<8x4xf32> -> vector<8x8xf32>
    %522 = vector.extract_strided_slice %343 {offsets = [0, 28], sizes = [8, 4], strides = [1, 1]} : vector<8x128xf32> to vector<8x4xf32>
    %523 = vector.extract_strided_slice %343 {offsets = [0, 16], sizes = [8, 4], strides = [1, 1]} : vector<8x128xf32> to vector<8x4xf32>
    %524 = tpu.concatenate %522, %523 in 1 : vector<8x4xf32>, vector<8x4xf32> -> vector<8x8xf32>
    %525 = vector.extract_strided_slice %343 {offsets = [0, 44], sizes = [8, 4], strides = [1, 1]} : vector<8x128xf32> to vector<8x4xf32>
    %526 = vector.extract_strided_slice %343 {offsets = [0, 32], sizes = [8, 4], strides = [1, 1]} : vector<8x128xf32> to vector<8x4xf32>
    %527 = tpu.concatenate %525, %526 in 1 : vector<8x4xf32>, vector<8x4xf32> -> vector<8x8xf32>
    %528 = vector.extract_strided_slice %343 {offsets = [0, 60], sizes = [8, 4], strides = [1, 1]} : vector<8x128xf32> to vector<8x4xf32>
    %529 = vector.extract_strided_slice %343 {offsets = [0, 48], sizes = [8, 4], strides = [1, 1]} : vector<8x128xf32> to vector<8x4xf32>
    %530 = tpu.concatenate %528, %529 in 1 : vector<8x4xf32>, vector<8x4xf32> -> vector<8x8xf32>
    %531 = vector.extract_strided_slice %343 {offsets = [0, 76], sizes = [8, 4], strides = [1, 1]} : vector<8x128xf32> to vector<8x4xf32>
    %532 = vector.extract_strided_slice %343 {offsets = [0, 64], sizes = [8, 4], strides = [1, 1]} : vector<8x128xf32> to vector<8x4xf32>
    %533 = tpu.concatenate %531, %532 in 1 : vector<8x4xf32>, vector<8x4xf32> -> vector<8x8xf32>
    %534 = vector.extract_strided_slice %343 {offsets = [0, 92], sizes = [8, 4], strides = [1, 1]} : vector<8x128xf32> to vector<8x4xf32>
    %535 = vector.extract_strided_slice %343 {offsets = [0, 80], sizes = [8, 4], strides = [1, 1]} : vector<8x128xf32> to vector<8x4xf32>
    %536 = tpu.concatenate %534, %535 in 1 : vector<8x4xf32>, vector<8x4xf32> -> vector<8x8xf32>
    %537 = vector.extract_strided_slice %343 {offsets = [0, 108], sizes = [8, 4], strides = [1, 1]} : vector<8x128xf32> to vector<8x4xf32>
    %538 = vector.extract_strided_slice %343 {offsets = [0, 96], sizes = [8, 4], strides = [1, 1]} : vector<8x128xf32> to vector<8x4xf32>
    %539 = tpu.concatenate %537, %538 in 1 : vector<8x4xf32>, vector<8x4xf32> -> vector<8x8xf32>
    %540 = vector.extract_strided_slice %343 {offsets = [0, 124], sizes = [8, 4], strides = [1, 1]} : vector<8x128xf32> to vector<8x4xf32>
    %541 = vector.extract_strided_slice %343 {offsets = [0, 112], sizes = [8, 4], strides = [1, 1]} : vector<8x128xf32> to vector<8x4xf32>
    %542 = tpu.concatenate %540, %541 in 1 : vector<8x4xf32>, vector<8x4xf32> -> vector<8x8xf32>
    %543 = tpu.concatenate %521, %524, %527, %530, %533, %536, %539, %542 in 1 : vector<8x8xf32>, vector<8x8xf32>, vector<8x8xf32>, vector<8x8xf32>, vector<8x8xf32>, vector<8x8xf32>, vector<8x8xf32>, vector<8x8xf32> -> vector<8x64xf32>
    %544 = tpu.concatenate %368, %393, %418, %443, %468, %493, %518, %543 in 1 : vector<8x64xf32>, vector<8x64xf32>, vector<8x64xf32>, vector<8x64xf32>, vector<8x64xf32>, vector<8x64xf32>, vector<8x64xf32>, vector<8x64xf32> -> vector<8x512xf32>
    %c1 = arith.constant 1 : index
    %c0_52 = arith.constant 0 : index
    %c0_53 = arith.constant 0 : index
    %545 = vector.load %arg2[%c1, %c0_52, %c0_53] : memref<2x8x2048xf32, #tpu.memory_space<vmem>>, vector<1x8x512xf32>
    %546 = vector.shape_cast %545 : vector<1x8x512xf32> to vector<8x512xf32>
    %547 = vector.shape_cast %544 : vector<8x512xf32> to vector<1x8x512xf32>
    tpu.vector_store %arg2[%c1, %c0_52, %c0_53], %547 {strides = array<i32>} : memref<2x8x2048xf32, #tpu.memory_space<vmem>>, vector<1x8x512xf32>,
    %548 = vector.extract_strided_slice %322 {offsets = [0, 4], sizes = [8, 8], strides = [1, 1]} : vector<8x128xf32> to vector<8x8xf32>
    %549 = vector.extract_strided_slice %322 {offsets = [0, 20], sizes = [8, 8], strides = [1, 1]} : vector<8x128xf32> to vector<8x8xf32>
    %550 = vector.extract_strided_slice %322 {offsets = [0, 36], sizes = [8, 8], strides = [1, 1]} : vector<8x128xf32> to vector<8x8xf32>
    %551 = vector.extract_strided_slice %322 {offsets = [0, 52], sizes = [8, 8], strides = [1, 1]} : vector<8x128xf32> to vector<8x8xf32>
    %552 = vector.extract_strided_slice %322 {offsets = [0, 68], sizes = [8, 8], strides = [1, 1]} : vector<8x128xf32> to vector<8x8xf32>
    %553 = vector.extract_strided_slice %322 {offsets = [0, 84], sizes = [8, 8], strides = [1, 1]} : vector<8x128xf32> to vector<8x8xf32>
    %554 = vector.extract_strided_slice %322 {offsets = [0, 100], sizes = [8, 8], strides = [1, 1]} : vector<8x128xf32> to vector<8x8xf32>
    %555 = vector.extract_strided_slice %322 {offsets = [0, 116], sizes = [8, 8], strides = [1, 1]} : vector<8x128xf32> to vector<8x8xf32>
    %556 = tpu.concatenate %548, %549, %550, %551, %552, %553, %554, %555 in 1 : vector<8x8xf32>, vector<8x8xf32>, vector<8x8xf32>, vector<8x8xf32>, vector<8x8xf32>, vector<8x8xf32>, vector<8x8xf32>, vector<8x8xf32> -> vector<8x64xf32>
    %557 = vector.extract_strided_slice %325 {offsets = [0, 4], sizes = [8, 8], strides = [1, 1]} : vector<8x128xf32> to vector<8x8xf32>
    %558 = vector.extract_strided_slice %325 {offsets = [0, 20], sizes = [8, 8], strides = [1, 1]} : vector<8x128xf32> to vector<8x8xf32>
    %559 = vector.extract_strided_slice %325 {offsets = [0, 36], sizes = [8, 8], strides = [1, 1]} : vector<8x128xf32> to vector<8x8xf32>
    %560 = vector.extract_strided_slice %325 {offsets = [0, 52], sizes = [8, 8], strides = [1, 1]} : vector<8x128xf32> to vector<8x8xf32>
    %561 = vector.extract_strided_slice %325 {offsets = [0, 68], sizes = [8, 8], strides = [1, 1]} : vector<8x128xf32> to vector<8x8xf32>
    %562 = vector.extract_strided_slice %325 {offsets = [0, 84], sizes = [8, 8], strides = [1, 1]} : vector<8x128xf32> to vector<8x8xf32>
    %563 = vector.extract_strided_slice %325 {offsets = [0, 100], sizes = [8, 8], strides = [1, 1]} : vector<8x128xf32> to vector<8x8xf32>
    %564 = vector.extract_strided_slice %325 {offsets = [0, 116], sizes = [8, 8], strides = [1, 1]} : vector<8x128xf32> to vector<8x8xf32>
    %565 = tpu.concatenate %557, %558, %559, %560, %561, %562, %563, %564 in 1 : vector<8x8xf32>, vector<8x8xf32>, vector<8x8xf32>, vector<8x8xf32>, vector<8x8xf32>, vector<8x8xf32>, vector<8x8xf32>, vector<8x8xf32> -> vector<8x64xf32>
    %566 = vector.extract_strided_slice %328 {offsets = [0, 4], sizes = [8, 8], strides = [1, 1]} : vector<8x128xf32> to vector<8x8xf32>
    %567 = vector.extract_strided_slice %328 {offsets = [0, 20], sizes = [8, 8], strides = [1, 1]} : vector<8x128xf32> to vector<8x8xf32>
    %568 = vector.extract_strided_slice %328 {offsets = [0, 36], sizes = [8, 8], strides = [1, 1]} : vector<8x128xf32> to vector<8x8xf32>
    %569 = vector.extract_strided_slice %328 {offsets = [0, 52], sizes = [8, 8], strides = [1, 1]} : vector<8x128xf32> to vector<8x8xf32>
    %570 = vector.extract_strided_slice %328 {offsets = [0, 68], sizes = [8, 8], strides = [1, 1]} : vector<8x128xf32> to vector<8x8xf32>
    %571 = vector.extract_strided_slice %328 {offsets = [0, 84], sizes = [8, 8], strides = [1, 1]} : vector<8x128xf32> to vector<8x8xf32>
    %572 = vector.extract_strided_slice %328 {offsets = [0, 100], sizes = [8, 8], strides = [1, 1]} : vector<8x128xf32> to vector<8x8xf32>
    %573 = vector.extract_strided_slice %328 {offsets = [0, 116], sizes = [8, 8], strides = [1, 1]} : vector<8x128xf32> to vector<8x8xf32>
    %574 = tpu.concatenate %566, %567, %568, %569, %570, %571, %572, %573 in 1 : vector<8x8xf32>, vector<8x8xf32>, vector<8x8xf32>, vector<8x8xf32>, vector<8x8xf32>, vector<8x8xf32>, vector<8x8xf32>, vector<8x8xf32> -> vector<8x64xf32>
    %575 = vector.extract_strided_slice %331 {offsets = [0, 4], sizes = [8, 8], strides = [1, 1]} : vector<8x128xf32> to vector<8x8xf32>
    %576 = vector.extract_strided_slice %331 {offsets = [0, 20], sizes = [8, 8], strides = [1, 1]} : vector<8x128xf32> to vector<8x8xf32>
    %577 = vector.extract_strided_slice %331 {offsets = [0, 36], sizes = [8, 8], strides = [1, 1]} : vector<8x128xf32> to vector<8x8xf32>
    %578 = vector.extract_strided_slice %331 {offsets = [0, 52], sizes = [8, 8], strides = [1, 1]} : vector<8x128xf32> to vector<8x8xf32>
    %579 = vector.extract_strided_slice %331 {offsets = [0, 68], sizes = [8, 8], strides = [1, 1]} : vector<8x128xf32> to vector<8x8xf32>
    %580 = vector.extract_strided_slice %331 {offsets = [0, 84], sizes = [8, 8], strides = [1, 1]} : vector<8x128xf32> to vector<8x8xf32>
    %581 = vector.extract_strided_slice %331 {offsets = [0, 100], sizes = [8, 8], strides = [1, 1]} : vector<8x128xf32> to vector<8x8xf32>
    %582 = vector.extract_strided_slice %331 {offsets = [0, 116], sizes = [8, 8], strides = [1, 1]} : vector<8x128xf32> to vector<8x8xf32>
    %583 = tpu.concatenate %575, %576, %577, %578, %579, %580, %581, %582 in 1 : vector<8x8xf32>, vector<8x8xf32>, vector<8x8xf32>, vector<8x8xf32>, vector<8x8xf32>, vector<8x8xf32>, vector<8x8xf32>, vector<8x8xf32> -> vector<8x64xf32>
    %584 = vector.extract_strided_slice %334 {offsets = [0, 4], sizes = [8, 8], strides = [1, 1]} : vector<8x128xf32> to vector<8x8xf32>
    %585 = vector.extract_strided_slice %334 {offsets = [0, 20], sizes = [8, 8], strides = [1, 1]} : vector<8x128xf32> to vector<8x8xf32>
    %586 = vector.extract_strided_slice %334 {offsets = [0, 36], sizes = [8, 8], strides = [1, 1]} : vector<8x128xf32> to vector<8x8xf32>
    %587 = vector.extract_strided_slice %334 {offsets = [0, 52], sizes = [8, 8], strides = [1, 1]} : vector<8x128xf32> to vector<8x8xf32>
    %588 = vector.extract_strided_slice %334 {offsets = [0, 68], sizes = [8, 8], strides = [1, 1]} : vector<8x128xf32> to vector<8x8xf32>
    %589 = vector.extract_strided_slice %334 {offsets = [0, 84], sizes = [8, 8], strides = [1, 1]} : vector<8x128xf32> to vector<8x8xf32>
    %590 = vector.extract_strided_slice %334 {offsets = [0, 100], sizes = [8, 8], strides = [1, 1]} : vector<8x128xf32> to vector<8x8xf32>
    %591 = vector.extract_strided_slice %334 {offsets = [0, 116], sizes = [8, 8], strides = [1, 1]} : vector<8x128xf32> to vector<8x8xf32>
    %592 = tpu.concatenate %584, %585, %586, %587, %588, %589, %590, %591 in 1 : vector<8x8xf32>, vector<8x8xf32>, vector<8x8xf32>, vector<8x8xf32>, vector<8x8xf32>, vector<8x8xf32>, vector<8x8xf32>, vector<8x8xf32> -> vector<8x64xf32>
    %593 = vector.extract_strided_slice %337 {offsets = [0, 4], sizes = [8, 8], strides = [1, 1]} : vector<8x128xf32> to vector<8x8xf32>
    %594 = vector.extract_strided_slice %337 {offsets = [0, 20], sizes = [8, 8], strides = [1, 1]} : vector<8x128xf32> to vector<8x8xf32>
    %595 = vector.extract_strided_slice %337 {offsets = [0, 36], sizes = [8, 8], strides = [1, 1]} : vector<8x128xf32> to vector<8x8xf32>
    %596 = vector.extract_strided_slice %337 {offsets = [0, 52], sizes = [8, 8], strides = [1, 1]} : vector<8x128xf32> to vector<8x8xf32>
    %597 = vector.extract_strided_slice %337 {offsets = [0, 68], sizes = [8, 8], strides = [1, 1]} : vector<8x128xf32> to vector<8x8xf32>
    %598 = vector.extract_strided_slice %337 {offsets = [0, 84], sizes = [8, 8], strides = [1, 1]} : vector<8x128xf32> to vector<8x8xf32>
    %599 = vector.extract_strided_slice %337 {offsets = [0, 100], sizes = [8, 8], strides = [1, 1]} : vector<8x128xf32> to vector<8x8xf32>
    %600 = vector.extract_strided_slice %337 {offsets = [0, 116], sizes = [8, 8], strides = [1, 1]} : vector<8x128xf32> to vector<8x8xf32>
    %601 = tpu.concatenate %593, %594, %595, %596, %597, %598, %599, %600 in 1 : vector<8x8xf32>, vector<8x8xf32>, vector<8x8xf32>, vector<8x8xf32>, vector<8x8xf32>, vector<8x8xf32>, vector<8x8xf32>, vector<8x8xf32> -> vector<8x64xf32>
    %602 = vector.extract_strided_slice %340 {offsets = [0, 4], sizes = [8, 8], strides = [1, 1]} : vector<8x128xf32> to vector<8x8xf32>
    %603 = vector.extract_strided_slice %340 {offsets = [0, 20], sizes = [8, 8], strides = [1, 1]} : vector<8x128xf32> to vector<8x8xf32>
    %604 = vector.extract_strided_slice %340 {offsets = [0, 36], sizes = [8, 8], strides = [1, 1]} : vector<8x128xf32> to vector<8x8xf32>
    %605 = vector.extract_strided_slice %340 {offsets = [0, 52], sizes = [8, 8], strides = [1, 1]} : vector<8x128xf32> to vector<8x8xf32>
    %606 = vector.extract_strided_slice %340 {offsets = [0, 68], sizes = [8, 8], strides = [1, 1]} : vector<8x128xf32> to vector<8x8xf32>
    %607 = vector.extract_strided_slice %340 {offsets = [0, 84], sizes = [8, 8], strides = [1, 1]} : vector<8x128xf32> to vector<8x8xf32>
    %608 = vector.extract_strided_slice %340 {offsets = [0, 100], sizes = [8, 8], strides = [1, 1]} : vector<8x128xf32> to vector<8x8xf32>
    %609 = vector.extract_strided_slice %340 {offsets = [0, 116], sizes = [8, 8], strides = [1, 1]} : vector<8x128xf32> to vector<8x8xf32>
    %610 = tpu.concatenate %602, %603, %604, %605, %606, %607, %608, %609 in 1 : vector<8x8xf32>, vector<8x8xf32>, vector<8x8xf32>, vector<8x8xf32>, vector<8x8xf32>, vector<8x8xf32>, vector<8x8xf32>, vector<8x8xf32> -> vector<8x64xf32>
    %611 = vector.extract_strided_slice %343 {offsets = [0, 4], sizes = [8, 8], strides = [1, 1]} : vector<8x128xf32> to vector<8x8xf32>
    %612 = vector.extract_strided_slice %343 {offsets = [0, 20], sizes = [8, 8], strides = [1, 1]} : vector<8x128xf32> to vector<8x8xf32>
    %613 = vector.extract_strided_slice %343 {offsets = [0, 36], sizes = [8, 8], strides = [1, 1]} : vector<8x128xf32> to vector<8x8xf32>
    %614 = vector.extract_strided_slice %343 {offsets = [0, 52], sizes = [8, 8], strides = [1, 1]} : vector<8x128xf32> to vector<8x8xf32>
    %615 = vector.extract_strided_slice %343 {offsets = [0, 68], sizes = [8, 8], strides = [1, 1]} : vector<8x128xf32> to vector<8x8xf32>
    %616 = vector.extract_strided_slice %343 {offsets = [0, 84], sizes = [8, 8], strides = [1, 1]} : vector<8x128xf32> to vector<8x8xf32>
    %617 = vector.extract_strided_slice %343 {offsets = [0, 100], sizes = [8, 8], strides = [1, 1]} : vector<8x128xf32> to vector<8x8xf32>
    %618 = vector.extract_strided_slice %343 {offsets = [0, 116], sizes = [8, 8], strides = [1, 1]} : vector<8x128xf32> to vector<8x8xf32>
    %619 = tpu.concatenate %611, %612, %613, %614, %615, %616, %617, %618 in 1 : vector<8x8xf32>, vector<8x8xf32>, vector<8x8xf32>, vector<8x8xf32>, vector<8x8xf32>, vector<8x8xf32>, vector<8x8xf32>, vector<8x8xf32> -> vector<8x64xf32>
    %620 = tpu.concatenate %556, %565, %574, %583, %592, %601, %610, %619 in 1 : vector<8x64xf32>, vector<8x64xf32>, vector<8x64xf32>, vector<8x64xf32>, vector<8x64xf32>, vector<8x64xf32>, vector<8x64xf32>, vector<8x64xf32> -> vector<8x512xf32>
    %c1_54 = arith.constant 1 : index
    %c0_55 = arith.constant 0 : index
    %c512_56 = arith.constant 512 : index
    %621 = vector.load %arg2[%c1_54, %c0_55, %c512_56] : memref<2x8x2048xf32, #tpu.memory_space<vmem>>, vector<1x8x512xf32>
    %622 = vector.shape_cast %621 : vector<1x8x512xf32> to vector<8x512xf32>
    %623 = vector.shape_cast %620 : vector<8x512xf32> to vector<1x8x512xf32>
    tpu.vector_store %arg2[%c1_54, %c0_55, %c512_56], %623 {strides = array<i32>} : memref<2x8x2048xf32, #tpu.memory_space<vmem>>, vector<1x8x512xf32>,
    %c0_57 = arith.constant 0 : index
    %c64 = arith.constant 64 : index
    %624 = vector.load %arg1[%c0_57, %c64] : memref<8x2048xf32, #tpu.memory_space<vmem>>, vector<8x128xf32>
    %c0_58 = arith.constant 0 : index
    %c320 = arith.constant 320 : index
    %625 = vector.load %arg1[%c0_58, %c320] : memref<8x2048xf32, #tpu.memory_space<vmem>>, vector<8x128xf32>
    %c0_59 = arith.constant 0 : index
    %c576 = arith.constant 576 : index
    %626 = vector.load %arg1[%c0_59, %c576] : memref<8x2048xf32, #tpu.memory_space<vmem>>, vector<8x128xf32>
    %c0_60 = arith.constant 0 : index
    %c832 = arith.constant 832 : index
    %627 = vector.load %arg1[%c0_60, %c832] : memref<8x2048xf32, #tpu.memory_space<vmem>>, vector<8x128xf32>
    %c0_61 = arith.constant 0 : index
    %c1088 = arith.constant 1088 : index
    %628 = vector.load %arg1[%c0_61, %c1088] : memref<8x2048xf32, #tpu.memory_space<vmem>>, vector<8x128xf32>
    %c0_62 = arith.constant 0 : index
    %c1344 = arith.constant 1344 : index
    %629 = vector.load %arg1[%c0_62, %c1344] : memref<8x2048xf32, #tpu.memory_space<vmem>>, vector<8x128xf32>
    %c0_63 = arith.constant 0 : index
    %c1600 = arith.constant 1600 : index
    %630 = vector.load %arg1[%c0_63, %c1600] : memref<8x2048xf32, #tpu.memory_space<vmem>>, vector<8x128xf32>
    %c0_64 = arith.constant 0 : index
    %c1856 = arith.constant 1856 : index
    %631 = vector.load %arg1[%c0_64, %c1856] : memref<8x2048xf32, #tpu.memory_space<vmem>>, vector<8x128xf32>
    %632 = vector.extract_strided_slice %624 {offsets = [0, 12], sizes = [8, 4], strides = [1, 1]} : vector<8x128xf32> to vector<8x4xf32>
    %633 = vector.extract_strided_slice %624 {offsets = [0, 0], sizes = [8, 4], strides = [1, 1]} : vector<8x128xf32> to vector<8x4xf32>
    %634 = tpu.concatenate %632, %633 in 1 : vector<8x4xf32>, vector<8x4xf32> -> vector<8x8xf32>
    %635 = vector.extract_strided_slice %624 {offsets = [0, 28], sizes = [8, 4], strides = [1, 1]} : vector<8x128xf32> to vector<8x4xf32>
    %636 = vector.extract_strided_slice %624 {offsets = [0, 16], sizes = [8, 4], strides = [1, 1]} : vector<8x128xf32> to vector<8x4xf32>
    %637 = tpu.concatenate %635, %636 in 1 : vector<8x4xf32>, vector<8x4xf32> -> vector<8x8xf32>
    %638 = vector.extract_strided_slice %624 {offsets = [0, 44], sizes = [8, 4], strides = [1, 1]} : vector<8x128xf32> to vector<8x4xf32>
    %639 = vector.extract_strided_slice %624 {offsets = [0, 32], sizes = [8, 4], strides = [1, 1]} : vector<8x128xf32> to vector<8x4xf32>
    %640 = tpu.concatenate %638, %639 in 1 : vector<8x4xf32>, vector<8x4xf32> -> vector<8x8xf32>
    %641 = vector.extract_strided_slice %624 {offsets = [0, 60], sizes = [8, 4], strides = [1, 1]} : vector<8x128xf32> to vector<8x4xf32>
    %642 = vector.extract_strided_slice %624 {offsets = [0, 48], sizes = [8, 4], strides = [1, 1]} : vector<8x128xf32> to vector<8x4xf32>
    %643 = tpu.concatenate %641, %642 in 1 : vector<8x4xf32>, vector<8x4xf32> -> vector<8x8xf32>
    %644 = vector.extract_strided_slice %624 {offsets = [0, 76], sizes = [8, 4], strides = [1, 1]} : vector<8x128xf32> to vector<8x4xf32>
    %645 = vector.extract_strided_slice %624 {offsets = [0, 64], sizes = [8, 4], strides = [1, 1]} : vector<8x128xf32> to vector<8x4xf32>
    %646 = tpu.concatenate %644, %645 in 1 : vector<8x4xf32>, vector<8x4xf32> -> vector<8x8xf32>
    %647 = vector.extract_strided_slice %624 {offsets = [0, 92], sizes = [8, 4], strides = [1, 1]} : vector<8x128xf32> to vector<8x4xf32>
    %648 = vector.extract_strided_slice %624 {offsets = [0, 80], sizes = [8, 4], strides = [1, 1]} : vector<8x128xf32> to vector<8x4xf32>
    %649 = tpu.concatenate %647, %648 in 1 : vector<8x4xf32>, vector<8x4xf32> -> vector<8x8xf32>
    %650 = vector.extract_strided_slice %624 {offsets = [0, 108], sizes = [8, 4], strides = [1, 1]} : vector<8x128xf32> to vector<8x4xf32>
    %651 = vector.extract_strided_slice %624 {offsets = [0, 96], sizes = [8, 4], strides = [1, 1]} : vector<8x128xf32> to vector<8x4xf32>
    %652 = tpu.concatenate %650, %651 in 1 : vector<8x4xf32>, vector<8x4xf32> -> vector<8x8xf32>
    %653 = vector.extract_strided_slice %624 {offsets = [0, 124], sizes = [8, 4], strides = [1, 1]} : vector<8x128xf32> to vector<8x4xf32>
    %654 = vector.extract_strided_slice %624 {offsets = [0, 112], sizes = [8, 4], strides = [1, 1]} : vector<8x128xf32> to vector<8x4xf32>
    %655 = tpu.concatenate %653, %654 in 1 : vector<8x4xf32>, vector<8x4xf32> -> vector<8x8xf32>
    %656 = tpu.concatenate %634, %637, %640, %643, %646, %649, %652, %655 in 1 : vector<8x8xf32>, vector<8x8xf32>, vector<8x8xf32>, vector<8x8xf32>, vector<8x8xf32>, vector<8x8xf32>, vector<8x8xf32>, vector<8x8xf32> -> vector<8x64xf32>
    %657 = vector.extract_strided_slice %625 {offsets = [0, 12], sizes = [8, 4], strides = [1, 1]} : vector<8x128xf32> to vector<8x4xf32>
    %658 = vector.extract_strided_slice %625 {offsets = [0, 0], sizes = [8, 4], strides = [1, 1]} : vector<8x128xf32> to vector<8x4xf32>
    %659 = tpu.concatenate %657, %658 in 1 : vector<8x4xf32>, vector<8x4xf32> -> vector<8x8xf32>
    %660 = vector.extract_strided_slice %625 {offsets = [0, 28], sizes = [8, 4], strides = [1, 1]} : vector<8x128xf32> to vector<8x4xf32>
    %661 = vector.extract_strided_slice %625 {offsets = [0, 16], sizes = [8, 4], strides = [1, 1]} : vector<8x128xf32> to vector<8x4xf32>
    %662 = tpu.concatenate %660, %661 in 1 : vector<8x4xf32>, vector<8x4xf32> -> vector<8x8xf32>
    %663 = vector.extract_strided_slice %625 {offsets = [0, 44], sizes = [8, 4], strides = [1, 1]} : vector<8x128xf32> to vector<8x4xf32>
    %664 = vector.extract_strided_slice %625 {offsets = [0, 32], sizes = [8, 4], strides = [1, 1]} : vector<8x128xf32> to vector<8x4xf32>
    %665 = tpu.concatenate %663, %664 in 1 : vector<8x4xf32>, vector<8x4xf32> -> vector<8x8xf32>
    %666 = vector.extract_strided_slice %625 {offsets = [0, 60], sizes = [8, 4], strides = [1, 1]} : vector<8x128xf32> to vector<8x4xf32>
    %667 = vector.extract_strided_slice %625 {offsets = [0, 48], sizes = [8, 4], strides = [1, 1]} : vector<8x128xf32> to vector<8x4xf32>
    %668 = tpu.concatenate %666, %667 in 1 : vector<8x4xf32>, vector<8x4xf32> -> vector<8x8xf32>
    %669 = vector.extract_strided_slice %625 {offsets = [0, 76], sizes = [8, 4], strides = [1, 1]} : vector<8x128xf32> to vector<8x4xf32>
    %670 = vector.extract_strided_slice %625 {offsets = [0, 64], sizes = [8, 4], strides = [1, 1]} : vector<8x128xf32> to vector<8x4xf32>
    %671 = tpu.concatenate %669, %670 in 1 : vector<8x4xf32>, vector<8x4xf32> -> vector<8x8xf32>
    %672 = vector.extract_strided_slice %625 {offsets = [0, 92], sizes = [8, 4], strides = [1, 1]} : vector<8x128xf32> to vector<8x4xf32>
    %673 = vector.extract_strided_slice %625 {offsets = [0, 80], sizes = [8, 4], strides = [1, 1]} : vector<8x128xf32> to vector<8x4xf32>
    %674 = tpu.concatenate %672, %673 in 1 : vector<8x4xf32>, vector<8x4xf32> -> vector<8x8xf32>
    %675 = vector.extract_strided_slice %625 {offsets = [0, 108], sizes = [8, 4], strides = [1, 1]} : vector<8x128xf32> to vector<8x4xf32>
    %676 = vector.extract_strided_slice %625 {offsets = [0, 96], sizes = [8, 4], strides = [1, 1]} : vector<8x128xf32> to vector<8x4xf32>
    %677 = tpu.concatenate %675, %676 in 1 : vector<8x4xf32>, vector<8x4xf32> -> vector<8x8xf32>
    %678 = vector.extract_strided_slice %625 {offsets = [0, 124], sizes = [8, 4], strides = [1, 1]} : vector<8x128xf32> to vector<8x4xf32>
    %679 = vector.extract_strided_slice %625 {offsets = [0, 112], sizes = [8, 4], strides = [1, 1]} : vector<8x128xf32> to vector<8x4xf32>
    %680 = tpu.concatenate %678, %679 in 1 : vector<8x4xf32>, vector<8x4xf32> -> vector<8x8xf32>
    %681 = tpu.concatenate %659, %662, %665, %668, %671, %674, %677, %680 in 1 : vector<8x8xf32>, vector<8x8xf32>, vector<8x8xf32>, vector<8x8xf32>, vector<8x8xf32>, vector<8x8xf32>, vector<8x8xf32>, vector<8x8xf32> -> vector<8x64xf32>
    %682 = vector.extract_strided_slice %626 {offsets = [0, 12], sizes = [8, 4], strides = [1, 1]} : vector<8x128xf32> to vector<8x4xf32>
    %683 = vector.extract_strided_slice %626 {offsets = [0, 0], sizes = [8, 4], strides = [1, 1]} : vector<8x128xf32> to vector<8x4xf32>
    %684 = tpu.concatenate %682, %683 in 1 : vector<8x4xf32>, vector<8x4xf32> -> vector<8x8xf32>
    %685 = vector.extract_strided_slice %626 {offsets = [0, 28], sizes = [8, 4], strides = [1, 1]} : vector<8x128xf32> to vector<8x4xf32>
    %686 = vector.extract_strided_slice %626 {offsets = [0, 16], sizes = [8, 4], strides = [1, 1]} : vector<8x128xf32> to vector<8x4xf32>
    %687 = tpu.concatenate %685, %686 in 1 : vector<8x4xf32>, vector<8x4xf32> -> vector<8x8xf32>
    %688 = vector.extract_strided_slice %626 {offsets = [0, 44], sizes = [8, 4], strides = [1, 1]} : vector<8x128xf32> to vector<8x4xf32>
    %689 = vector.extract_strided_slice %626 {offsets = [0, 32], sizes = [8, 4], strides = [1, 1]} : vector<8x128xf32> to vector<8x4xf32>
    %690 = tpu.concatenate %688, %689 in 1 : vector<8x4xf32>, vector<8x4xf32> -> vector<8x8xf32>
    %691 = vector.extract_strided_slice %626 {offsets = [0, 60], sizes = [8, 4], strides = [1, 1]} : vector<8x128xf32> to vector<8x4xf32>
    %692 = vector.extract_strided_slice %626 {offsets = [0, 48], sizes = [8, 4], strides = [1, 1]} : vector<8x128xf32> to vector<8x4xf32>
    %693 = tpu.concatenate %691, %692 in 1 : vector<8x4xf32>, vector<8x4xf32> -> vector<8x8xf32>
    %694 = vector.extract_strided_slice %626 {offsets = [0, 76], sizes = [8, 4], strides = [1, 1]} : vector<8x128xf32> to vector<8x4xf32>
    %695 = vector.extract_strided_slice %626 {offsets = [0, 64], sizes = [8, 4], strides = [1, 1]} : vector<8x128xf32> to vector<8x4xf32>
    %696 = tpu.concatenate %694, %695 in 1 : vector<8x4xf32>, vector<8x4xf32> -> vector<8x8xf32>
    %697 = vector.extract_strided_slice %626 {offsets = [0, 92], sizes = [8, 4], strides = [1, 1]} : vector<8x128xf32> to vector<8x4xf32>
    %698 = vector.extract_strided_slice %626 {offsets = [0, 80], sizes = [8, 4], strides = [1, 1]} : vector<8x128xf32> to vector<8x4xf32>
    %699 = tpu.concatenate %697, %698 in 1 : vector<8x4xf32>, vector<8x4xf32> -> vector<8x8xf32>
    %700 = vector.extract_strided_slice %626 {offsets = [0, 108], sizes = [8, 4], strides = [1, 1]} : vector<8x128xf32> to vector<8x4xf32>
    %701 = vector.extract_strided_slice %626 {offsets = [0, 96], sizes = [8, 4], strides = [1, 1]} : vector<8x128xf32> to vector<8x4xf32>
    %702 = tpu.concatenate %700, %701 in 1 : vector<8x4xf32>, vector<8x4xf32> -> vector<8x8xf32>
    %703 = vector.extract_strided_slice %626 {offsets = [0, 124], sizes = [8, 4], strides = [1, 1]} : vector<8x128xf32> to vector<8x4xf32>
    %704 = vector.extract_strided_slice %626 {offsets = [0, 112], sizes = [8, 4], strides = [1, 1]} : vector<8x128xf32> to vector<8x4xf32>
    %705 = tpu.concatenate %703, %704 in 1 : vector<8x4xf32>, vector<8x4xf32> -> vector<8x8xf32>
    %706 = tpu.concatenate %684, %687, %690, %693, %696, %699, %702, %705 in 1 : vector<8x8xf32>, vector<8x8xf32>, vector<8x8xf32>, vector<8x8xf32>, vector<8x8xf32>, vector<8x8xf32>, vector<8x8xf32>, vector<8x8xf32> -> vector<8x64xf32>
    %707 = vector.extract_strided_slice %627 {offsets = [0, 12], sizes = [8, 4], strides = [1, 1]} : vector<8x128xf32> to vector<8x4xf32>
    %708 = vector.extract_strided_slice %627 {offsets = [0, 0], sizes = [8, 4], strides = [1, 1]} : vector<8x128xf32> to vector<8x4xf32>
    %709 = tpu.concatenate %707, %708 in 1 : vector<8x4xf32>, vector<8x4xf32> -> vector<8x8xf32>
    %710 = vector.extract_strided_slice %627 {offsets = [0, 28], sizes = [8, 4], strides = [1, 1]} : vector<8x128xf32> to vector<8x4xf32>
    %711 = vector.extract_strided_slice %627 {offsets = [0, 16], sizes = [8, 4], strides = [1, 1]} : vector<8x128xf32> to vector<8x4xf32>
    %712 = tpu.concatenate %710, %711 in 1 : vector<8x4xf32>, vector<8x4xf32> -> vector<8x8xf32>
    %713 = vector.extract_strided_slice %627 {offsets = [0, 44], sizes = [8, 4], strides = [1, 1]} : vector<8x128xf32> to vector<8x4xf32>
    %714 = vector.extract_strided_slice %627 {offsets = [0, 32], sizes = [8, 4], strides = [1, 1]} : vector<8x128xf32> to vector<8x4xf32>
    %715 = tpu.concatenate %713, %714 in 1 : vector<8x4xf32>, vector<8x4xf32> -> vector<8x8xf32>
    %716 = vector.extract_strided_slice %627 {offsets = [0, 60], sizes = [8, 4], strides = [1, 1]} : vector<8x128xf32> to vector<8x4xf32>
    %717 = vector.extract_strided_slice %627 {offsets = [0, 48], sizes = [8, 4], strides = [1, 1]} : vector<8x128xf32> to vector<8x4xf32>
    %718 = tpu.concatenate %716, %717 in 1 : vector<8x4xf32>, vector<8x4xf32> -> vector<8x8xf32>
    %719 = vector.extract_strided_slice %627 {offsets = [0, 76], sizes = [8, 4], strides = [1, 1]} : vector<8x128xf32> to vector<8x4xf32>
    %720 = vector.extract_strided_slice %627 {offsets = [0, 64], sizes = [8, 4], strides = [1, 1]} : vector<8x128xf32> to vector<8x4xf32>
    %721 = tpu.concatenate %719, %720 in 1 : vector<8x4xf32>, vector<8x4xf32> -> vector<8x8xf32>
    %722 = vector.extract_strided_slice %627 {offsets = [0, 92], sizes = [8, 4], strides = [1, 1]} : vector<8x128xf32> to vector<8x4xf32>
    %723 = vector.extract_strided_slice %627 {offsets = [0, 80], sizes = [8, 4], strides = [1, 1]} : vector<8x128xf32> to vector<8x4xf32>
    %724 = tpu.concatenate %722, %723 in 1 : vector<8x4xf32>, vector<8x4xf32> -> vector<8x8xf32>
    %725 = vector.extract_strided_slice %627 {offsets = [0, 108], sizes = [8, 4], strides = [1, 1]} : vector<8x128xf32> to vector<8x4xf32>
    %726 = vector.extract_strided_slice %627 {offsets = [0, 96], sizes = [8, 4], strides = [1, 1]} : vector<8x128xf32> to vector<8x4xf32>
    %727 = tpu.concatenate %725, %726 in 1 : vector<8x4xf32>, vector<8x4xf32> -> vector<8x8xf32>
    %728 = vector.extract_strided_slice %627 {offsets = [0, 124], sizes = [8, 4], strides = [1, 1]} : vector<8x128xf32> to vector<8x4xf32>
    %729 = vector.extract_strided_slice %627 {offsets = [0, 112], sizes = [8, 4], strides = [1, 1]} : vector<8x128xf32> to vector<8x4xf32>
    %730 = tpu.concatenate %728, %729 in 1 : vector<8x4xf32>, vector<8x4xf32> -> vector<8x8xf32>
    %731 = tpu.concatenate %709, %712, %715, %718, %721, %724, %727, %730 in 1 : vector<8x8xf32>, vector<8x8xf32>, vector<8x8xf32>, vector<8x8xf32>, vector<8x8xf32>, vector<8x8xf32>, vector<8x8xf32>, vector<8x8xf32> -> vector<8x64xf32>
    %732 = vector.extract_strided_slice %628 {offsets = [0, 12], sizes = [8, 4], strides = [1, 1]} : vector<8x128xf32> to vector<8x4xf32>
    %733 = vector.extract_strided_slice %628 {offsets = [0, 0], sizes = [8, 4], strides = [1, 1]} : vector<8x128xf32> to vector<8x4xf32>
    %734 = tpu.concatenate %732, %733 in 1 : vector<8x4xf32>, vector<8x4xf32> -> vector<8x8xf32>
    %735 = vector.extract_strided_slice %628 {offsets = [0, 28], sizes = [8, 4], strides = [1, 1]} : vector<8x128xf32> to vector<8x4xf32>
    %736 = vector.extract_strided_slice %628 {offsets = [0, 16], sizes = [8, 4], strides = [1, 1]} : vector<8x128xf32> to vector<8x4xf32>
    %737 = tpu.concatenate %735, %736 in 1 : vector<8x4xf32>, vector<8x4xf32> -> vector<8x8xf32>
    %738 = vector.extract_strided_slice %628 {offsets = [0, 44], sizes = [8, 4], strides = [1, 1]} : vector<8x128xf32> to vector<8x4xf32>
    %739 = vector.extract_strided_slice %628 {offsets = [0, 32], sizes = [8, 4], strides = [1, 1]} : vector<8x128xf32> to vector<8x4xf32>
    %740 = tpu.concatenate %738, %739 in 1 : vector<8x4xf32>, vector<8x4xf32> -> vector<8x8xf32>
    %741 = vector.extract_strided_slice %628 {offsets = [0, 60], sizes = [8, 4], strides = [1, 1]} : vector<8x128xf32> to vector<8x4xf32>
    %742 = vector.extract_strided_slice %628 {offsets = [0, 48], sizes = [8, 4], strides = [1, 1]} : vector<8x128xf32> to vector<8x4xf32>
    %743 = tpu.concatenate %741, %742 in 1 : vector<8x4xf32>, vector<8x4xf32> -> vector<8x8xf32>
    %744 = vector.extract_strided_slice %628 {offsets = [0, 76], sizes = [8, 4], strides = [1, 1]} : vector<8x128xf32> to vector<8x4xf32>
    %745 = vector.extract_strided_slice %628 {offsets = [0, 64], sizes = [8, 4], strides = [1, 1]} : vector<8x128xf32> to vector<8x4xf32>
    %746 = tpu.concatenate %744, %745 in 1 : vector<8x4xf32>, vector<8x4xf32> -> vector<8x8xf32>
    %747 = vector.extract_strided_slice %628 {offsets = [0, 92], sizes = [8, 4], strides = [1, 1]} : vector<8x128xf32> to vector<8x4xf32>
    %748 = vector.extract_strided_slice %628 {offsets = [0, 80], sizes = [8, 4], strides = [1, 1]} : vector<8x128xf32> to vector<8x4xf32>
    %749 = tpu.concatenate %747, %748 in 1 : vector<8x4xf32>, vector<8x4xf32> -> vector<8x8xf32>
    %750 = vector.extract_strided_slice %628 {offsets = [0, 108], sizes = [8, 4], strides = [1, 1]} : vector<8x128xf32> to vector<8x4xf32>
    %751 = vector.extract_strided_slice %628 {offsets = [0, 96], sizes = [8, 4], strides = [1, 1]} : vector<8x128xf32> to vector<8x4xf32>
    %752 = tpu.concatenate %750, %751 in 1 : vector<8x4xf32>, vector<8x4xf32> -> vector<8x8xf32>
    %753 = vector.extract_strided_slice %628 {offsets = [0, 124], sizes = [8, 4], strides = [1, 1]} : vector<8x128xf32> to vector<8x4xf32>
    %754 = vector.extract_strided_slice %628 {offsets = [0, 112], sizes = [8, 4], strides = [1, 1]} : vector<8x128xf32> to vector<8x4xf32>
    %755 = tpu.concatenate %753, %754 in 1 : vector<8x4xf32>, vector<8x4xf32> -> vector<8x8xf32>
    %756 = tpu.concatenate %734, %737, %740, %743, %746, %749, %752, %755 in 1 : vector<8x8xf32>, vector<8x8xf32>, vector<8x8xf32>, vector<8x8xf32>, vector<8x8xf32>, vector<8x8xf32>, vector<8x8xf32>, vector<8x8xf32> -> vector<8x64xf32>
    %757 = vector.extract_strided_slice %629 {offsets = [0, 12], sizes = [8, 4], strides = [1, 1]} : vector<8x128xf32> to vector<8x4xf32>
    %758 = vector.extract_strided_slice %629 {offsets = [0, 0], sizes = [8, 4], strides = [1, 1]} : vector<8x128xf32> to vector<8x4xf32>
    %759 = tpu.concatenate %757, %758 in 1 : vector<8x4xf32>, vector<8x4xf32> -> vector<8x8xf32>
    %760 = vector.extract_strided_slice %629 {offsets = [0, 28], sizes = [8, 4], strides = [1, 1]} : vector<8x128xf32> to vector<8x4xf32>
    %761 = vector.extract_strided_slice %629 {offsets = [0, 16], sizes = [8, 4], strides = [1, 1]} : vector<8x128xf32> to vector<8x4xf32>
    %762 = tpu.concatenate %760, %761 in 1 : vector<8x4xf32>, vector<8x4xf32> -> vector<8x8xf32>
    %763 = vector.extract_strided_slice %629 {offsets = [0, 44], sizes = [8, 4], strides = [1, 1]} : vector<8x128xf32> to vector<8x4xf32>
    %764 = vector.extract_strided_slice %629 {offsets = [0, 32], sizes = [8, 4], strides = [1, 1]} : vector<8x128xf32> to vector<8x4xf32>
    %765 = tpu.concatenate %763, %764 in 1 : vector<8x4xf32>, vector<8x4xf32> -> vector<8x8xf32>
    %766 = vector.extract_strided_slice %629 {offsets = [0, 60], sizes = [8, 4], strides = [1, 1]} : vector<8x128xf32> to vector<8x4xf32>
    %767 = vector.extract_strided_slice %629 {offsets = [0, 48], sizes = [8, 4], strides = [1, 1]} : vector<8x128xf32> to vector<8x4xf32>
    %768 = tpu.concatenate %766, %767 in 1 : vector<8x4xf32>, vector<8x4xf32> -> vector<8x8xf32>
    %769 = vector.extract_strided_slice %629 {offsets = [0, 76], sizes = [8, 4], strides = [1, 1]} : vector<8x128xf32> to vector<8x4xf32>
    %770 = vector.extract_strided_slice %629 {offsets = [0, 64], sizes = [8, 4], strides = [1, 1]} : vector<8x128xf32> to vector<8x4xf32>
    %771 = tpu.concatenate %769, %770 in 1 : vector<8x4xf32>, vector<8x4xf32> -> vector<8x8xf32>
    %772 = vector.extract_strided_slice %629 {offsets = [0, 92], sizes = [8, 4], strides = [1, 1]} : vector<8x128xf32> to vector<8x4xf32>
    %773 = vector.extract_strided_slice %629 {offsets = [0, 80], sizes = [8, 4], strides = [1, 1]} : vector<8x128xf32> to vector<8x4xf32>
    %774 = tpu.concatenate %772, %773 in 1 : vector<8x4xf32>, vector<8x4xf32> -> vector<8x8xf32>
    %775 = vector.extract_strided_slice %629 {offsets = [0, 108], sizes = [8, 4], strides = [1, 1]} : vector<8x128xf32> to vector<8x4xf32>
    %776 = vector.extract_strided_slice %629 {offsets = [0, 96], sizes = [8, 4], strides = [1, 1]} : vector<8x128xf32> to vector<8x4xf32>
    %777 = tpu.concatenate %775, %776 in 1 : vector<8x4xf32>, vector<8x4xf32> -> vector<8x8xf32>
    %778 = vector.extract_strided_slice %629 {offsets = [0, 124], sizes = [8, 4], strides = [1, 1]} : vector<8x128xf32> to vector<8x4xf32>
    %779 = vector.extract_strided_slice %629 {offsets = [0, 112], sizes = [8, 4], strides = [1, 1]} : vector<8x128xf32> to vector<8x4xf32>
    %780 = tpu.concatenate %778, %779 in 1 : vector<8x4xf32>, vector<8x4xf32> -> vector<8x8xf32>
    %781 = tpu.concatenate %759, %762, %765, %768, %771, %774, %777, %780 in 1 : vector<8x8xf32>, vector<8x8xf32>, vector<8x8xf32>, vector<8x8xf32>, vector<8x8xf32>, vector<8x8xf32>, vector<8x8xf32>, vector<8x8xf32> -> vector<8x64xf32>
    %782 = vector.extract_strided_slice %630 {offsets = [0, 12], sizes = [8, 4], strides = [1, 1]} : vector<8x128xf32> to vector<8x4xf32>
    %783 = vector.extract_strided_slice %630 {offsets = [0, 0], sizes = [8, 4], strides = [1, 1]} : vector<8x128xf32> to vector<8x4xf32>
    %784 = tpu.concatenate %782, %783 in 1 : vector<8x4xf32>, vector<8x4xf32> -> vector<8x8xf32>
    %785 = vector.extract_strided_slice %630 {offsets = [0, 28], sizes = [8, 4], strides = [1, 1]} : vector<8x128xf32> to vector<8x4xf32>
    %786 = vector.extract_strided_slice %630 {offsets = [0, 16], sizes = [8, 4], strides = [1, 1]} : vector<8x128xf32> to vector<8x4xf32>
    %787 = tpu.concatenate %785, %786 in 1 : vector<8x4xf32>, vector<8x4xf32> -> vector<8x8xf32>
    %788 = vector.extract_strided_slice %630 {offsets = [0, 44], sizes = [8, 4], strides = [1, 1]} : vector<8x128xf32> to vector<8x4xf32>
    %789 = vector.extract_strided_slice %630 {offsets = [0, 32], sizes = [8, 4], strides = [1, 1]} : vector<8x128xf32> to vector<8x4xf32>
    %790 = tpu.concatenate %788, %789 in 1 : vector<8x4xf32>, vector<8x4xf32> -> vector<8x8xf32>
    %791 = vector.extract_strided_slice %630 {offsets = [0, 60], sizes = [8, 4], strides = [1, 1]} : vector<8x128xf32> to vector<8x4xf32>
    %792 = vector.extract_strided_slice %630 {offsets = [0, 48], sizes = [8, 4], strides = [1, 1]} : vector<8x128xf32> to vector<8x4xf32>
    %793 = tpu.concatenate %791, %792 in 1 : vector<8x4xf32>, vector<8x4xf32> -> vector<8x8xf32>
    %794 = vector.extract_strided_slice %630 {offsets = [0, 76], sizes = [8, 4], strides = [1, 1]} : vector<8x128xf32> to vector<8x4xf32>
    %795 = vector.extract_strided_slice %630 {offsets = [0, 64], sizes = [8, 4], strides = [1, 1]} : vector<8x128xf32> to vector<8x4xf32>
    %796 = tpu.concatenate %794, %795 in 1 : vector<8x4xf32>, vector<8x4xf32> -> vector<8x8xf32>
    %797 = vector.extract_strided_slice %630 {offsets = [0, 92], sizes = [8, 4], strides = [1, 1]} : vector<8x128xf32> to vector<8x4xf32>
    %798 = vector.extract_strided_slice %630 {offsets = [0, 80], sizes = [8, 4], strides = [1, 1]} : vector<8x128xf32> to vector<8x4xf32>
    %799 = tpu.concatenate %797, %798 in 1 : vector<8x4xf32>, vector<8x4xf32> -> vector<8x8xf32>
    %800 = vector.extract_strided_slice %630 {offsets = [0, 108], sizes = [8, 4], strides = [1, 1]} : vector<8x128xf32> to vector<8x4xf32>
    %801 = vector.extract_strided_slice %630 {offsets = [0, 96], sizes = [8, 4], strides = [1, 1]} : vector<8x128xf32> to vector<8x4xf32>
    %802 = tpu.concatenate %800, %801 in 1 : vector<8x4xf32>, vector<8x4xf32> -> vector<8x8xf32>
    %803 = vector.extract_strided_slice %630 {offsets = [0, 124], sizes = [8, 4], strides = [1, 1]} : vector<8x128xf32> to vector<8x4xf32>
    %804 = vector.extract_strided_slice %630 {offsets = [0, 112], sizes = [8, 4], strides = [1, 1]} : vector<8x128xf32> to vector<8x4xf32>
    %805 = tpu.concatenate %803, %804 in 1 : vector<8x4xf32>, vector<8x4xf32> -> vector<8x8xf32>
    %806 = tpu.concatenate %784, %787, %790, %793, %796, %799, %802, %805 in 1 : vector<8x8xf32>, vector<8x8xf32>, vector<8x8xf32>, vector<8x8xf32>, vector<8x8xf32>, vector<8x8xf32>, vector<8x8xf32>, vector<8x8xf32> -> vector<8x64xf32>
    %807 = vector.extract_strided_slice %631 {offsets = [0, 12], sizes = [8, 4], strides = [1, 1]} : vector<8x128xf32> to vector<8x4xf32>
    %808 = vector.extract_strided_slice %631 {offsets = [0, 0], sizes = [8, 4], strides = [1, 1]} : vector<8x128xf32> to vector<8x4xf32>
    %809 = tpu.concatenate %807, %808 in 1 : vector<8x4xf32>, vector<8x4xf32> -> vector<8x8xf32>
    %810 = vector.extract_strided_slice %631 {offsets = [0, 28], sizes = [8, 4], strides = [1, 1]} : vector<8x128xf32> to vector<8x4xf32>
    %811 = vector.extract_strided_slice %631 {offsets = [0, 16], sizes = [8, 4], strides = [1, 1]} : vector<8x128xf32> to vector<8x4xf32>
    %812 = tpu.concatenate %810, %811 in 1 : vector<8x4xf32>, vector<8x4xf32> -> vector<8x8xf32>
    %813 = vector.extract_strided_slice %631 {offsets = [0, 44], sizes = [8, 4], strides = [1, 1]} : vector<8x128xf32> to vector<8x4xf32>
    %814 = vector.extract_strided_slice %631 {offsets = [0, 32], sizes = [8, 4], strides = [1, 1]} : vector<8x128xf32> to vector<8x4xf32>
    %815 = tpu.concatenate %813, %814 in 1 : vector<8x4xf32>, vector<8x4xf32> -> vector<8x8xf32>
    %816 = vector.extract_strided_slice %631 {offsets = [0, 60], sizes = [8, 4], strides = [1, 1]} : vector<8x128xf32> to vector<8x4xf32>
    %817 = vector.extract_strided_slice %631 {offsets = [0, 48], sizes = [8, 4], strides = [1, 1]} : vector<8x128xf32> to vector<8x4xf32>
    %818 = tpu.concatenate %816, %817 in 1 : vector<8x4xf32>, vector<8x4xf32> -> vector<8x8xf32>
    %819 = vector.extract_strided_slice %631 {offsets = [0, 76], sizes = [8, 4], strides = [1, 1]} : vector<8x128xf32> to vector<8x4xf32>
    %820 = vector.extract_strided_slice %631 {offsets = [0, 64], sizes = [8, 4], strides = [1, 1]} : vector<8x128xf32> to vector<8x4xf32>
    %821 = tpu.concatenate %819, %820 in 1 : vector<8x4xf32>, vector<8x4xf32> -> vector<8x8xf32>
    %822 = vector.extract_strided_slice %631 {offsets = [0, 92], sizes = [8, 4], strides = [1, 1]} : vector<8x128xf32> to vector<8x4xf32>
    %823 = vector.extract_strided_slice %631 {offsets = [0, 80], sizes = [8, 4], strides = [1, 1]} : vector<8x128xf32> to vector<8x4xf32>
    %824 = tpu.concatenate %822, %823 in 1 : vector<8x4xf32>, vector<8x4xf32> -> vector<8x8xf32>
    %825 = vector.extract_strided_slice %631 {offsets = [0, 108], sizes = [8, 4], strides = [1, 1]} : vector<8x128xf32> to vector<8x4xf32>
    %826 = vector.extract_strided_slice %631 {offsets = [0, 96], sizes = [8, 4], strides = [1, 1]} : vector<8x128xf32> to vector<8x4xf32>
    %827 = tpu.concatenate %825, %826 in 1 : vector<8x4xf32>, vector<8x4xf32> -> vector<8x8xf32>
    %828 = vector.extract_strided_slice %631 {offsets = [0, 124], sizes = [8, 4], strides = [1, 1]} : vector<8x128xf32> to vector<8x4xf32>
    %829 = vector.extract_strided_slice %631 {offsets = [0, 112], sizes = [8, 4], strides = [1, 1]} : vector<8x128xf32> to vector<8x4xf32>
    %830 = tpu.concatenate %828, %829 in 1 : vector<8x4xf32>, vector<8x4xf32> -> vector<8x8xf32>
    %831 = tpu.concatenate %809, %812, %815, %818, %821, %824, %827, %830 in 1 : vector<8x8xf32>, vector<8x8xf32>, vector<8x8xf32>, vector<8x8xf32>, vector<8x8xf32>, vector<8x8xf32>, vector<8x8xf32>, vector<8x8xf32> -> vector<8x64xf32>
    %832 = tpu.concatenate %656, %681, %706, %731, %756, %781, %806, %831 in 1 : vector<8x64xf32>, vector<8x64xf32>, vector<8x64xf32>, vector<8x64xf32>, vector<8x64xf32>, vector<8x64xf32>, vector<8x64xf32>, vector<8x64xf32> -> vector<8x512xf32>
    %c1_65 = arith.constant 1 : index
    %c0_66 = arith.constant 0 : index
    %c1024_67 = arith.constant 1024 : index
    %833 = vector.load %arg2[%c1_65, %c0_66, %c1024_67] : memref<2x8x2048xf32, #tpu.memory_space<vmem>>, vector<1x8x512xf32>
    %834 = vector.shape_cast %833 : vector<1x8x512xf32> to vector<8x512xf32>
    %835 = vector.shape_cast %832 : vector<8x512xf32> to vector<1x8x512xf32>
    tpu.vector_store %arg2[%c1_65, %c0_66, %c1024_67], %835 {strides = array<i32>} : memref<2x8x2048xf32, #tpu.memory_space<vmem>>, vector<1x8x512xf32>,
    %836 = vector.extract_strided_slice %624 {offsets = [0, 4], sizes = [8, 8], strides = [1, 1]} : vector<8x128xf32> to vector<8x8xf32>
    %837 = vector.extract_strided_slice %624 {offsets = [0, 20], sizes = [8, 8], strides = [1, 1]} : vector<8x128xf32> to vector<8x8xf32>
    %838 = vector.extract_strided_slice %624 {offsets = [0, 36], sizes = [8, 8], strides = [1, 1]} : vector<8x128xf32> to vector<8x8xf32>
    %839 = vector.extract_strided_slice %624 {offsets = [0, 52], sizes = [8, 8], strides = [1, 1]} : vector<8x128xf32> to vector<8x8xf32>
    %840 = vector.extract_strided_slice %624 {offsets = [0, 68], sizes = [8, 8], strides = [1, 1]} : vector<8x128xf32> to vector<8x8xf32>
    %841 = vector.extract_strided_slice %624 {offsets = [0, 84], sizes = [8, 8], strides = [1, 1]} : vector<8x128xf32> to vector<8x8xf32>
    %842 = vector.extract_strided_slice %624 {offsets = [0, 100], sizes = [8, 8], strides = [1, 1]} : vector<8x128xf32> to vector<8x8xf32>
    %843 = vector.extract_strided_slice %624 {offsets = [0, 116], sizes = [8, 8], strides = [1, 1]} : vector<8x128xf32> to vector<8x8xf32>
    %844 = tpu.concatenate %836, %837, %838, %839, %840, %841, %842, %843 in 1 : vector<8x8xf32>, vector<8x8xf32>, vector<8x8xf32>, vector<8x8xf32>, vector<8x8xf32>, vector<8x8xf32>, vector<8x8xf32>, vector<8x8xf32> -> vector<8x64xf32>
    %845 = vector.extract_strided_slice %625 {offsets = [0, 4], sizes = [8, 8], strides = [1, 1]} : vector<8x128xf32> to vector<8x8xf32>
    %846 = vector.extract_strided_slice %625 {offsets = [0, 20], sizes = [8, 8], strides = [1, 1]} : vector<8x128xf32> to vector<8x8xf32>
    %847 = vector.extract_strided_slice %625 {offsets = [0, 36], sizes = [8, 8], strides = [1, 1]} : vector<8x128xf32> to vector<8x8xf32>
    %848 = vector.extract_strided_slice %625 {offsets = [0, 52], sizes = [8, 8], strides = [1, 1]} : vector<8x128xf32> to vector<8x8xf32>
    %849 = vector.extract_strided_slice %625 {offsets = [0, 68], sizes = [8, 8], strides = [1, 1]} : vector<8x128xf32> to vector<8x8xf32>
    %850 = vector.extract_strided_slice %625 {offsets = [0, 84], sizes = [8, 8], strides = [1, 1]} : vector<8x128xf32> to vector<8x8xf32>
    %851 = vector.extract_strided_slice %625 {offsets = [0, 100], sizes = [8, 8], strides = [1, 1]} : vector<8x128xf32> to vector<8x8xf32>
    %852 = vector.extract_strided_slice %625 {offsets = [0, 116], sizes = [8, 8], strides = [1, 1]} : vector<8x128xf32> to vector<8x8xf32>
    %853 = tpu.concatenate %845, %846, %847, %848, %849, %850, %851, %852 in 1 : vector<8x8xf32>, vector<8x8xf32>, vector<8x8xf32>, vector<8x8xf32>, vector<8x8xf32>, vector<8x8xf32>, vector<8x8xf32>, vector<8x8xf32> -> vector<8x64xf32>
    %854 = vector.extract_strided_slice %626 {offsets = [0, 4], sizes = [8, 8], strides = [1, 1]} : vector<8x128xf32> to vector<8x8xf32>
    %855 = vector.extract_strided_slice %626 {offsets = [0, 20], sizes = [8, 8], strides = [1, 1]} : vector<8x128xf32> to vector<8x8xf32>
    %856 = vector.extract_strided_slice %626 {offsets = [0, 36], sizes = [8, 8], strides = [1, 1]} : vector<8x128xf32> to vector<8x8xf32>
    %857 = vector.extract_strided_slice %626 {offsets = [0, 52], sizes = [8, 8], strides = [1, 1]} : vector<8x128xf32> to vector<8x8xf32>
    %858 = vector.extract_strided_slice %626 {offsets = [0, 68], sizes = [8, 8], strides = [1, 1]} : vector<8x128xf32> to vector<8x8xf32>
    %859 = vector.extract_strided_slice %626 {offsets = [0, 84], sizes = [8, 8], strides = [1, 1]} : vector<8x128xf32> to vector<8x8xf32>
    %860 = vector.extract_strided_slice %626 {offsets = [0, 100], sizes = [8, 8], strides = [1, 1]} : vector<8x128xf32> to vector<8x8xf32>
    %861 = vector.extract_strided_slice %626 {offsets = [0, 116], sizes = [8, 8], strides = [1, 1]} : vector<8x128xf32> to vector<8x8xf32>
    %862 = tpu.concatenate %854, %855, %856, %857, %858, %859, %860, %861 in 1 : vector<8x8xf32>, vector<8x8xf32>, vector<8x8xf32>, vector<8x8xf32>, vector<8x8xf32>, vector<8x8xf32>, vector<8x8xf32>, vector<8x8xf32> -> vector<8x64xf32>
    %863 = vector.extract_strided_slice %627 {offsets = [0, 4], sizes = [8, 8], strides = [1, 1]} : vector<8x128xf32> to vector<8x8xf32>
    %864 = vector.extract_strided_slice %627 {offsets = [0, 20], sizes = [8, 8], strides = [1, 1]} : vector<8x128xf32> to vector<8x8xf32>
    %865 = vector.extract_strided_slice %627 {offsets = [0, 36], sizes = [8, 8], strides = [1, 1]} : vector<8x128xf32> to vector<8x8xf32>
    %866 = vector.extract_strided_slice %627 {offsets = [0, 52], sizes = [8, 8], strides = [1, 1]} : vector<8x128xf32> to vector<8x8xf32>
    %867 = vector.extract_strided_slice %627 {offsets = [0, 68], sizes = [8, 8], strides = [1, 1]} : vector<8x128xf32> to vector<8x8xf32>
    %868 = vector.extract_strided_slice %627 {offsets = [0, 84], sizes = [8, 8], strides = [1, 1]} : vector<8x128xf32> to vector<8x8xf32>
    %869 = vector.extract_strided_slice %627 {offsets = [0, 100], sizes = [8, 8], strides = [1, 1]} : vector<8x128xf32> to vector<8x8xf32>
    %870 = vector.extract_strided_slice %627 {offsets = [0, 116], sizes = [8, 8], strides = [1, 1]} : vector<8x128xf32> to vector<8x8xf32>
    %871 = tpu.concatenate %863, %864, %865, %866, %867, %868, %869, %870 in 1 : vector<8x8xf32>, vector<8x8xf32>, vector<8x8xf32>, vector<8x8xf32>, vector<8x8xf32>, vector<8x8xf32>, vector<8x8xf32>, vector<8x8xf32> -> vector<8x64xf32>
    %872 = vector.extract_strided_slice %628 {offsets = [0, 4], sizes = [8, 8], strides = [1, 1]} : vector<8x128xf32> to vector<8x8xf32>
    %873 = vector.extract_strided_slice %628 {offsets = [0, 20], sizes = [8, 8], strides = [1, 1]} : vector<8x128xf32> to vector<8x8xf32>
    %874 = vector.extract_strided_slice %628 {offsets = [0, 36], sizes = [8, 8], strides = [1, 1]} : vector<8x128xf32> to vector<8x8xf32>
    %875 = vector.extract_strided_slice %628 {offsets = [0, 52], sizes = [8, 8], strides = [1, 1]} : vector<8x128xf32> to vector<8x8xf32>
    %876 = vector.extract_strided_slice %628 {offsets = [0, 68], sizes = [8, 8], strides = [1, 1]} : vector<8x128xf32> to vector<8x8xf32>
    %877 = vector.extract_strided_slice %628 {offsets = [0, 84], sizes = [8, 8], strides = [1, 1]} : vector<8x128xf32> to vector<8x8xf32>
    %878 = vector.extract_strided_slice %628 {offsets = [0, 100], sizes = [8, 8], strides = [1, 1]} : vector<8x128xf32> to vector<8x8xf32>
    %879 = vector.extract_strided_slice %628 {offsets = [0, 116], sizes = [8, 8], strides = [1, 1]} : vector<8x128xf32> to vector<8x8xf32>
    %880 = tpu.concatenate %872, %873, %874, %875, %876, %877, %878, %879 in 1 : vector<8x8xf32>, vector<8x8xf32>, vector<8x8xf32>, vector<8x8xf32>, vector<8x8xf32>, vector<8x8xf32>, vector<8x8xf32>, vector<8x8xf32> -> vector<8x64xf32>
    %881 = vector.extract_strided_slice %629 {offsets = [0, 4], sizes = [8, 8], strides = [1, 1]} : vector<8x128xf32> to vector<8x8xf32>
    %882 = vector.extract_strided_slice %629 {offsets = [0, 20], sizes = [8, 8], strides = [1, 1]} : vector<8x128xf32> to vector<8x8xf32>
    %883 = vector.extract_strided_slice %629 {offsets = [0, 36], sizes = [8, 8], strides = [1, 1]} : vector<8x128xf32> to vector<8x8xf32>
    %884 = vector.extract_strided_slice %629 {offsets = [0, 52], sizes = [8, 8], strides = [1, 1]} : vector<8x128xf32> to vector<8x8xf32>
    %885 = vector.extract_strided_slice %629 {offsets = [0, 68], sizes = [8, 8], strides = [1, 1]} : vector<8x128xf32> to vector<8x8xf32>
    %886 = vector.extract_strided_slice %629 {offsets = [0, 84], sizes = [8, 8], strides = [1, 1]} : vector<8x128xf32> to vector<8x8xf32>
    %887 = vector.extract_strided_slice %629 {offsets = [0, 100], sizes = [8, 8], strides = [1, 1]} : vector<8x128xf32> to vector<8x8xf32>
    %888 = vector.extract_strided_slice %629 {offsets = [0, 116], sizes = [8, 8], strides = [1, 1]} : vector<8x128xf32> to vector<8x8xf32>
    %889 = tpu.concatenate %881, %882, %883, %884, %885, %886, %887, %888 in 1 : vector<8x8xf32>, vector<8x8xf32>, vector<8x8xf32>, vector<8x8xf32>, vector<8x8xf32>, vector<8x8xf32>, vector<8x8xf32>, vector<8x8xf32> -> vector<8x64xf32>
    %890 = vector.extract_strided_slice %630 {offsets = [0, 4], sizes = [8, 8], strides = [1, 1]} : vector<8x128xf32> to vector<8x8xf32>
    %891 = vector.extract_strided_slice %630 {offsets = [0, 20], sizes = [8, 8], strides = [1, 1]} : vector<8x128xf32> to vector<8x8xf32>
    %892 = vector.extract_strided_slice %630 {offsets = [0, 36], sizes = [8, 8], strides = [1, 1]} : vector<8x128xf32> to vector<8x8xf32>
    %893 = vector.extract_strided_slice %630 {offsets = [0, 52], sizes = [8, 8], strides = [1, 1]} : vector<8x128xf32> to vector<8x8xf32>
    %894 = vector.extract_strided_slice %630 {offsets = [0, 68], sizes = [8, 8], strides = [1, 1]} : vector<8x128xf32> to vector<8x8xf32>
    %895 = vector.extract_strided_slice %630 {offsets = [0, 84], sizes = [8, 8], strides = [1, 1]} : vector<8x128xf32> to vector<8x8xf32>
    %896 = vector.extract_strided_slice %630 {offsets = [0, 100], sizes = [8, 8], strides = [1, 1]} : vector<8x128xf32> to vector<8x8xf32>
    %897 = vector.extract_strided_slice %630 {offsets = [0, 116], sizes = [8, 8], strides = [1, 1]} : vector<8x128xf32> to vector<8x8xf32>
    %898 = tpu.concatenate %890, %891, %892, %893, %894, %895, %896, %897 in 1 : vector<8x8xf32>, vector<8x8xf32>, vector<8x8xf32>, vector<8x8xf32>, vector<8x8xf32>, vector<8x8xf32>, vector<8x8xf32>, vector<8x8xf32> -> vector<8x64xf32>
    %899 = vector.extract_strided_slice %631 {offsets = [0, 4], sizes = [8, 8], strides = [1, 1]} : vector<8x128xf32> to vector<8x8xf32>
    %900 = vector.extract_strided_slice %631 {offsets = [0, 20], sizes = [8, 8], strides = [1, 1]} : vector<8x128xf32> to vector<8x8xf32>
    %901 = vector.extract_strided_slice %631 {offsets = [0, 36], sizes = [8, 8], strides = [1, 1]} : vector<8x128xf32> to vector<8x8xf32>
    %902 = vector.extract_strided_slice %631 {offsets = [0, 52], sizes = [8, 8], strides = [1, 1]} : vector<8x128xf32> to vector<8x8xf32>
    %903 = vector.extract_strided_slice %631 {offsets = [0, 68], sizes = [8, 8], strides = [1, 1]} : vector<8x128xf32> to vector<8x8xf32>
    %904 = vector.extract_strided_slice %631 {offsets = [0, 84], sizes = [8, 8], strides = [1, 1]} : vector<8x128xf32> to vector<8x8xf32>
    %905 = vector.extract_strided_slice %631 {offsets = [0, 100], sizes = [8, 8], strides = [1, 1]} : vector<8x128xf32> to vector<8x8xf32>
    %906 = vector.extract_strided_slice %631 {offsets = [0, 116], sizes = [8, 8], strides = [1, 1]} : vector<8x128xf32> to vector<8x8xf32>
    %907 = tpu.concatenate %899, %900, %901, %902, %903, %904, %905, %906 in 1 : vector<8x8xf32>, vector<8x8xf32>, vector<8x8xf32>, vector<8x8xf32>, vector<8x8xf32>, vector<8x8xf32>, vector<8x8xf32>, vector<8x8xf32> -> vector<8x64xf32>
    %908 = tpu.concatenate %844, %853, %862, %871, %880, %889, %898, %907 in 1 : vector<8x64xf32>, vector<8x64xf32>, vector<8x64xf32>, vector<8x64xf32>, vector<8x64xf32>, vector<8x64xf32>, vector<8x64xf32>, vector<8x64xf32> -> vector<8x512xf32>
    %c1_68 = arith.constant 1 : index
    %c0_69 = arith.constant 0 : index
    %c1536_70 = arith.constant 1536 : index
    %909 = vector.load %arg2[%c1_68, %c0_69, %c1536_70] : memref<2x8x2048xf32, #tpu.memory_space<vmem>>, vector<1x8x512xf32>
    %910 = vector.shape_cast %909 : vector<1x8x512xf32> to vector<8x512xf32>
    %911 = vector.shape_cast %908 : vector<8x512xf32> to vector<1x8x512xf32>
    tpu.vector_store %arg2[%c1_68, %c0_69, %c1536_70], %911 {strides = array<i32>} : memref<2x8x2048xf32, #tpu.memory_space<vmem>>, vector<1x8x512xf32>,
    return
  }
  func.func @transform_0(%arg0: i32) -> (i32, i32) {
    %c0_i32 = arith.constant 0 : i32
    %c0_i32_0 = arith.constant 0 : i32
    return %arg0, %c0_i32 : i32, i32
  }
  func.func @transform_1(%arg0: i32) -> (i32, i32, i32) {
    %c0_i32 = arith.constant 0 : i32
    %c0_i32_0 = arith.constant 0 : i32
    %c0_i32_1 = arith.constant 0 : i32
    return %c0_i32, %arg0, %c0_i32_0 : i32, i32, i32
  }
}

</mosaic_0001>

<llo_original>
// kernel: tpu_custom_call.1
$region0: #{tpu_custom_call.1}
  #allocation0 [shape = 'u32[]', space=smem, size = 0x4, offset = 0x4, fixed_abs, tag = 'smem constant byte address 0x4 - core index']
  #allocation1 [shape = 'u32[144,128]{1,0:T(1,128)}', space=vmem, size = 0x12000, scoped, tag = 'internal scratch']
  %s0 = inlined_call_operand.hbm [shape: f32[16,2048], index: 0, kind: input, shape index: {}]
  %s1 = inlined_call_operand.hbm [shape: f32[2,16,2048], index: 1, kind: output, shape index: {}]
  %s2 = sld [smem:[#allocation0]]
  $region41: #{tpu_custom_call.1} parent=0
    _
  %s4 = ssub.s32 1, %s2
  %s5 = scalar_select 0, %s4, %s2
  $region1: #{tpu_custom_call.1} parent=0
    #allocation2 [shape = 'u8[131072]{0}', space=vmem, size = 0x20000, scoped, tag = 'input window, operand 0']
    #allocation3 [shape = 's32[2]{0}', space=sflag, size = 0x8, scoped, tag = 'scoped memory for tpu_custom_call.1']
    #allocation4 [shape = 's32[2]{0}', space=sflag, size = 0x8, scoped, tag = 'scoped memory for tpu_custom_call.1']
    #allocation5 [shape = 'u8[262144]{0}', space=vmem, size = 0x40000, scoped, tag = 'output window, operand 0']
    %6 = vsyncpa [#allocation3], 0
    %s7 = scalar_lea.sflag [#allocation3], 1
    %8 = vsyncpa %s7, 0
    %9 = vsyncpa [#allocation4], 0
    %s10 = scalar_lea.sflag [#allocation4], 1
    %11 = vsyncpa %s10, 0
    loop: start=0, step=1, limit=4
    $region2: #{tpu_custom_call.1} parent=1 // loop_pre_header
      _
    $region3: #{tpu_custom_call.1} parent=1 // loop_header
      %s13 = sphi 0, %s17
      %p14 = scmp.ge.s32.totalorder %s13, 4
      %s23 = sphi 0, %s25
      %s26 = sphi 0, %s23
      %s27 = sphi 0, %s26
      %s43 = sphi 0, %s27
      %s49 = sphi 0, %s51
      %s52 = sphi 0, %s49
      %s53 = sphi 0, %s52
      %s69 = sphi 0, %s53
    $region4: #{tpu_custom_call.1} parent=1 // loop_header_branch
      %16 = sbr.rel (%p14) target = $region8
    $region5: #{tpu_custom_call.1} parent=1 // loop_body
      %s18 = ssub.s32 %s13, 1
      %s19 = ssub.s32 %s13, 2
      %s20 = sadd.s32 %s13, 1
      %s21 = ssub.s32 %s13, %s20
      %p22 = scmp.eq.s32.totalorder %s21, 0
      %s24 = sadd.s32 %s23, 1
      %s25 = scalar_select %p22, %s23, %s24
      %p28 = pneg %p22
      %p29 = scmp.eq.s32.totalorder %s13, 1
      %p30 = por %p28, %p29
      %p31 = scmp.ne.s32.totalorder %s23, %s26
      %p32 = scmp.eq.s32.totalorder %s13, 0
      %p33 = por %p31, %p32
      %p34 = scmp.ne.s32.totalorder %s23, %s26
      %p35 = scmp.eq.s32.totalorder %s18, 1
      %p36 = por %p34, %p35
      %p37 = scmp.ne.s32.totalorder %s26, %s27
      %p38 = scmp.eq.s32.totalorder %s18, 0
      %p39 = por %p37, %p38
      %p40 = scmp.ne.s32.totalorder %s26, %s27
      %p41 = scmp.eq.s32.totalorder %s19, 1
      %p42 = por %p40, %p41
      %p44 = scmp.ne.s32.totalorder %s27, %s43
      %p45 = scmp.eq.s32.totalorder %s19, 0
      %p46 = por %p44, %p45
      %s47 = ssub.s32 %s13, %s20
      %p48 = scmp.eq.s32.totalorder %s47, 0
      %s50 = sadd.s32 %s49, 1
      %s51 = scalar_select %p48, %s49, %s50
      %p54 = pneg %p48
      %p55 = scmp.eq.s32.totalorder %s13, 1
      %p56 = por %p54, %p55
      %p57 = scmp.ne.s32.totalorder %s49, %s52
      %p58 = scmp.eq.s32.totalorder %s13, 0
      %p59 = por %p57, %p58
      %p60 = scmp.ne.s32.totalorder %s49, %s52
      %p61 = scmp.eq.s32.totalorder %s18, 1
      %p62 = por %p60, %p61
      %p63 = scmp.ne.s32.totalorder %s52, %s53
      %p64 = scmp.eq.s32.totalorder %s18, 0
      %p65 = por %p63, %p64
      %p66 = scmp.ne.s32.totalorder %s52, %s53
      %p67 = scmp.eq.s32.totalorder %s19, 1
      %p68 = por %p66, %p67
      %p70 = scmp.ne.s32.totalorder %s53, %s69
      %p71 = scmp.eq.s32.totalorder %s19, 0
      %p72 = por %p70, %p71
      %p73 = scmp.le.s32.totalorder 1, %s13
      %p74 = scmp.lt.s32.totalorder %s13, 3
      %p75 = pnand %p73, %p74
      %p76 = pneg %p75
      // Predicated region
      $region9: #{tpu_custom_call.1} parent=5 // pred_check
        _
      $region10: #{tpu_custom_call.1} parent=5 // pred_check_branch
        %78 = sbr.rel (%p75) target = $region12
      $region11: #{tpu_custom_call.1} parent=5 // pred_region
        %s79 = ssub.s32 %s13, 1
      $region12: #{tpu_custom_call.1} parent=5 // pred_fallthru
        _
      %p80 = scmp.lt.s32.totalorder %s13, 2
      // Predicated region
      $region13: #{tpu_custom_call.1} parent=5 // pred_check
        %p81 = pneg %p80
      $region14: #{tpu_custom_call.1} parent=5 // pred_check_branch
        %83 = sbr.rel (%p81) target = $region16
      $region15: #{tpu_custom_call.1} parent=5 // pred_region
        // Predicated region
        $region17: #{tpu_custom_call.1} parent=15 // pred_check
          %p84 = pneg %p33
        $region18: #{tpu_custom_call.1} parent=15 // pred_check_branch
          %86 = sbr.rel (%p84) target = $region20
        $region19: #{tpu_custom_call.1} parent=15 // pred_region
          %s87 = sand.u32 %s23, 1
          %s88 = scalar_lea.sflag [#allocation3], %s87
          %s89 = sand.u32 %s23, 1
          %s90 = smul.addr %s89, 128
          %s91 = scalar_lea.vmem [#allocation2], %s90
          %s93 = ssub.s32 2048, 2048
          %94 = vsyncadd %s88, %s93
          %s95 = smul.addr %s13, 16
          %s96 = smul.addr %s95, 128
          %s97 = scalar_lea.hbm %s0, %s96
          %s99 = sshll.u32 %s91, 4
          %s100 = int_to_ptr.vmem [resolvable:$true] %s99
          %102 = dma.hbm_to_vmem [thread:$0]  %s97, 2048, %s100, %s88
        $region20: #{tpu_custom_call.1} parent=15 // pred_fallthru
          _
      $region16: #{tpu_custom_call.1} parent=5 // pred_fallthru
        _
      %p103 = scmp.le.s32.totalorder 1, %s13
      %p104 = scmp.lt.s32.totalorder %s13, 3
      %p105 = pnand %p103, %p104
      %p106 = pneg %p105
      // Predicated region
      $region21: #{tpu_custom_call.1} parent=5 // pred_check
        _
      $region22: #{tpu_custom_call.1} parent=5 // pred_check_branch
        %108 = sbr.rel (%p105) target = $region24
      $region23: #{tpu_custom_call.1} parent=5 // pred_region
        %s109 = ssub.s32 %s13, 1
        %s110 = sand.u32 %s26, 1
        %s111 = scalar_lea.sflag [#allocation3], %s110
        %s112 = sand.u32 %s26, 1
        %s113 = smul.addr %s112, 128
        %s114 = scalar_lea.vmem [#allocation2], %s113
        // Predicated region
        $region25: #{tpu_custom_call.1} parent=23 // pred_check
          %p115 = pneg %p39
        $region26: #{tpu_custom_call.1} parent=23 // pred_check_branch
          %117 = sbr.rel (%p115) target = $region28
        $region27: #{tpu_custom_call.1} parent=23 // pred_region
          %118 = dma.done %s111, 2048
        $region28: #{tpu_custom_call.1} parent=23 // pred_fallthru
          _
        %s119 = sand.u32 %s26, 1
        %s120 = scalar_lea.sflag [#allocation3], %s119
        %s121 = sand.u32 %s26, 1
        %s122 = smul.addr %s121, 128
        %s123 = scalar_lea.vmem [#allocation2], %s122
        %p124 = pneg %p39
        %p125 = pneg %p36
        %p126 = pneg %p65
        %p127 = pneg %p62
        %s128 = sand.u32 %s52, 1
        %s129 = scalar_lea.sflag [#allocation4], %s128
        %s130 = sand.u32 %s52, 1
        %s131 = smul.addr %s130, 256
        %s132 = scalar_lea.vmem [#allocation5], %s131
        %v133 = vld [vmem:[%s114] sm:$0xff]
        %v134 = vld [vmem:[%s114 + $0x10] sm:$0xff]
        %v135 = vld [vmem:[%s114 + $0x20] sm:$0xff]
        %v136 = vld [vmem:[%s114 + $0x30] sm:$0xff]
        %v137 = vld [vmem:[%s114 + $0x40] sm:$0xff]
        %v138 = vld [vmem:[%s114 + $0x50] sm:$0xff]
        %v139 = vld [vmem:[%s114 + $0x60] sm:$0xff]
        %v140 = vld [vmem:[%s114 + $0x70] sm:$0xff]
        %142 = vrot.lane.b32.xlu0 %v133, 120
        %v143 = vpop.permute.xlu0 %142
        %145 = vrot.lane.b32.xlu0 %v133, 112
        %v146 = vpop.permute.xlu0 %145
        %148 = vrot.lane.b32.xlu0 %v133, 104
        %v149 = vpop.permute.xlu0 %148
        %151 = vrot.lane.b32.xlu0 %v133, 96
        %v152 = vpop.permute.xlu0 %151
        %154 = vrot.lane.b32.xlu0 %v133, 88
        %v155 = vpop.permute.xlu0 %154
        %157 = vrot.lane.b32.xlu0 %v133, 80
        %v158 = vpop.permute.xlu0 %157
        %160 = vrot.lane.b32.xlu0 %v133, 72
        %v161 = vpop.permute.xlu0 %160
        %vm163 = vcmask 64512
        %v164 = vsel %vm163, %v133, %v143
        %vm165 = vcmask 130048
        %v166 = vsel %vm165, %v164, %v146
        %vm167 = vcmask 195584
        %v168 = vsel %vm167, %v166, %v149
        %vm169 = vcmask 261120
        %v170 = vsel %vm169, %v168, %v152
        %vm171 = vcmask 326656
        %v172 = vsel %vm171, %v170, %v155
        %vm173 = vcmask 392192
        %v174 = vsel %vm173, %v172, %v158
        %vm175 = vcmask 457728
        %v176 = vsel %vm175, %v174, %v161
        %178 = vrot.lane.b32.xlu0 %v134, 120
        %v179 = vpop.permute.xlu0 %178
        %181 = vrot.lane.b32.xlu0 %v134, 112
        %v182 = vpop.permute.xlu0 %181
        %184 = vrot.lane.b32.xlu0 %v134, 104
        %v185 = vpop.permute.xlu0 %184
        %187 = vrot.lane.b32.xlu0 %v134, 96
        %v188 = vpop.permute.xlu0 %187
        %190 = vrot.lane.b32.xlu0 %v134, 88
        %v191 = vpop.permute.xlu0 %190
        %193 = vrot.lane.b32.xlu0 %v134, 80
        %v194 = vpop.permute.xlu0 %193
        %196 = vrot.lane.b32.xlu0 %v134, 72
        %v197 = vpop.permute.xlu0 %196
        %v199 = vsel %vm163, %v134, %v179
        %v200 = vsel %vm165, %v199, %v182
        %v201 = vsel %vm167, %v200, %v185
        %v202 = vsel %vm169, %v201, %v188
        %v203 = vsel %vm171, %v202, %v191
        %v204 = vsel %vm173, %v203, %v194
        %v205 = vsel %vm175, %v204, %v197
        %207 = vrot.lane.b32.xlu0 %v135, 120
        %v208 = vpop.permute.xlu0 %207
        %210 = vrot.lane.b32.xlu0 %v135, 112
        %v211 = vpop.permute.xlu0 %210
        %213 = vrot.lane.b32.xlu0 %v135, 104
        %v214 = vpop.permute.xlu0 %213
        %216 = vrot.lane.b32.xlu0 %v135, 96
        %v217 = vpop.permute.xlu0 %216
        %219 = vrot.lane.b32.xlu0 %v135, 88
        %v220 = vpop.permute.xlu0 %219
        %222 = vrot.lane.b32.xlu0 %v135, 80
        %v223 = vpop.permute.xlu0 %222
        %225 = vrot.lane.b32.xlu0 %v135, 72
        %v226 = vpop.permute.xlu0 %225
        %v228 = vsel %vm163, %v135, %v208
        %v229 = vsel %vm165, %v228, %v211
        %v230 = vsel %vm167, %v229, %v214
        %v231 = vsel %vm169, %v230, %v217
        %v232 = vsel %vm171, %v231, %v220
        %v233 = vsel %vm173, %v232, %v223
        %v234 = vsel %vm175, %v233, %v226
        %236 = vrot.lane.b32.xlu0 %v136, 120
        %v237 = vpop.permute.xlu0 %236
        %239 = vrot.lane.b32.xlu0 %v136, 112
        %v240 = vpop.permute.xlu0 %239
        %242 = vrot.lane.b32.xlu0 %v136, 104
        %v243 = vpop.permute.xlu0 %242
        %245 = vrot.lane.b32.xlu0 %v136, 96
        %v246 = vpop.permute.xlu0 %245
        %248 = vrot.lane.b32.xlu0 %v136, 88
        %v249 = vpop.permute.xlu0 %248
        %251 = vrot.lane.b32.xlu0 %v136, 80
        %v252 = vpop.permute.xlu0 %251
        %254 = vrot.lane.b32.xlu0 %v136, 72
        %v255 = vpop.permute.xlu0 %254
        %v257 = vsel %vm163, %v136, %v237
        %v258 = vsel %vm165, %v257, %v240
        %v259 = vsel %vm167, %v258, %v243
        %v260 = vsel %vm169, %v259, %v246
        %v261 = vsel %vm171, %v260, %v249
        %v262 = vsel %vm173, %v261, %v252
        %v263 = vsel %vm175, %v262, %v255
        %265 = vrot.lane.b32.xlu0 %v137, 120
        %v266 = vpop.permute.xlu0 %265
        %268 = vrot.lane.b32.xlu0 %v137, 112
        %v269 = vpop.permute.xlu0 %268
        %271 = vrot.lane.b32.xlu0 %v137, 104
        %v272 = vpop.permute.xlu0 %271
        %274 = vrot.lane.b32.xlu0 %v137, 96
        %v275 = vpop.permute.xlu0 %274
        %277 = vrot.lane.b32.xlu0 %v137, 88
        %v278 = vpop.permute.xlu0 %277
        %280 = vrot.lane.b32.xlu0 %v137, 80
        %v281 = vpop.permute.xlu0 %280
        %283 = vrot.lane.b32.xlu0 %v137, 72
        %v284 = vpop.permute.xlu0 %283
        %v286 = vsel %vm163, %v137, %v266
        %v287 = vsel %vm165, %v286, %v269
        %v288 = vsel %vm167, %v287, %v272
        %v289 = vsel %vm169, %v288, %v275
        %v290 = vsel %vm171, %v289, %v278
        %v291 = vsel %vm173, %v290, %v281
        %v292 = vsel %vm175, %v291, %v284
        %294 = vrot.lane.b32.xlu0 %v138, 120
        %v295 = vpop.permute.xlu0 %294
        %297 = vrot.lane.b32.xlu0 %v138, 112
        %v298 = vpop.permute.xlu0 %297
        %300 = vrot.lane.b32.xlu0 %v138, 104
        %v301 = vpop.permute.xlu0 %300
        %303 = vrot.lane.b32.xlu0 %v138, 96
        %v304 = vpop.permute.xlu0 %303
        %306 = vrot.lane.b32.xlu0 %v138, 88
        %v307 = vpop.permute.xlu0 %306
        %309 = vrot.lane.b32.xlu0 %v138, 80
        %v310 = vpop.permute.xlu0 %309
        %312 = vrot.lane.b32.xlu0 %v138, 72
        %v313 = vpop.permute.xlu0 %312
        %v315 = vsel %vm163, %v138, %v295
        %v316 = vsel %vm165, %v315, %v298
        %v317 = vsel %vm167, %v316, %v301
        %v318 = vsel %vm169, %v317, %v304
        %v319 = vsel %vm171, %v318, %v307
        %v320 = vsel %vm173, %v319, %v310
        %v321 = vsel %vm175, %v320, %v313
        %323 = vrot.lane.b32.xlu0 %v139, 120
        %v324 = vpop.permute.xlu0 %323
        %326 = vrot.lane.b32.xlu0 %v139, 112
        %v327 = vpop.permute.xlu0 %326
        %329 = vrot.lane.b32.xlu0 %v139, 104
        %v330 = vpop.permute.xlu0 %329
        %332 = vrot.lane.b32.xlu0 %v139, 96
        %v333 = vpop.permute.xlu0 %332
        %335 = vrot.lane.b32.xlu0 %v139, 88
        %v336 = vpop.permute.xlu0 %335
        %338 = vrot.lane.b32.xlu0 %v139, 80
        %v339 = vpop.permute.xlu0 %338
        %341 = vrot.lane.b32.xlu0 %v139, 72
        %v342 = vpop.permute.xlu0 %341
        %v344 = vsel %vm163, %v139, %v324
        %v345 = vsel %vm165, %v344, %v327
        %v346 = vsel %vm167, %v345, %v330
        %v347 = vsel %vm169, %v346, %v333
        %v348 = vsel %vm171, %v347, %v336
        %v349 = vsel %vm173, %v348, %v339
        %v350 = vsel %vm175, %v349, %v342
        %352 = vrot.lane.b32.xlu0 %v140, 120
        %v353 = vpop.permute.xlu0 %352
        %355 = vrot.lane.b32.xlu0 %v140, 112
        %v356 = vpop.permute.xlu0 %355
        %358 = vrot.lane.b32.xlu0 %v140, 104
        %v359 = vpop.permute.xlu0 %358
        %361 = vrot.lane.b32.xlu0 %v140, 96
        %v362 = vpop.permute.xlu0 %361
        %364 = vrot.lane.b32.xlu0 %v140, 88
        %v365 = vpop.permute.xlu0 %364
        %367 = vrot.lane.b32.xlu0 %v140, 80
        %v368 = vpop.permute.xlu0 %367
        %370 = vrot.lane.b32.xlu0 %v140, 72
        %v371 = vpop.permute.xlu0 %370
        %v373 = vsel %vm163, %v140, %v353
        %v374 = vsel %vm165, %v373, %v356
        %v375 = vsel %vm167, %v374, %v359
        %v376 = vsel %vm169, %v375, %v362
        %v377 = vsel %vm171, %v376, %v365
        %v378 = vsel %vm173, %v377, %v368
        %v379 = vsel %vm175, %v378, %v371
        %381 = vrot.lane.b32.xlu0 %v205, 64
        %v382 = vpop.permute.xlu0 %381
        %385 = vrot.lane.b32.xlu0 %v263, 64
        %v386 = vpop.permute.xlu0 %385
        %389 = vrot.lane.b32.xlu0 %v321, 64
        %v390 = vpop.permute.xlu0 %389
        %393 = vrot.lane.b32.xlu0 %v379, 64
        %v394 = vpop.permute.xlu0 %393
        %vm396 = vcmask 523264
        %v397 = vsel %vm396, %v176, %v382
        %v398 = vsel %vm396, %v234, %v386
        %v399 = vsel %vm396, %v292, %v390
        %v400 = vsel %vm396, %v350, %v394
        %401 = vst [vmem:[%s132] sm:$0xff] %v397
        %402 = vst [vmem:[%s132 + $0x8] sm:$0xff] %v398
        %403 = vst [vmem:[%s132 + $0x10] sm:$0xff] %v399
        %404 = vst [vmem:[%s132 + $0x18] sm:$0xff] %v400
        %405 = vrot.lane.b32.xlu0 %v133, 64
        %v406 = vpop.permute.xlu0 %405
        %v408 = vsel %vm163, %v143, %v146
        %v409 = vsel %vm165, %v408, %v149
        %v410 = vsel %vm167, %v409, %v152
        %v411 = vsel %vm169, %v410, %v155
        %v412 = vsel %vm171, %v411, %v158
        %v413 = vsel %vm173, %v412, %v161
        %v414 = vsel %vm175, %v413, %v406
        %415 = vrot.lane.b32.xlu0 %v134, 64
        %v416 = vpop.permute.xlu0 %415
        %v418 = vsel %vm163, %v179, %v182
        %v419 = vsel %vm165, %v418, %v185
        %v420 = vsel %vm167, %v419, %v188
        %v421 = vsel %vm169, %v420, %v191
        %v422 = vsel %vm171, %v421, %v194
        %v423 = vsel %vm173, %v422, %v197
        %v424 = vsel %vm175, %v423, %v416
        %425 = vrot.lane.b32.xlu0 %v135, 64
        %v426 = vpop.permute.xlu0 %425
        %v428 = vsel %vm163, %v208, %v211
        %v429 = vsel %vm165, %v428, %v214
        %v430 = vsel %vm167, %v429, %v217
        %v431 = vsel %vm169, %v430, %v220
        %v432 = vsel %vm171, %v431, %v223
        %v433 = vsel %vm173, %v432, %v226
        %v434 = vsel %vm175, %v433, %v426
        %435 = vrot.lane.b32.xlu0 %v136, 64
        %v436 = vpop.permute.xlu0 %435
        %v438 = vsel %vm163, %v237, %v240
        %v439 = vsel %vm165, %v438, %v243
        %v440 = vsel %vm167, %v439, %v246
        %v441 = vsel %vm169, %v440, %v249
        %v442 = vsel %vm171, %v441, %v252
        %v443 = vsel %vm173, %v442, %v255
        %v444 = vsel %vm175, %v443, %v436
        %445 = vrot.lane.b32.xlu0 %v137, 64
        %v446 = vpop.permute.xlu0 %445
        %v448 = vsel %vm163, %v266, %v269
        %v449 = vsel %vm165, %v448, %v272
        %v450 = vsel %vm167, %v449, %v275
        %v451 = vsel %vm169, %v450, %v278
        %v452 = vsel %vm171, %v451, %v281
        %v453 = vsel %vm173, %v452, %v284
        %v454 = vsel %vm175, %v453, %v446
        %455 = vrot.lane.b32.xlu0 %v138, 64
        %v456 = vpop.permute.xlu0 %455
        %v458 = vsel %vm163, %v295, %v298
        %v459 = vsel %vm165, %v458, %v301
        %v460 = vsel %vm167, %v459, %v304
        %v461 = vsel %vm169, %v460, %v307
        %v462 = vsel %vm171, %v461, %v310
        %v463 = vsel %vm173, %v462, %v313
        %v464 = vsel %vm175, %v463, %v456
        %465 = vrot.lane.b32.xlu0 %v139, 64
        %v466 = vpop.permute.xlu0 %465
        %v468 = vsel %vm163, %v324, %v327
        %v469 = vsel %vm165, %v468, %v330
        %v470 = vsel %vm167, %v469, %v333
        %v471 = vsel %vm169, %v470, %v336
        %v472 = vsel %vm171, %v471, %v339
        %v473 = vsel %vm173, %v472, %v342
        %v474 = vsel %vm175, %v473, %v466
        %475 = vrot.lane.b32.xlu0 %v140, 64
        %v476 = vpop.permute.xlu0 %475
        %v478 = vsel %vm163, %v353, %v356
        %v479 = vsel %vm165, %v478, %v359
        %v480 = vsel %vm167, %v479, %v362
        %v481 = vsel %vm169, %v480, %v365
        %v482 = vsel %vm171, %v481, %v368
        %v483 = vsel %vm173, %v482, %v371
        %v484 = vsel %vm175, %v483, %v476
        %486 = vrot.lane.b32.xlu0 %v424, 64
        %v487 = vpop.permute.xlu0 %486
        %490 = vrot.lane.b32.xlu0 %v444, 64
        %v491 = vpop.permute.xlu0 %490
        %494 = vrot.lane.b32.xlu0 %v464, 64
        %v495 = vpop.permute.xlu0 %494
        %498 = vrot.lane.b32.xlu0 %v484, 64
        %v499 = vpop.permute.xlu0 %498
        %v501 = vsel %vm396, %v414, %v487
        %v502 = vsel %vm396, %v434, %v491
        %v503 = vsel %vm396, %v454, %v495
        %v504 = vsel %vm396, %v474, %v499
        %505 = vst [vmem:[%s132 + $0x20] sm:$0xff] %v501
        %506 = vst [vmem:[%s132 + $0x28] sm:$0xff] %v502
        %507 = vst [vmem:[%s132 + $0x30] sm:$0xff] %v503
        %508 = vst [vmem:[%s132 + $0x38] sm:$0xff] %v504
        %v509 = vld [vmem:[%s114 + $0x8] sm:$0xff]
        %v510 = vld [vmem:[%s114 + $0x18] sm:$0xff]
        %v511 = vld [vmem:[%s114 + $0x28] sm:$0xff]
        %v512 = vld [vmem:[%s114 + $0x38] sm:$0xff]
        %v513 = vld [vmem:[%s114 + $0x48] sm:$0xff]
        %v514 = vld [vmem:[%s114 + $0x58] sm:$0xff]
        %v515 = vld [vmem:[%s114 + $0x68] sm:$0xff]
        %v516 = vld [vmem:[%s114 + $0x78] sm:$0xff]
        %518 = vrot.lane.b32.xlu0 %v509, 120
        %v519 = vpop.permute.xlu0 %518
        %521 = vrot.lane.b32.xlu0 %v509, 112
        %v522 = vpop.permute.xlu0 %521
        %524 = vrot.lane.b32.xlu0 %v509, 104
        %v525 = vpop.permute.xlu0 %524
        %527 = vrot.lane.b32.xlu0 %v509, 96
        %v528 = vpop.permute.xlu0 %527
        %530 = vrot.lane.b32.xlu0 %v509, 88
        %v531 = vpop.permute.xlu0 %530
        %533 = vrot.lane.b32.xlu0 %v509, 80
        %v534 = vpop.permute.xlu0 %533
        %536 = vrot.lane.b32.xlu0 %v509, 72
        %v537 = vpop.permute.xlu0 %536
        %v539 = vsel %vm163, %v509, %v519
        %v540 = vsel %vm165, %v539, %v522
        %v541 = vsel %vm167, %v540, %v525
        %v542 = vsel %vm169, %v541, %v528
        %v543 = vsel %vm171, %v542, %v531
        %v544 = vsel %vm173, %v543, %v534
        %v545 = vsel %vm175, %v544, %v537
        %547 = vrot.lane.b32.xlu0 %v510, 120
        %v548 = vpop.permute.xlu0 %547
        %550 = vrot.lane.b32.xlu0 %v510, 112
        %v551 = vpop.permute.xlu0 %550
        %553 = vrot.lane.b32.xlu0 %v510, 104
        %v554 = vpop.permute.xlu0 %553
        %556 = vrot.lane.b32.xlu0 %v510, 96
        %v557 = vpop.permute.xlu0 %556
        %559 = vrot.lane.b32.xlu0 %v510, 88
        %v560 = vpop.permute.xlu0 %559
        %562 = vrot.lane.b32.xlu0 %v510, 80
        %v563 = vpop.permute.xlu0 %562
        %565 = vrot.lane.b32.xlu0 %v510, 72
        %v566 = vpop.permute.xlu0 %565
        %v568 = vsel %vm163, %v510, %v548
        %v569 = vsel %vm165, %v568, %v551
        %v570 = vsel %vm167, %v569, %v554
        %v571 = vsel %vm169, %v570, %v557
        %v572 = vsel %vm171, %v571, %v560
        %v573 = vsel %vm173, %v572, %v563
        %v574 = vsel %vm175, %v573, %v566
        %576 = vrot.lane.b32.xlu0 %v511, 120
        %v577 = vpop.permute.xlu0 %576
        %579 = vrot.lane.b32.xlu0 %v511, 112
        %v580 = vpop.permute.xlu0 %579
        %582 = vrot.lane.b32.xlu0 %v511, 104
        %v583 = vpop.permute.xlu0 %582
        %585 = vrot.lane.b32.xlu0 %v511, 96
        %v586 = vpop.permute.xlu0 %585
        %588 = vrot.lane.b32.xlu0 %v511, 88
        %v589 = vpop.permute.xlu0 %588
        %591 = vrot.lane.b32.xlu0 %v511, 80
        %v592 = vpop.permute.xlu0 %591
        %594 = vrot.lane.b32.xlu0 %v511, 72
        %v595 = vpop.permute.xlu0 %594
        %v597 = vsel %vm163, %v511, %v577
        %v598 = vsel %vm165, %v597, %v580
        %v599 = vsel %vm167, %v598, %v583
        %v600 = vsel %vm169, %v599, %v586
        %v601 = vsel %vm171, %v600, %v589
        %v602 = vsel %vm173, %v601, %v592
        %v603 = vsel %vm175, %v602, %v595
        %605 = vrot.lane.b32.xlu0 %v512, 120
        %v606 = vpop.permute.xlu0 %605
        %608 = vrot.lane.b32.xlu0 %v512, 112
        %v609 = vpop.permute.xlu0 %608
        %611 = vrot.lane.b32.xlu0 %v512, 104
        %v612 = vpop.permute.xlu0 %611
        %614 = vrot.lane.b32.xlu0 %v512, 96
        %v615 = vpop.permute.xlu0 %614
        %617 = vrot.lane.b32.xlu0 %v512, 88
        %v618 = vpop.permute.xlu0 %617
        %620 = vrot.lane.b32.xlu0 %v512, 80
        %v621 = vpop.permute.xlu0 %620
        %623 = vrot.lane.b32.xlu0 %v512, 72
        %v624 = vpop.permute.xlu0 %623
        %v626 = vsel %vm163, %v512, %v606
        %v627 = vsel %vm165, %v626, %v609
        %v628 = vsel %vm167, %v627, %v612
        %v629 = vsel %vm169, %v628, %v615
        %v630 = vsel %vm171, %v629, %v618
        %v631 = vsel %vm173, %v630, %v621
        %v632 = vsel %vm175, %v631, %v624
        %634 = vrot.lane.b32.xlu0 %v513, 120
        %v635 = vpop.permute.xlu0 %634
        %637 = vrot.lane.b32.xlu0 %v513, 112
        %v638 = vpop.permute.xlu0 %637
        %640 = vrot.lane.b32.xlu0 %v513, 104
        %v641 = vpop.permute.xlu0 %640
        %643 = vrot.lane.b32.xlu0 %v513, 96
        %v644 = vpop.permute.xlu0 %643
        %646 = vrot.lane.b32.xlu0 %v513, 88
        %v647 = vpop.permute.xlu0 %646
        %649 = vrot.lane.b32.xlu0 %v513, 80
        %v650 = vpop.permute.xlu0 %649
        %652 = vrot.lane.b32.xlu0 %v513, 72
        %v653 = vpop.permute.xlu0 %652
        %v655 = vsel %vm163, %v513, %v635
        %v656 = vsel %vm165, %v655, %v638
        %v657 = vsel %vm167, %v656, %v641
        %v658 = vsel %vm169, %v657, %v644
        %v659 = vsel %vm171, %v658, %v647
        %v660 = vsel %vm173, %v659, %v650
        %v661 = vsel %vm175, %v660, %v653
        %663 = vrot.lane.b32.xlu0 %v514, 120
        %v664 = vpop.permute.xlu0 %663
        %666 = vrot.lane.b32.xlu0 %v514, 112
        %v667 = vpop.permute.xlu0 %666
        %669 = vrot.lane.b32.xlu0 %v514, 104
        %v670 = vpop.permute.xlu0 %669
        %672 = vrot.lane.b32.xlu0 %v514, 96
        %v673 = vpop.permute.xlu0 %672
        %675 = vrot.lane.b32.xlu0 %v514, 88
        %v676 = vpop.permute.xlu0 %675
        %678 = vrot.lane.b32.xlu0 %v514, 80
        %v679 = vpop.permute.xlu0 %678
        %681 = vrot.lane.b32.xlu0 %v514, 72
        %v682 = vpop.permute.xlu0 %681
        %v684 = vsel %vm163, %v514, %v664
        %v685 = vsel %vm165, %v684, %v667
        %v686 = vsel %vm167, %v685, %v670
        %v687 = vsel %vm169, %v686, %v673
        %v688 = vsel %vm171, %v687, %v676
        %v689 = vsel %vm173, %v688, %v679
        %v690 = vsel %vm175, %v689, %v682
        %692 = vrot.lane.b32.xlu0 %v515, 120
        %v693 = vpop.permute.xlu0 %692
        %695 = vrot.lane.b32.xlu0 %v515, 112
        %v696 = vpop.permute.xlu0 %695
        %698 = vrot.lane.b32.xlu0 %v515, 104
        %v699 = vpop.permute.xlu0 %698
        %701 = vrot.lane.b32.xlu0 %v515, 96
        %v702 = vpop.permute.xlu0 %701
        %704 = vrot.lane.b32.xlu0 %v515, 88
        %v705 = vpop.permute.xlu0 %704
        %707 = vrot.lane.b32.xlu0 %v515, 80
        %v708 = vpop.permute.xlu0 %707
        %710 = vrot.lane.b32.xlu0 %v515, 72
        %v711 = vpop.permute.xlu0 %710
        %v713 = vsel %vm163, %v515, %v693
        %v714 = vsel %vm165, %v713, %v696
        %v715 = vsel %vm167, %v714, %v699
        %v716 = vsel %vm169, %v715, %v702
        %v717 = vsel %vm171, %v716, %v705
        %v718 = vsel %vm173, %v717, %v708
        %v719 = vsel %vm175, %v718, %v711
        %721 = vrot.lane.b32.xlu0 %v516, 120
        %v722 = vpop.permute.xlu0 %721
        %724 = vrot.lane.b32.xlu0 %v516, 112
        %v725 = vpop.permute.xlu0 %724
        %727 = vrot.lane.b32.xlu0 %v516, 104
        %v728 = vpop.permute.xlu0 %727
        %730 = vrot.lane.b32.xlu0 %v516, 96
        %v731 = vpop.permute.xlu0 %730
        %733 = vrot.lane.b32.xlu0 %v516, 88
        %v734 = vpop.permute.xlu0 %733
        %736 = vrot.lane.b32.xlu0 %v516, 80
        %v737 = vpop.permute.xlu0 %736
        %739 = vrot.lane.b32.xlu0 %v516, 72
        %v740 = vpop.permute.xlu0 %739
        %v742 = vsel %vm163, %v516, %v722
        %v743 = vsel %vm165, %v742, %v725
        %v744 = vsel %vm167, %v743, %v728
        %v745 = vsel %vm169, %v744, %v731
        %v746 = vsel %vm171, %v745, %v734
        %v747 = vsel %vm173, %v746, %v737
        %v748 = vsel %vm175, %v747, %v740
        %750 = vrot.lane.b32.xlu0 %v574, 64
        %v751 = vpop.permute.xlu0 %750
        %754 = vrot.lane.b32.xlu0 %v632, 64
        %v755 = vpop.permute.xlu0 %754
        %758 = vrot.lane.b32.xlu0 %v690, 64
        %v759 = vpop.permute.xlu0 %758
        %762 = vrot.lane.b32.xlu0 %v748, 64
        %v763 = vpop.permute.xlu0 %762
        %v765 = vsel %vm396, %v545, %v751
        %v766 = vsel %vm396, %v603, %v755
        %v767 = vsel %vm396, %v661, %v759
        %v768 = vsel %vm396, %v719, %v763
        %769 = vst [vmem:[%s132 + $0x40] sm:$0xff] %v765
        %770 = vst [vmem:[%s132 + $0x48] sm:$0xff] %v766
        %771 = vst [vmem:[%s132 + $0x50] sm:$0xff] %v767
        %772 = vst [vmem:[%s132 + $0x58] sm:$0xff] %v768
        %773 = vrot.lane.b32.xlu0 %v509, 64
        %v774 = vpop.permute.xlu0 %773
        %v776 = vsel %vm163, %v519, %v522
        %v777 = vsel %vm165, %v776, %v525
        %v778 = vsel %vm167, %v777, %v528
        %v779 = vsel %vm169, %v778, %v531
        %v780 = vsel %vm171, %v779, %v534
        %v781 = vsel %vm173, %v780, %v537
        %v782 = vsel %vm175, %v781, %v774
        %783 = vrot.lane.b32.xlu0 %v510, 64
        %v784 = vpop.permute.xlu0 %783
        %v786 = vsel %vm163, %v548, %v551
        %v787 = vsel %vm165, %v786, %v554
        %v788 = vsel %vm167, %v787, %v557
        %v789 = vsel %vm169, %v788, %v560
        %v790 = vsel %vm171, %v789, %v563
        %v791 = vsel %vm173, %v790, %v566
        %v792 = vsel %vm175, %v791, %v784
        %793 = vrot.lane.b32.xlu0 %v511, 64
        %v794 = vpop.permute.xlu0 %793
        %v796 = vsel %vm163, %v577, %v580
        %v797 = vsel %vm165, %v796, %v583
        %v798 = vsel %vm167, %v797, %v586
        %v799 = vsel %vm169, %v798, %v589
        %v800 = vsel %vm171, %v799, %v592
        %v801 = vsel %vm173, %v800, %v595
        %v802 = vsel %vm175, %v801, %v794
        %803 = vrot.lane.b32.xlu0 %v512, 64
        %v804 = vpop.permute.xlu0 %803
        %v806 = vsel %vm163, %v606, %v609
        %v807 = vsel %vm165, %v806, %v612
        %v808 = vsel %vm167, %v807, %v615
        %v809 = vsel %vm169, %v808, %v618
        %v810 = vsel %vm171, %v809, %v621
        %v811 = vsel %vm173, %v810, %v624
        %v812 = vsel %vm175, %v811, %v804
        %813 = vrot.lane.b32.xlu0 %v513, 64
        %v814 = vpop.permute.xlu0 %813
        %v816 = vsel %vm163, %v635, %v638
        %v817 = vsel %vm165, %v816, %v641
        %v818 = vsel %vm167, %v817, %v644
        %v819 = vsel %vm169, %v818, %v647
        %v820 = vsel %vm171, %v819, %v650
        %v821 = vsel %vm173, %v820, %v653
        %v822 = vsel %vm175, %v821, %v814
        %823 = vrot.lane.b32.xlu0 %v514, 64
        %v824 = vpop.permute.xlu0 %823
        %v826 = vsel %vm163, %v664, %v667
        %v827 = vsel %vm165, %v826, %v670
        %v828 = vsel %vm167, %v827, %v673
        %v829 = vsel %vm169, %v828, %v676
        %v830 = vsel %vm171, %v829, %v679
        %v831 = vsel %vm173, %v830, %v682
        %v832 = vsel %vm175, %v831, %v824
        %833 = vrot.lane.b32.xlu0 %v515, 64
        %v834 = vpop.permute.xlu0 %833
        %v836 = vsel %vm163, %v693, %v696
        %v837 = vsel %vm165, %v836, %v699
        %v838 = vsel %vm167, %v837, %v702
        %v839 = vsel %vm169, %v838, %v705
        %v840 = vsel %vm171, %v839, %v708
        %v841 = vsel %vm173, %v840, %v711
        %v842 = vsel %vm175, %v841, %v834
        %843 = vrot.lane.b32.xlu0 %v516, 64
        %v844 = vpop.permute.xlu0 %843
        %v846 = vsel %vm163, %v722, %v725
        %v847 = vsel %vm165, %v846, %v728
        %v848 = vsel %vm167, %v847, %v731
        %v849 = vsel %vm169, %v848, %v734
        %v850 = vsel %vm171, %v849, %v737
        %v851 = vsel %vm173, %v850, %v740
        %v852 = vsel %vm175, %v851, %v844
        %854 = vrot.lane.b32.xlu0 %v792, 64
        %v855 = vpop.permute.xlu0 %854
        %858 = vrot.lane.b32.xlu0 %v812, 64
        %v859 = vpop.permute.xlu0 %858
        %862 = vrot.lane.b32.xlu0 %v832, 64
        %v863 = vpop.permute.xlu0 %862
        %866 = vrot.lane.b32.xlu0 %v852, 64
        %v867 = vpop.permute.xlu0 %866
        %v869 = vsel %vm396, %v782, %v855
        %v870 = vsel %vm396, %v802, %v859
        %v871 = vsel %vm396, %v822, %v863
        %v872 = vsel %vm396, %v842, %v867
        %873 = vst [vmem:[%s132 + $0x60] sm:$0xff] %v869
        %874 = vst [vmem:[%s132 + $0x68] sm:$0xff] %v870
        %875 = vst [vmem:[%s132 + $0x70] sm:$0xff] %v871
        %876 = vst [vmem:[%s132 + $0x78] sm:$0xff] %v872
        %v877 = vld [vmem:[%s114 + $0x8] sm:$0xff]
        %v878 = vld [vmem:[%s114] sm:$0xff]
        %880 = vrot.lane.b32.xlu0 %v877, 64
        %v881 = vpop.permute.xlu0 %880
        %884 = vrot.lane.b32.xlu0 %v878, 64
        %v885 = vpop.permute.xlu0 %884
        %v887 = vsel %vm396, %v881, %v885
        %v888 = vld [vmem:[%s114 + $0x18] sm:$0xff]
        %v889 = vld [vmem:[%s114 + $0x10] sm:$0xff]
        %891 = vrot.lane.b32.xlu0 %v888, 64
        %v892 = vpop.permute.xlu0 %891
        %895 = vrot.lane.b32.xlu0 %v889, 64
        %v896 = vpop.permute.xlu0 %895
        %v898 = vsel %vm396, %v892, %v896
        %v899 = vld [vmem:[%s114 + $0x28] sm:$0xff]
        %v900 = vld [vmem:[%s114 + $0x20] sm:$0xff]
        %902 = vrot.lane.b32.xlu0 %v899, 64
        %v903 = vpop.permute.xlu0 %902
        %906 = vrot.lane.b32.xlu0 %v900, 64
        %v907 = vpop.permute.xlu0 %906
        %v909 = vsel %vm396, %v903, %v907
        %v910 = vld [vmem:[%s114 + $0x38] sm:$0xff]
        %v911 = vld [vmem:[%s114 + $0x30] sm:$0xff]
        %913 = vrot.lane.b32.xlu0 %v910, 64
        %v914 = vpop.permute.xlu0 %913
        %917 = vrot.lane.b32.xlu0 %v911, 64
        %v918 = vpop.permute.xlu0 %917
        %v920 = vsel %vm396, %v914, %v918
        %v921 = vld [vmem:[%s114 + $0x48] sm:$0xff]
        %v922 = vld [vmem:[%s114 + $0x40] sm:$0xff]
        %924 = vrot.lane.b32.xlu0 %v921, 64
        %v925 = vpop.permute.xlu0 %924
        %928 = vrot.lane.b32.xlu0 %v922, 64
        %v929 = vpop.permute.xlu0 %928
        %v931 = vsel %vm396, %v925, %v929
        %v932 = vld [vmem:[%s114 + $0x58] sm:$0xff]
        %v933 = vld [vmem:[%s114 + $0x50] sm:$0xff]
        %935 = vrot.lane.b32.xlu0 %v932, 64
        %v936 = vpop.permute.xlu0 %935
        %939 = vrot.lane.b32.xlu0 %v933, 64
        %v940 = vpop.permute.xlu0 %939
        %v942 = vsel %vm396, %v936, %v940
        %v943 = vld [vmem:[%s114 + $0x68] sm:$0xff]
        %v944 = vld [vmem:[%s114 + $0x60] sm:$0xff]
        %946 = vrot.lane.b32.xlu0 %v943, 64
        %v947 = vpop.permute.xlu0 %946
        %950 = vrot.lane.b32.xlu0 %v944, 64
        %v951 = vpop.permute.xlu0 %950
        %v953 = vsel %vm396, %v947, %v951
        %v954 = vld [vmem:[%s114 + $0x78] sm:$0xff]
        %v955 = vld [vmem:[%s114 + $0x70] sm:$0xff]
        %957 = vrot.lane.b32.xlu0 %v954, 64
        %v958 = vpop.permute.xlu0 %957
        %961 = vrot.lane.b32.xlu0 %v955, 64
        %v962 = vpop.permute.xlu0 %961
        %v964 = vsel %vm396, %v958, %v962
        %966 = vrot.lane.b32.xlu0 %v887, 116
        %v967 = vpop.permute.xlu0 %966
        %969 = vrot.lane.b32.xlu0 %v887, 4
        %v970 = vpop.permute.xlu0 %969
        %vm972 = vcmask 31744
        %v973 = vsel %vm972, %v967, %v970
        %974 = vrot.lane.b32.xlu0 %v887, 100
        %v975 = vpop.permute.xlu0 %974
        %v977 = vsel %vm972, %v975, %v967
        %978 = vrot.lane.b32.xlu0 %v887, 84
        %v979 = vpop.permute.xlu0 %978
        %v981 = vsel %vm972, %v979, %v975
        %982 = vrot.lane.b32.xlu0 %v887, 68
        %v983 = vpop.permute.xlu0 %982
        %v985 = vsel %vm972, %v983, %v979
        %986 = vrot.lane.b32.xlu0 %v887, 52
        %v987 = vpop.permute.xlu0 %986
        %v989 = vsel %vm972, %v987, %v983
        %990 = vrot.lane.b32.xlu0 %v887, 36
        %v991 = vpop.permute.xlu0 %990
        %v993 = vsel %vm972, %v991, %v987
        %994 = vrot.lane.b32.xlu0 %v887, 20
        %v995 = vpop.permute.xlu0 %994
        %v997 = vsel %vm972, %v995, %v991
        %v998 = vsel %vm972, %v970, %v995
        %1000 = vrot.lane.b32.xlu0 %v977, 8
        %v1001 = vpop.permute.xlu0 %1000
        %1004 = vrot.lane.b32.xlu0 %v981, 16
        %v1005 = vpop.permute.xlu0 %1004
        %1008 = vrot.lane.b32.xlu0 %v985, 24
        %v1009 = vpop.permute.xlu0 %1008
        %1012 = vrot.lane.b32.xlu0 %v989, 32
        %v1013 = vpop.permute.xlu0 %1012
        %1016 = vrot.lane.b32.xlu0 %v993, 40
        %v1017 = vpop.permute.xlu0 %1016
        %1020 = vrot.lane.b32.xlu0 %v997, 48
        %v1021 = vpop.permute.xlu0 %1020
        %1024 = vrot.lane.b32.xlu0 %v998, 56
        %v1025 = vpop.permute.xlu0 %1024
        %v1027 = vsel %vm163, %v973, %v1001
        %v1028 = vsel %vm165, %v1027, %v1005
        %v1029 = vsel %vm167, %v1028, %v1009
        %v1030 = vsel %vm169, %v1029, %v1013
        %v1031 = vsel %vm171, %v1030, %v1017
        %v1032 = vsel %vm173, %v1031, %v1021
        %v1033 = vsel %vm175, %v1032, %v1025
        %1035 = vrot.lane.b32.xlu0 %v898, 116
        %v1036 = vpop.permute.xlu0 %1035
        %1038 = vrot.lane.b32.xlu0 %v898, 4
        %v1039 = vpop.permute.xlu0 %1038
        %v1041 = vsel %vm972, %v1036, %v1039
        %1042 = vrot.lane.b32.xlu0 %v898, 100
        %v1043 = vpop.permute.xlu0 %1042
        %v1045 = vsel %vm972, %v1043, %v1036
        %1046 = vrot.lane.b32.xlu0 %v898, 84
        %v1047 = vpop.permute.xlu0 %1046
        %v1049 = vsel %vm972, %v1047, %v1043
        %1050 = vrot.lane.b32.xlu0 %v898, 68
        %v1051 = vpop.permute.xlu0 %1050
        %v1053 = vsel %vm972, %v1051, %v1047
        %1054 = vrot.lane.b32.xlu0 %v898, 52
        %v1055 = vpop.permute.xlu0 %1054
        %v1057 = vsel %vm972, %v1055, %v1051
        %1058 = vrot.lane.b32.xlu0 %v898, 36
        %v1059 = vpop.permute.xlu0 %1058
        %v1061 = vsel %vm972, %v1059, %v1055
        %1062 = vrot.lane.b32.xlu0 %v898, 20
        %v1063 = vpop.permute.xlu0 %1062
        %v1065 = vsel %vm972, %v1063, %v1059
        %v1066 = vsel %vm972, %v1039, %v1063
        %1068 = vrot.lane.b32.xlu0 %v1045, 8
        %v1069 = vpop.permute.xlu0 %1068
        %1072 = vrot.lane.b32.xlu0 %v1049, 16
        %v1073 = vpop.permute.xlu0 %1072
        %1076 = vrot.lane.b32.xlu0 %v1053, 24
        %v1077 = vpop.permute.xlu0 %1076
        %1080 = vrot.lane.b32.xlu0 %v1057, 32
        %v1081 = vpop.permute.xlu0 %1080
        %1084 = vrot.lane.b32.xlu0 %v1061, 40
        %v1085 = vpop.permute.xlu0 %1084
        %1088 = vrot.lane.b32.xlu0 %v1065, 48
        %v1089 = vpop.permute.xlu0 %1088
        %1092 = vrot.lane.b32.xlu0 %v1066, 56
        %v1093 = vpop.permute.xlu0 %1092
        %v1095 = vsel %vm163, %v1041, %v1069
        %v1096 = vsel %vm165, %v1095, %v1073
        %v1097 = vsel %vm167, %v1096, %v1077
        %v1098 = vsel %vm169, %v1097, %v1081
        %v1099 = vsel %vm171, %v1098, %v1085
        %v1100 = vsel %vm173, %v1099, %v1089
        %v1101 = vsel %vm175, %v1100, %v1093
        %1103 = vrot.lane.b32.xlu0 %v909, 116
        %v1104 = vpop.permute.xlu0 %1103
        %1106 = vrot.lane.b32.xlu0 %v909, 4
        %v1107 = vpop.permute.xlu0 %1106
        %v1109 = vsel %vm972, %v1104, %v1107
        %1110 = vrot.lane.b32.xlu0 %v909, 100
        %v1111 = vpop.permute.xlu0 %1110
        %v1113 = vsel %vm972, %v1111, %v1104
        %1114 = vrot.lane.b32.xlu0 %v909, 84
        %v1115 = vpop.permute.xlu0 %1114
        %v1117 = vsel %vm972, %v1115, %v1111
        %1118 = vrot.lane.b32.xlu0 %v909, 68
        %v1119 = vpop.permute.xlu0 %1118
        %v1121 = vsel %vm972, %v1119, %v1115
        %1122 = vrot.lane.b32.xlu0 %v909, 52
        %v1123 = vpop.permute.xlu0 %1122
        %v1125 = vsel %vm972, %v1123, %v1119
        %1126 = vrot.lane.b32.xlu0 %v909, 36
        %v1127 = vpop.permute.xlu0 %1126
        %v1129 = vsel %vm972, %v1127, %v1123
        %1130 = vrot.lane.b32.xlu0 %v909, 20
        %v1131 = vpop.permute.xlu0 %1130
        %v1133 = vsel %vm972, %v1131, %v1127
        %v1134 = vsel %vm972, %v1107, %v1131
        %1136 = vrot.lane.b32.xlu0 %v1113, 8
        %v1137 = vpop.permute.xlu0 %1136
        %1140 = vrot.lane.b32.xlu0 %v1117, 16
        %v1141 = vpop.permute.xlu0 %1140
        %1144 = vrot.lane.b32.xlu0 %v1121, 24
        %v1145 = vpop.permute.xlu0 %1144
        %1148 = vrot.lane.b32.xlu0 %v1125, 32
        %v1149 = vpop.permute.xlu0 %1148
        %1152 = vrot.lane.b32.xlu0 %v1129, 40
        %v1153 = vpop.permute.xlu0 %1152
        %1156 = vrot.lane.b32.xlu0 %v1133, 48
        %v1157 = vpop.permute.xlu0 %1156
        %1160 = vrot.lane.b32.xlu0 %v1134, 56
        %v1161 = vpop.permute.xlu0 %1160
        %v1163 = vsel %vm163, %v1109, %v1137
        %v1164 = vsel %vm165, %v1163, %v1141
        %v1165 = vsel %vm167, %v1164, %v1145
        %v1166 = vsel %vm169, %v1165, %v1149
        %v1167 = vsel %vm171, %v1166, %v1153
        %v1168 = vsel %vm173, %v1167, %v1157
        %v1169 = vsel %vm175, %v1168, %v1161
        %1171 = vrot.lane.b32.xlu0 %v920, 116
        %v1172 = vpop.permute.xlu0 %1171
        %1174 = vrot.lane.b32.xlu0 %v920, 4
        %v1175 = vpop.permute.xlu0 %1174
        %v1177 = vsel %vm972, %v1172, %v1175
        %1178 = vrot.lane.b32.xlu0 %v920, 100
        %v1179 = vpop.permute.xlu0 %1178
        %v1181 = vsel %vm972, %v1179, %v1172
        %1182 = vrot.lane.b32.xlu0 %v920, 84
        %v1183 = vpop.permute.xlu0 %1182
        %v1185 = vsel %vm972, %v1183, %v1179
        %1186 = vrot.lane.b32.xlu0 %v920, 68
        %v1187 = vpop.permute.xlu0 %1186
        %v1189 = vsel %vm972, %v1187, %v1183
        %1190 = vrot.lane.b32.xlu0 %v920, 52
        %v1191 = vpop.permute.xlu0 %1190
        %v1193 = vsel %vm972, %v1191, %v1187
        %1194 = vrot.lane.b32.xlu0 %v920, 36
        %v1195 = vpop.permute.xlu0 %1194
        %v1197 = vsel %vm972, %v1195, %v1191
        %1198 = vrot.lane.b32.xlu0 %v920, 20
        %v1199 = vpop.permute.xlu0 %1198
        %v1201 = vsel %vm972, %v1199, %v1195
        %v1202 = vsel %vm972, %v1175, %v1199
        %1204 = vrot.lane.b32.xlu0 %v1181, 8
        %v1205 = vpop.permute.xlu0 %1204
        %1208 = vrot.lane.b32.xlu0 %v1185, 16
        %v1209 = vpop.permute.xlu0 %1208
        %1212 = vrot.lane.b32.xlu0 %v1189, 24
        %v1213 = vpop.permute.xlu0 %1212
        %1216 = vrot.lane.b32.xlu0 %v1193, 32
        %v1217 = vpop.permute.xlu0 %1216
        %1220 = vrot.lane.b32.xlu0 %v1197, 40
        %v1221 = vpop.permute.xlu0 %1220
        %1224 = vrot.lane.b32.xlu0 %v1201, 48
        %v1225 = vpop.permute.xlu0 %1224
        %1228 = vrot.lane.b32.xlu0 %v1202, 56
        %v1229 = vpop.permute.xlu0 %1228
        %v1231 = vsel %vm163, %v1177, %v1205
        %v1232 = vsel %vm165, %v1231, %v1209
        %v1233 = vsel %vm167, %v1232, %v1213
        %v1234 = vsel %vm169, %v1233, %v1217
        %v1235 = vsel %vm171, %v1234, %v1221
        %v1236 = vsel %vm173, %v1235, %v1225
        %v1237 = vsel %vm175, %v1236, %v1229
        %1239 = vrot.lane.b32.xlu0 %v931, 116
        %v1240 = vpop.permute.xlu0 %1239
        %1242 = vrot.lane.b32.xlu0 %v931, 4
        %v1243 = vpop.permute.xlu0 %1242
        %v1245 = vsel %vm972, %v1240, %v1243
        %1246 = vrot.lane.b32.xlu0 %v931, 100
        %v1247 = vpop.permute.xlu0 %1246
        %v1249 = vsel %vm972, %v1247, %v1240
        %1250 = vrot.lane.b32.xlu0 %v931, 84
        %v1251 = vpop.permute.xlu0 %1250
        %v1253 = vsel %vm972, %v1251, %v1247
        %1254 = vrot.lane.b32.xlu0 %v931, 68
        %v1255 = vpop.permute.xlu0 %1254
        %v1257 = vsel %vm972, %v1255, %v1251
        %1258 = vrot.lane.b32.xlu0 %v931, 52
        %v1259 = vpop.permute.xlu0 %1258
        %v1261 = vsel %vm972, %v1259, %v1255
        %1262 = vrot.lane.b32.xlu0 %v931, 36
        %v1263 = vpop.permute.xlu0 %1262
        %v1265 = vsel %vm972, %v1263, %v1259
        %1266 = vrot.lane.b32.xlu0 %v931, 20
        %v1267 = vpop.permute.xlu0 %1266
        %v1269 = vsel %vm972, %v1267, %v1263
        %v1270 = vsel %vm972, %v1243, %v1267
        %1272 = vrot.lane.b32.xlu0 %v1249, 8
        %v1273 = vpop.permute.xlu0 %1272
        %1276 = vrot.lane.b32.xlu0 %v1253, 16
        %v1277 = vpop.permute.xlu0 %1276
        %1280 = vrot.lane.b32.xlu0 %v1257, 24
        %v1281 = vpop.permute.xlu0 %1280
        %1284 = vrot.lane.b32.xlu0 %v1261, 32
        %v1285 = vpop.permute.xlu0 %1284
        %1288 = vrot.lane.b32.xlu0 %v1265, 40
        %v1289 = vpop.permute.xlu0 %1288
        %1292 = vrot.lane.b32.xlu0 %v1269, 48
        %v1293 = vpop.permute.xlu0 %1292
        %1296 = vrot.lane.b32.xlu0 %v1270, 56
        %v1297 = vpop.permute.xlu0 %1296
        %v1299 = vsel %vm163, %v1245, %v1273
        %v1300 = vsel %vm165, %v1299, %v1277
        %v1301 = vsel %vm167, %v1300, %v1281
        %v1302 = vsel %vm169, %v1301, %v1285
        %v1303 = vsel %vm171, %v1302, %v1289
        %v1304 = vsel %vm173, %v1303, %v1293
        %v1305 = vsel %vm175, %v1304, %v1297
        %1307 = vrot.lane.b32.xlu0 %v942, 116
        %v1308 = vpop.permute.xlu0 %1307
        %1310 = vrot.lane.b32.xlu0 %v942, 4
        %v1311 = vpop.permute.xlu0 %1310
        %v1313 = vsel %vm972, %v1308, %v1311
        %1314 = vrot.lane.b32.xlu0 %v942, 100
        %v1315 = vpop.permute.xlu0 %1314
        %v1317 = vsel %vm972, %v1315, %v1308
        %1318 = vrot.lane.b32.xlu0 %v942, 84
        %v1319 = vpop.permute.xlu0 %1318
        %v1321 = vsel %vm972, %v1319, %v1315
        %1322 = vrot.lane.b32.xlu0 %v942, 68
        %v1323 = vpop.permute.xlu0 %1322
        %v1325 = vsel %vm972, %v1323, %v1319
        %1326 = vrot.lane.b32.xlu0 %v942, 52
        %v1327 = vpop.permute.xlu0 %1326
        %v1329 = vsel %vm972, %v1327, %v1323
        %1330 = vrot.lane.b32.xlu0 %v942, 36
        %v1331 = vpop.permute.xlu0 %1330
        %v1333 = vsel %vm972, %v1331, %v1327
        %1334 = vrot.lane.b32.xlu0 %v942, 20
        %v1335 = vpop.permute.xlu0 %1334
        %v1337 = vsel %vm972, %v1335, %v1331
        %v1338 = vsel %vm972, %v1311, %v1335
        %1340 = vrot.lane.b32.xlu0 %v1317, 8
        %v1341 = vpop.permute.xlu0 %1340
        %1344 = vrot.lane.b32.xlu0 %v1321, 16
        %v1345 = vpop.permute.xlu0 %1344
        %1348 = vrot.lane.b32.xlu0 %v1325, 24
        %v1349 = vpop.permute.xlu0 %1348
        %1352 = vrot.lane.b32.xlu0 %v1329, 32
        %v1353 = vpop.permute.xlu0 %1352
        %1356 = vrot.lane.b32.xlu0 %v1333, 40
        %v1357 = vpop.permute.xlu0 %1356
        %1360 = vrot.lane.b32.xlu0 %v1337, 48
        %v1361 = vpop.permute.xlu0 %1360
        %1364 = vrot.lane.b32.xlu0 %v1338, 56
        %v1365 = vpop.permute.xlu0 %1364
        %v1367 = vsel %vm163, %v1313, %v1341
        %v1368 = vsel %vm165, %v1367, %v1345
        %v1369 = vsel %vm167, %v1368, %v1349
        %v1370 = vsel %vm169, %v1369, %v1353
        %v1371 = vsel %vm171, %v1370, %v1357
        %v1372 = vsel %vm173, %v1371, %v1361
        %v1373 = vsel %vm175, %v1372, %v1365
        %1375 = vrot.lane.b32.xlu0 %v953, 116
        %v1376 = vpop.permute.xlu0 %1375
        %1378 = vrot.lane.b32.xlu0 %v953, 4
        %v1379 = vpop.permute.xlu0 %1378
        %v1381 = vsel %vm972, %v1376, %v1379
        %1382 = vrot.lane.b32.xlu0 %v953, 100
        %v1383 = vpop.permute.xlu0 %1382
        %v1385 = vsel %vm972, %v1383, %v1376
        %1386 = vrot.lane.b32.xlu0 %v953, 84
        %v1387 = vpop.permute.xlu0 %1386
        %v1389 = vsel %vm972, %v1387, %v1383
        %1390 = vrot.lane.b32.xlu0 %v953, 68
        %v1391 = vpop.permute.xlu0 %1390
        %v1393 = vsel %vm972, %v1391, %v1387
        %1394 = vrot.lane.b32.xlu0 %v953, 52
        %v1395 = vpop.permute.xlu0 %1394
        %v1397 = vsel %vm972, %v1395, %v1391
        %1398 = vrot.lane.b32.xlu0 %v953, 36
        %v1399 = vpop.permute.xlu0 %1398
        %v1401 = vsel %vm972, %v1399, %v1395
        %1402 = vrot.lane.b32.xlu0 %v953, 20
        %v1403 = vpop.permute.xlu0 %1402
        %v1405 = vsel %vm972, %v1403, %v1399
        %v1406 = vsel %vm972, %v1379, %v1403
        %1408 = vrot.lane.b32.xlu0 %v1385, 8
        %v1409 = vpop.permute.xlu0 %1408
        %1412 = vrot.lane.b32.xlu0 %v1389, 16
        %v1413 = vpop.permute.xlu0 %1412
        %1416 = vrot.lane.b32.xlu0 %v1393, 24
        %v1417 = vpop.permute.xlu0 %1416
        %1420 = vrot.lane.b32.xlu0 %v1397, 32
        %v1421 = vpop.permute.xlu0 %1420
        %1424 = vrot.lane.b32.xlu0 %v1401, 40
        %v1425 = vpop.permute.xlu0 %1424
        %1428 = vrot.lane.b32.xlu0 %v1405, 48
        %v1429 = vpop.permute.xlu0 %1428
        %1432 = vrot.lane.b32.xlu0 %v1406, 56
        %v1433 = vpop.permute.xlu0 %1432
        %v1435 = vsel %vm163, %v1381, %v1409
        %v1436 = vsel %vm165, %v1435, %v1413
        %v1437 = vsel %vm167, %v1436, %v1417
        %v1438 = vsel %vm169, %v1437, %v1421
        %v1439 = vsel %vm171, %v1438, %v1425
        %v1440 = vsel %vm173, %v1439, %v1429
        %v1441 = vsel %vm175, %v1440, %v1433
        %1443 = vrot.lane.b32.xlu0 %v964, 116
        %v1444 = vpop.permute.xlu0 %1443
        %1446 = vrot.lane.b32.xlu0 %v964, 4
        %v1447 = vpop.permute.xlu0 %1446
        %v1449 = vsel %vm972, %v1444, %v1447
        %1450 = vrot.lane.b32.xlu0 %v964, 100
        %v1451 = vpop.permute.xlu0 %1450
        %v1453 = vsel %vm972, %v1451, %v1444
        %1454 = vrot.lane.b32.xlu0 %v964, 84
        %v1455 = vpop.permute.xlu0 %1454
        %v1457 = vsel %vm972, %v1455, %v1451
        %1458 = vrot.lane.b32.xlu0 %v964, 68
        %v1459 = vpop.permute.xlu0 %1458
        %v1461 = vsel %vm972, %v1459, %v1455
        %1462 = vrot.lane.b32.xlu0 %v964, 52
        %v1463 = vpop.permute.xlu0 %1462
        %v1465 = vsel %vm972, %v1463, %v1459
        %1466 = vrot.lane.b32.xlu0 %v964, 36
        %v1467 = vpop.permute.xlu0 %1466
        %v1469 = vsel %vm972, %v1467, %v1463
        %1470 = vrot.lane.b32.xlu0 %v964, 20
        %v1471 = vpop.permute.xlu0 %1470
        %v1473 = vsel %vm972, %v1471, %v1467
        %v1474 = vsel %vm972, %v1447, %v1471
        %1476 = vrot.lane.b32.xlu0 %v1453, 8
        %v1477 = vpop.permute.xlu0 %1476
        %1480 = vrot.lane.b32.xlu0 %v1457, 16
        %v1481 = vpop.permute.xlu0 %1480
        %1484 = vrot.lane.b32.xlu0 %v1461, 24
        %v1485 = vpop.permute.xlu0 %1484
        %1488 = vrot.lane.b32.xlu0 %v1465, 32
        %v1489 = vpop.permute.xlu0 %1488
        %1492 = vrot.lane.b32.xlu0 %v1469, 40
        %v1493 = vpop.permute.xlu0 %1492
        %1496 = vrot.lane.b32.xlu0 %v1473, 48
        %v1497 = vpop.permute.xlu0 %1496
        %1500 = vrot.lane.b32.xlu0 %v1474, 56
        %v1501 = vpop.permute.xlu0 %1500
        %v1503 = vsel %vm163, %v1449, %v1477
        %v1504 = vsel %vm165, %v1503, %v1481
        %v1505 = vsel %vm167, %v1504, %v1485
        %v1506 = vsel %vm169, %v1505, %v1489
        %v1507 = vsel %vm171, %v1506, %v1493
        %v1508 = vsel %vm173, %v1507, %v1497
        %v1509 = vsel %vm175, %v1508, %v1501
        %1511 = vrot.lane.b32.xlu0 %v1101, 64
        %v1512 = vpop.permute.xlu0 %1511
        %1515 = vrot.lane.b32.xlu0 %v1237, 64
        %v1516 = vpop.permute.xlu0 %1515
        %1519 = vrot.lane.b32.xlu0 %v1373, 64
        %v1520 = vpop.permute.xlu0 %1519
        %1523 = vrot.lane.b32.xlu0 %v1509, 64
        %v1524 = vpop.permute.xlu0 %1523
        %v1526 = vsel %vm396, %v1033, %v1512
        %v1527 = vsel %vm396, %v1169, %v1516
        %v1528 = vsel %vm396, %v1305, %v1520
        %v1529 = vsel %vm396, %v1441, %v1524
        %s1530 = scalar_lea.vmem %s132, 128 [#allocation5]
        %1531 = vst [vmem:[%s1530] sm:$0xff] %v1526
        %1532 = vst [vmem:[%s1530 + $0x8] sm:$0xff] %v1527
        %1533 = vst [vmem:[%s1530 + $0x10] sm:$0xff] %v1528
        %1534 = vst [vmem:[%s1530 + $0x18] sm:$0xff] %v1529
        %1535 = vrot.lane.b32.xlu0 %v887, 124
        %v1536 = vpop.permute.xlu0 %1535
        %1538 = vrot.lane.b32.xlu0 %v887, 108
        %v1539 = vpop.permute.xlu0 %1538
        %1541 = vrot.lane.b32.xlu0 %v887, 92
        %v1542 = vpop.permute.xlu0 %1541
        %1544 = vrot.lane.b32.xlu0 %v887, 76
        %v1545 = vpop.permute.xlu0 %1544
        %v1547 = vsel %vm163, %v1536, %v967
        %v1548 = vsel %vm165, %v1547, %v1539
        %v1549 = vsel %vm167, %v1548, %v975
        %v1550 = vsel %vm169, %v1549, %v1542
        %v1551 = vsel %vm171, %v1550, %v979
        %v1552 = vsel %vm173, %v1551, %v1545
        %v1553 = vsel %vm175, %v1552, %v983
        %1554 = vrot.lane.b32.xlu0 %v898, 124
        %v1555 = vpop.permute.xlu0 %1554
        %1557 = vrot.lane.b32.xlu0 %v898, 108
        %v1558 = vpop.permute.xlu0 %1557
        %1560 = vrot.lane.b32.xlu0 %v898, 92
        %v1561 = vpop.permute.xlu0 %1560
        %1563 = vrot.lane.b32.xlu0 %v898, 76
        %v1564 = vpop.permute.xlu0 %1563
        %v1566 = vsel %vm163, %v1555, %v1036
        %v1567 = vsel %vm165, %v1566, %v1558
        %v1568 = vsel %vm167, %v1567, %v1043
        %v1569 = vsel %vm169, %v1568, %v1561
        %v1570 = vsel %vm171, %v1569, %v1047
        %v1571 = vsel %vm173, %v1570, %v1564
        %v1572 = vsel %vm175, %v1571, %v1051
        %1573 = vrot.lane.b32.xlu0 %v909, 124
        %v1574 = vpop.permute.xlu0 %1573
        %1576 = vrot.lane.b32.xlu0 %v909, 108
        %v1577 = vpop.permute.xlu0 %1576
        %1579 = vrot.lane.b32.xlu0 %v909, 92
        %v1580 = vpop.permute.xlu0 %1579
        %1582 = vrot.lane.b32.xlu0 %v909, 76
        %v1583 = vpop.permute.xlu0 %1582
        %v1585 = vsel %vm163, %v1574, %v1104
        %v1586 = vsel %vm165, %v1585, %v1577
        %v1587 = vsel %vm167, %v1586, %v1111
        %v1588 = vsel %vm169, %v1587, %v1580
        %v1589 = vsel %vm171, %v1588, %v1115
        %v1590 = vsel %vm173, %v1589, %v1583
        %v1591 = vsel %vm175, %v1590, %v1119
        %1592 = vrot.lane.b32.xlu0 %v920, 124
        %v1593 = vpop.permute.xlu0 %1592
        %1595 = vrot.lane.b32.xlu0 %v920, 108
        %v1596 = vpop.permute.xlu0 %1595
        %1598 = vrot.lane.b32.xlu0 %v920, 92
        %v1599 = vpop.permute.xlu0 %1598
        %1601 = vrot.lane.b32.xlu0 %v920, 76
        %v1602 = vpop.permute.xlu0 %1601
        %v1604 = vsel %vm163, %v1593, %v1172
        %v1605 = vsel %vm165, %v1604, %v1596
        %v1606 = vsel %vm167, %v1605, %v1179
        %v1607 = vsel %vm169, %v1606, %v1599
        %v1608 = vsel %vm171, %v1607, %v1183
        %v1609 = vsel %vm173, %v1608, %v1602
        %v1610 = vsel %vm175, %v1609, %v1187
        %1611 = vrot.lane.b32.xlu0 %v931, 124
        %v1612 = vpop.permute.xlu0 %1611
        %1614 = vrot.lane.b32.xlu0 %v931, 108
        %v1615 = vpop.permute.xlu0 %1614
        %1617 = vrot.lane.b32.xlu0 %v931, 92
        %v1618 = vpop.permute.xlu0 %1617
        %1620 = vrot.lane.b32.xlu0 %v931, 76
        %v1621 = vpop.permute.xlu0 %1620
        %v1623 = vsel %vm163, %v1612, %v1240
        %v1624 = vsel %vm165, %v1623, %v1615
        %v1625 = vsel %vm167, %v1624, %v1247
        %v1626 = vsel %vm169, %v1625, %v1618
        %v1627 = vsel %vm171, %v1626, %v1251
        %v1628 = vsel %vm173, %v1627, %v1621
        %v1629 = vsel %vm175, %v1628, %v1255
        %1630 = vrot.lane.b32.xlu0 %v942, 124
        %v1631 = vpop.permute.xlu0 %1630
        %1633 = vrot.lane.b32.xlu0 %v942, 108
        %v1634 = vpop.permute.xlu0 %1633
        %1636 = vrot.lane.b32.xlu0 %v942, 92
        %v1637 = vpop.permute.xlu0 %1636
        %1639 = vrot.lane.b32.xlu0 %v942, 76
        %v1640 = vpop.permute.xlu0 %1639
        %v1642 = vsel %vm163, %v1631, %v1308
        %v1643 = vsel %vm165, %v1642, %v1634
        %v1644 = vsel %vm167, %v1643, %v1315
        %v1645 = vsel %vm169, %v1644, %v1637
        %v1646 = vsel %vm171, %v1645, %v1319
        %v1647 = vsel %vm173, %v1646, %v1640
        %v1648 = vsel %vm175, %v1647, %v1323
        %1649 = vrot.lane.b32.xlu0 %v953, 124
        %v1650 = vpop.permute.xlu0 %1649
        %1652 = vrot.lane.b32.xlu0 %v953, 108
        %v1653 = vpop.permute.xlu0 %1652
        %1655 = vrot.lane.b32.xlu0 %v953, 92
        %v1656 = vpop.permute.xlu0 %1655
        %1658 = vrot.lane.b32.xlu0 %v953, 76
        %v1659 = vpop.permute.xlu0 %1658
        %v1661 = vsel %vm163, %v1650, %v1376
        %v1662 = vsel %vm165, %v1661, %v1653
        %v1663 = vsel %vm167, %v1662, %v1383
        %v1664 = vsel %vm169, %v1663, %v1656
        %v1665 = vsel %vm171, %v1664, %v1387
        %v1666 = vsel %vm173, %v1665, %v1659
        %v1667 = vsel %vm175, %v1666, %v1391
        %1668 = vrot.lane.b32.xlu0 %v964, 124
        %v1669 = vpop.permute.xlu0 %1668
        %1671 = vrot.lane.b32.xlu0 %v964, 108
        %v1672 = vpop.permute.xlu0 %1671
        %1674 = vrot.lane.b32.xlu0 %v964, 92
        %v1675 = vpop.permute.xlu0 %1674
        %1677 = vrot.lane.b32.xlu0 %v964, 76
        %v1678 = vpop.permute.xlu0 %1677
        %v1680 = vsel %vm163, %v1669, %v1444
        %v1681 = vsel %vm165, %v1680, %v1672
        %v1682 = vsel %vm167, %v1681, %v1451
        %v1683 = vsel %vm169, %v1682, %v1675
        %v1684 = vsel %vm171, %v1683, %v1455
        %v1685 = vsel %vm173, %v1684, %v1678
        %v1686 = vsel %vm175, %v1685, %v1459
        %1688 = vrot.lane.b32.xlu0 %v1572, 64
        %v1689 = vpop.permute.xlu0 %1688
        %1692 = vrot.lane.b32.xlu0 %v1610, 64
        %v1693 = vpop.permute.xlu0 %1692
        %1696 = vrot.lane.b32.xlu0 %v1648, 64
        %v1697 = vpop.permute.xlu0 %1696
        %1700 = vrot.lane.b32.xlu0 %v1686, 64
        %v1701 = vpop.permute.xlu0 %1700
        %v1703 = vsel %vm396, %v1553, %v1689
        %v1704 = vsel %vm396, %v1591, %v1693
        %v1705 = vsel %vm396, %v1629, %v1697
        %v1706 = vsel %vm396, %v1667, %v1701
        %1707 = vst [vmem:[%s1530 + $0x20] sm:$0xff] %v1703
        %1708 = vst [vmem:[%s1530 + $0x28] sm:$0xff] %v1704
        %1709 = vst [vmem:[%s1530 + $0x30] sm:$0xff] %v1705
        %1710 = vst [vmem:[%s1530 + $0x38] sm:$0xff] %v1706
        %v1711 = vld [vmem:[%s114] sm:$0xff]
        %v1712 = vld [vmem:[%s114 + $0x8] sm:$0xff]
        %v1713 = vld [vmem:[%s114 + $0x10] sm:$0xff]
        %v1714 = vld [vmem:[%s114 + $0x18] sm:$0xff]
        %v1715 = vld [vmem:[%s114 + $0x20] sm:$0xff]
        %v1716 = vld [vmem:[%s114 + $0x28] sm:$0xff]
        %v1717 = vld [vmem:[%s114 + $0x30] sm:$0xff]
        %v1718 = vld [vmem:[%s114 + $0x38] sm:$0xff]
        %v1719 = vld [vmem:[%s114 + $0x40] sm:$0xff]
        %v1720 = vld [vmem:[%s114 + $0x48] sm:$0xff]
        %v1721 = vld [vmem:[%s114 + $0x50] sm:$0xff]
        %v1722 = vld [vmem:[%s114 + $0x58] sm:$0xff]
        %v1723 = vld [vmem:[%s114 + $0x60] sm:$0xff]
        %v1724 = vld [vmem:[%s114 + $0x68] sm:$0xff]
        %v1725 = vld [vmem:[%s114 + $0x70] sm:$0xff]
        %v1726 = vld [vmem:[%s114 + $0x78] sm:$0xff]
        %1728 = vrot.lane.b32.xlu0 %v1711, 52
        %v1729 = vpop.permute.xlu0 %1728
        %1731 = vrot.lane.b32.xlu0 %v1711, 68
        %v1732 = vpop.permute.xlu0 %1731
        %v1734 = vsel %vm972, %v1729, %v1732
        %1735 = vrot.lane.b32.xlu0 %v1711, 36
        %v1736 = vpop.permute.xlu0 %1735
        %v1738 = vsel %vm972, %v1736, %v1729
        %1739 = vrot.lane.b32.xlu0 %v1711, 20
        %v1740 = vpop.permute.xlu0 %1739
        %v1742 = vsel %vm972, %v1740, %v1736
        %1743 = vrot.lane.b32.xlu0 %v1711, 4
        %v1744 = vpop.permute.xlu0 %1743
        %v1746 = vsel %vm972, %v1744, %v1740
        %1748 = vrot.lane.b32.xlu0 %v1712, 116
        %v1749 = vpop.permute.xlu0 %1748
        %1751 = vrot.lane.b32.xlu0 %v1712, 4
        %v1752 = vpop.permute.xlu0 %1751
        %v1754 = vsel %vm972, %v1749, %v1752
        %1755 = vrot.lane.b32.xlu0 %v1712, 100
        %v1756 = vpop.permute.xlu0 %1755
        %v1758 = vsel %vm972, %v1756, %v1749
        %1759 = vrot.lane.b32.xlu0 %v1712, 84
        %v1760 = vpop.permute.xlu0 %1759
        %v1762 = vsel %vm972, %v1760, %v1756
        %1763 = vrot.lane.b32.xlu0 %v1712, 68
        %v1764 = vpop.permute.xlu0 %1763
        %v1766 = vsel %vm972, %v1764, %v1760
        %1768 = vrot.lane.b32.xlu0 %v1738, 8
        %v1769 = vpop.permute.xlu0 %1768
        %1772 = vrot.lane.b32.xlu0 %v1742, 16
        %v1773 = vpop.permute.xlu0 %1772
        %1776 = vrot.lane.b32.xlu0 %v1746, 24
        %v1777 = vpop.permute.xlu0 %1776
        %1780 = vrot.lane.b32.xlu0 %v1754, 32
        %v1781 = vpop.permute.xlu0 %1780
        %1784 = vrot.lane.b32.xlu0 %v1758, 40
        %v1785 = vpop.permute.xlu0 %1784
        %1788 = vrot.lane.b32.xlu0 %v1762, 48
        %v1789 = vpop.permute.xlu0 %1788
        %1792 = vrot.lane.b32.xlu0 %v1766, 56
        %v1793 = vpop.permute.xlu0 %1792
        %v1795 = vsel %vm163, %v1734, %v1769
        %v1796 = vsel %vm165, %v1795, %v1773
        %v1797 = vsel %vm167, %v1796, %v1777
        %v1798 = vsel %vm169, %v1797, %v1781
        %v1799 = vsel %vm171, %v1798, %v1785
        %v1800 = vsel %vm173, %v1799, %v1789
        %v1801 = vsel %vm175, %v1800, %v1793
        %1803 = vrot.lane.b32.xlu0 %v1713, 52
        %v1804 = vpop.permute.xlu0 %1803
        %1806 = vrot.lane.b32.xlu0 %v1713, 68
        %v1807 = vpop.permute.xlu0 %1806
        %v1809 = vsel %vm972, %v1804, %v1807
        %1810 = vrot.lane.b32.xlu0 %v1713, 36
        %v1811 = vpop.permute.xlu0 %1810
        %v1813 = vsel %vm972, %v1811, %v1804
        %1814 = vrot.lane.b32.xlu0 %v1713, 20
        %v1815 = vpop.permute.xlu0 %1814
        %v1817 = vsel %vm972, %v1815, %v1811
        %1818 = vrot.lane.b32.xlu0 %v1713, 4
        %v1819 = vpop.permute.xlu0 %1818
        %v1821 = vsel %vm972, %v1819, %v1815
        %1823 = vrot.lane.b32.xlu0 %v1714, 116
        %v1824 = vpop.permute.xlu0 %1823
        %1826 = vrot.lane.b32.xlu0 %v1714, 4
        %v1827 = vpop.permute.xlu0 %1826
        %v1829 = vsel %vm972, %v1824, %v1827
        %1830 = vrot.lane.b32.xlu0 %v1714, 100
        %v1831 = vpop.permute.xlu0 %1830
        %v1833 = vsel %vm972, %v1831, %v1824
        %1834 = vrot.lane.b32.xlu0 %v1714, 84
        %v1835 = vpop.permute.xlu0 %1834
        %v1837 = vsel %vm972, %v1835, %v1831
        %1838 = vrot.lane.b32.xlu0 %v1714, 68
        %v1839 = vpop.permute.xlu0 %1838
        %v1841 = vsel %vm972, %v1839, %v1835
        %1843 = vrot.lane.b32.xlu0 %v1813, 8
        %v1844 = vpop.permute.xlu0 %1843
        %1847 = vrot.lane.b32.xlu0 %v1817, 16
        %v1848 = vpop.permute.xlu0 %1847
        %1851 = vrot.lane.b32.xlu0 %v1821, 24
        %v1852 = vpop.permute.xlu0 %1851
        %1855 = vrot.lane.b32.xlu0 %v1829, 32
        %v1856 = vpop.permute.xlu0 %1855
        %1859 = vrot.lane.b32.xlu0 %v1833, 40
        %v1860 = vpop.permute.xlu0 %1859
        %1863 = vrot.lane.b32.xlu0 %v1837, 48
        %v1864 = vpop.permute.xlu0 %1863
        %1867 = vrot.lane.b32.xlu0 %v1841, 56
        %v1868 = vpop.permute.xlu0 %1867
        %v1870 = vsel %vm163, %v1809, %v1844
        %v1871 = vsel %vm165, %v1870, %v1848
        %v1872 = vsel %vm167, %v1871, %v1852
        %v1873 = vsel %vm169, %v1872, %v1856
        %v1874 = vsel %vm171, %v1873, %v1860
        %v1875 = vsel %vm173, %v1874, %v1864
        %v1876 = vsel %vm175, %v1875, %v1868
        %1878 = vrot.lane.b32.xlu0 %v1715, 52
        %v1879 = vpop.permute.xlu0 %1878
        %1881 = vrot.lane.b32.xlu0 %v1715, 68
        %v1882 = vpop.permute.xlu0 %1881
        %v1884 = vsel %vm972, %v1879, %v1882
        %1885 = vrot.lane.b32.xlu0 %v1715, 36
        %v1886 = vpop.permute.xlu0 %1885
        %v1888 = vsel %vm972, %v1886, %v1879
        %1889 = vrot.lane.b32.xlu0 %v1715, 20
        %v1890 = vpop.permute.xlu0 %1889
        %v1892 = vsel %vm972, %v1890, %v1886
        %1893 = vrot.lane.b32.xlu0 %v1715, 4
        %v1894 = vpop.permute.xlu0 %1893
        %v1896 = vsel %vm972, %v1894, %v1890
        %1898 = vrot.lane.b32.xlu0 %v1716, 116
        %v1899 = vpop.permute.xlu0 %1898
        %1901 = vrot.lane.b32.xlu0 %v1716, 4
        %v1902 = vpop.permute.xlu0 %1901
        %v1904 = vsel %vm972, %v1899, %v1902
        %1905 = vrot.lane.b32.xlu0 %v1716, 100
        %v1906 = vpop.permute.xlu0 %1905
        %v1908 = vsel %vm972, %v1906, %v1899
        %1909 = vrot.lane.b32.xlu0 %v1716, 84
        %v1910 = vpop.permute.xlu0 %1909
        %v1912 = vsel %vm972, %v1910, %v1906
        %1913 = vrot.lane.b32.xlu0 %v1716, 68
        %v1914 = vpop.permute.xlu0 %1913
        %v1916 = vsel %vm972, %v1914, %v1910
        %1918 = vrot.lane.b32.xlu0 %v1888, 8
        %v1919 = vpop.permute.xlu0 %1918
        %1922 = vrot.lane.b32.xlu0 %v1892, 16
        %v1923 = vpop.permute.xlu0 %1922
        %1926 = vrot.lane.b32.xlu0 %v1896, 24
        %v1927 = vpop.permute.xlu0 %1926
        %1930 = vrot.lane.b32.xlu0 %v1904, 32
        %v1931 = vpop.permute.xlu0 %1930
        %1934 = vrot.lane.b32.xlu0 %v1908, 40
        %v1935 = vpop.permute.xlu0 %1934
        %1938 = vrot.lane.b32.xlu0 %v1912, 48
        %v1939 = vpop.permute.xlu0 %1938
        %1942 = vrot.lane.b32.xlu0 %v1916, 56
        %v1943 = vpop.permute.xlu0 %1942
        %v1945 = vsel %vm163, %v1884, %v1919
        %v1946 = vsel %vm165, %v1945, %v1923
        %v1947 = vsel %vm167, %v1946, %v1927
        %v1948 = vsel %vm169, %v1947, %v1931
        %v1949 = vsel %vm171, %v1948, %v1935
        %v1950 = vsel %vm173, %v1949, %v1939
        %v1951 = vsel %vm175, %v1950, %v1943
        %1953 = vrot.lane.b32.xlu0 %v1717, 52
        %v1954 = vpop.permute.xlu0 %1953
        %1956 = vrot.lane.b32.xlu0 %v1717, 68
        %v1957 = vpop.permute.xlu0 %1956
        %v1959 = vsel %vm972, %v1954, %v1957
        %1960 = vrot.lane.b32.xlu0 %v1717, 36
        %v1961 = vpop.permute.xlu0 %1960
        %v1963 = vsel %vm972, %v1961, %v1954
        %1964 = vrot.lane.b32.xlu0 %v1717, 20
        %v1965 = vpop.permute.xlu0 %1964
        %v1967 = vsel %vm972, %v1965, %v1961
        %1968 = vrot.lane.b32.xlu0 %v1717, 4
        %v1969 = vpop.permute.xlu0 %1968
        %v1971 = vsel %vm972, %v1969, %v1965
        %1973 = vrot.lane.b32.xlu0 %v1718, 116
        %v1974 = vpop.permute.xlu0 %1973
        %1976 = vrot.lane.b32.xlu0 %v1718, 4
        %v1977 = vpop.permute.xlu0 %1976
        %v1979 = vsel %vm972, %v1974, %v1977
        %1980 = vrot.lane.b32.xlu0 %v1718, 100
        %v1981 = vpop.permute.xlu0 %1980
        %v1983 = vsel %vm972, %v1981, %v1974
        %1984 = vrot.lane.b32.xlu0 %v1718, 84
        %v1985 = vpop.permute.xlu0 %1984
        %v1987 = vsel %vm972, %v1985, %v1981
        %1988 = vrot.lane.b32.xlu0 %v1718, 68
        %v1989 = vpop.permute.xlu0 %1988
        %v1991 = vsel %vm972, %v1989, %v1985
        %1993 = vrot.lane.b32.xlu0 %v1963, 8
        %v1994 = vpop.permute.xlu0 %1993
        %1997 = vrot.lane.b32.xlu0 %v1967, 16
        %v1998 = vpop.permute.xlu0 %1997
        %2001 = vrot.lane.b32.xlu0 %v1971, 24
        %v2002 = vpop.permute.xlu0 %2001
        %2005 = vrot.lane.b32.xlu0 %v1979, 32
        %v2006 = vpop.permute.xlu0 %2005
        %2009 = vrot.lane.b32.xlu0 %v1983, 40
        %v2010 = vpop.permute.xlu0 %2009
        %2013 = vrot.lane.b32.xlu0 %v1987, 48
        %v2014 = vpop.permute.xlu0 %2013
        %2017 = vrot.lane.b32.xlu0 %v1991, 56
        %v2018 = vpop.permute.xlu0 %2017
        %v2020 = vsel %vm163, %v1959, %v1994
        %v2021 = vsel %vm165, %v2020, %v1998
        %v2022 = vsel %vm167, %v2021, %v2002
        %v2023 = vsel %vm169, %v2022, %v2006
        %v2024 = vsel %vm171, %v2023, %v2010
        %v2025 = vsel %vm173, %v2024, %v2014
        %v2026 = vsel %vm175, %v2025, %v2018
        %2028 = vrot.lane.b32.xlu0 %v1719, 52
        %v2029 = vpop.permute.xlu0 %2028
        %2031 = vrot.lane.b32.xlu0 %v1719, 68
        %v2032 = vpop.permute.xlu0 %2031
        %v2034 = vsel %vm972, %v2029, %v2032
        %2035 = vrot.lane.b32.xlu0 %v1719, 36
        %v2036 = vpop.permute.xlu0 %2035
        %v2038 = vsel %vm972, %v2036, %v2029
        %2039 = vrot.lane.b32.xlu0 %v1719, 20
        %v2040 = vpop.permute.xlu0 %2039
        %v2042 = vsel %vm972, %v2040, %v2036
        %2043 = vrot.lane.b32.xlu0 %v1719, 4
        %v2044 = vpop.permute.xlu0 %2043
        %v2046 = vsel %vm972, %v2044, %v2040
        %2048 = vrot.lane.b32.xlu0 %v1720, 116
        %v2049 = vpop.permute.xlu0 %2048
        %2051 = vrot.lane.b32.xlu0 %v1720, 4
        %v2052 = vpop.permute.xlu0 %2051
        %v2054 = vsel %vm972, %v2049, %v2052
        %2055 = vrot.lane.b32.xlu0 %v1720, 100
        %v2056 = vpop.permute.xlu0 %2055
        %v2058 = vsel %vm972, %v2056, %v2049
        %2059 = vrot.lane.b32.xlu0 %v1720, 84
        %v2060 = vpop.permute.xlu0 %2059
        %v2062 = vsel %vm972, %v2060, %v2056
        %2063 = vrot.lane.b32.xlu0 %v1720, 68
        %v2064 = vpop.permute.xlu0 %2063
        %v2066 = vsel %vm972, %v2064, %v2060
        %2068 = vrot.lane.b32.xlu0 %v2038, 8
        %v2069 = vpop.permute.xlu0 %2068
        %2072 = vrot.lane.b32.xlu0 %v2042, 16
        %v2073 = vpop.permute.xlu0 %2072
        %2076 = vrot.lane.b32.xlu0 %v2046, 24
        %v2077 = vpop.permute.xlu0 %2076
        %2080 = vrot.lane.b32.xlu0 %v2054, 32
        %v2081 = vpop.permute.xlu0 %2080
        %2084 = vrot.lane.b32.xlu0 %v2058, 40
        %v2085 = vpop.permute.xlu0 %2084
        %2088 = vrot.lane.b32.xlu0 %v2062, 48
        %v2089 = vpop.permute.xlu0 %2088
        %2092 = vrot.lane.b32.xlu0 %v2066, 56
        %v2093 = vpop.permute.xlu0 %2092
        %v2095 = vsel %vm163, %v2034, %v2069
        %v2096 = vsel %vm165, %v2095, %v2073
        %v2097 = vsel %vm167, %v2096, %v2077
        %v2098 = vsel %vm169, %v2097, %v2081
        %v2099 = vsel %vm171, %v2098, %v2085
        %v2100 = vsel %vm173, %v2099, %v2089
        %v2101 = vsel %vm175, %v2100, %v2093
        %2103 = vrot.lane.b32.xlu0 %v1721, 52
        %v2104 = vpop.permute.xlu0 %2103
        %2106 = vrot.lane.b32.xlu0 %v1721, 68
        %v2107 = vpop.permute.xlu0 %2106
        %v2109 = vsel %vm972, %v2104, %v2107
        %2110 = vrot.lane.b32.xlu0 %v1721, 36
        %v2111 = vpop.permute.xlu0 %2110
        %v2113 = vsel %vm972, %v2111, %v2104
        %2114 = vrot.lane.b32.xlu0 %v1721, 20
        %v2115 = vpop.permute.xlu0 %2114
        %v2117 = vsel %vm972, %v2115, %v2111
        %2118 = vrot.lane.b32.xlu0 %v1721, 4
        %v2119 = vpop.permute.xlu0 %2118
        %v2121 = vsel %vm972, %v2119, %v2115
        %2123 = vrot.lane.b32.xlu0 %v1722, 116
        %v2124 = vpop.permute.xlu0 %2123
        %2126 = vrot.lane.b32.xlu0 %v1722, 4
        %v2127 = vpop.permute.xlu0 %2126
        %v2129 = vsel %vm972, %v2124, %v2127
        %2130 = vrot.lane.b32.xlu0 %v1722, 100
        %v2131 = vpop.permute.xlu0 %2130
        %v2133 = vsel %vm972, %v2131, %v2124
        %2134 = vrot.lane.b32.xlu0 %v1722, 84
        %v2135 = vpop.permute.xlu0 %2134
        %v2137 = vsel %vm972, %v2135, %v2131
        %2138 = vrot.lane.b32.xlu0 %v1722, 68
        %v2139 = vpop.permute.xlu0 %2138
        %v2141 = vsel %vm972, %v2139, %v2135
        %2143 = vrot.lane.b32.xlu0 %v2113, 8
        %v2144 = vpop.permute.xlu0 %2143
        %2147 = vrot.lane.b32.xlu0 %v2117, 16
        %v2148 = vpop.permute.xlu0 %2147
        %2151 = vrot.lane.b32.xlu0 %v2121, 24
        %v2152 = vpop.permute.xlu0 %2151
        %2155 = vrot.lane.b32.xlu0 %v2129, 32
        %v2156 = vpop.permute.xlu0 %2155
        %2159 = vrot.lane.b32.xlu0 %v2133, 40
        %v2160 = vpop.permute.xlu0 %2159
        %2163 = vrot.lane.b32.xlu0 %v2137, 48
        %v2164 = vpop.permute.xlu0 %2163
        %2167 = vrot.lane.b32.xlu0 %v2141, 56
        %v2168 = vpop.permute.xlu0 %2167
        %v2170 = vsel %vm163, %v2109, %v2144
        %v2171 = vsel %vm165, %v2170, %v2148
        %v2172 = vsel %vm167, %v2171, %v2152
        %v2173 = vsel %vm169, %v2172, %v2156
        %v2174 = vsel %vm171, %v2173, %v2160
        %v2175 = vsel %vm173, %v2174, %v2164
        %v2176 = vsel %vm175, %v2175, %v2168
        %2178 = vrot.lane.b32.xlu0 %v1723, 52
        %v2179 = vpop.permute.xlu0 %2178
        %2181 = vrot.lane.b32.xlu0 %v1723, 68
        %v2182 = vpop.permute.xlu0 %2181
        %v2184 = vsel %vm972, %v2179, %v2182
        %2185 = vrot.lane.b32.xlu0 %v1723, 36
        %v2186 = vpop.permute.xlu0 %2185
        %v2188 = vsel %vm972, %v2186, %v2179
        %2189 = vrot.lane.b32.xlu0 %v1723, 20
        %v2190 = vpop.permute.xlu0 %2189
        %v2192 = vsel %vm972, %v2190, %v2186
        %2193 = vrot.lane.b32.xlu0 %v1723, 4
        %v2194 = vpop.permute.xlu0 %2193
        %v2196 = vsel %vm972, %v2194, %v2190
        %2198 = vrot.lane.b32.xlu0 %v1724, 116
        %v2199 = vpop.permute.xlu0 %2198
        %2201 = vrot.lane.b32.xlu0 %v1724, 4
        %v2202 = vpop.permute.xlu0 %2201
        %v2204 = vsel %vm972, %v2199, %v2202
        %2205 = vrot.lane.b32.xlu0 %v1724, 100
        %v2206 = vpop.permute.xlu0 %2205
        %v2208 = vsel %vm972, %v2206, %v2199
        %2209 = vrot.lane.b32.xlu0 %v1724, 84
        %v2210 = vpop.permute.xlu0 %2209
        %v2212 = vsel %vm972, %v2210, %v2206
        %2213 = vrot.lane.b32.xlu0 %v1724, 68
        %v2214 = vpop.permute.xlu0 %2213
        %v2216 = vsel %vm972, %v2214, %v2210
        %2218 = vrot.lane.b32.xlu0 %v2188, 8
        %v2219 = vpop.permute.xlu0 %2218
        %2222 = vrot.lane.b32.xlu0 %v2192, 16
        %v2223 = vpop.permute.xlu0 %2222
        %2226 = vrot.lane.b32.xlu0 %v2196, 24
        %v2227 = vpop.permute.xlu0 %2226
        %2230 = vrot.lane.b32.xlu0 %v2204, 32
        %v2231 = vpop.permute.xlu0 %2230
        %2234 = vrot.lane.b32.xlu0 %v2208, 40
        %v2235 = vpop.permute.xlu0 %2234
        %2238 = vrot.lane.b32.xlu0 %v2212, 48
        %v2239 = vpop.permute.xlu0 %2238
        %2242 = vrot.lane.b32.xlu0 %v2216, 56
        %v2243 = vpop.permute.xlu0 %2242
        %v2245 = vsel %vm163, %v2184, %v2219
        %v2246 = vsel %vm165, %v2245, %v2223
        %v2247 = vsel %vm167, %v2246, %v2227
        %v2248 = vsel %vm169, %v2247, %v2231
        %v2249 = vsel %vm171, %v2248, %v2235
        %v2250 = vsel %vm173, %v2249, %v2239
        %v2251 = vsel %vm175, %v2250, %v2243
        %2253 = vrot.lane.b32.xlu0 %v1725, 52
        %v2254 = vpop.permute.xlu0 %2253
        %2256 = vrot.lane.b32.xlu0 %v1725, 68
        %v2257 = vpop.permute.xlu0 %2256
        %v2259 = vsel %vm972, %v2254, %v2257
        %2260 = vrot.lane.b32.xlu0 %v1725, 36
        %v2261 = vpop.permute.xlu0 %2260
        %v2263 = vsel %vm972, %v2261, %v2254
        %2264 = vrot.lane.b32.xlu0 %v1725, 20
        %v2265 = vpop.permute.xlu0 %2264
        %v2267 = vsel %vm972, %v2265, %v2261
        %2268 = vrot.lane.b32.xlu0 %v1725, 4
        %v2269 = vpop.permute.xlu0 %2268
        %v2271 = vsel %vm972, %v2269, %v2265
        %2273 = vrot.lane.b32.xlu0 %v1726, 116
        %v2274 = vpop.permute.xlu0 %2273
        %2276 = vrot.lane.b32.xlu0 %v1726, 4
        %v2277 = vpop.permute.xlu0 %2276
        %v2279 = vsel %vm972, %v2274, %v2277
        %2280 = vrot.lane.b32.xlu0 %v1726, 100
        %v2281 = vpop.permute.xlu0 %2280
        %v2283 = vsel %vm972, %v2281, %v2274
        %2284 = vrot.lane.b32.xlu0 %v1726, 84
        %v2285 = vpop.permute.xlu0 %2284
        %v2287 = vsel %vm972, %v2285, %v2281
        %2288 = vrot.lane.b32.xlu0 %v1726, 68
        %v2289 = vpop.permute.xlu0 %2288
        %v2291 = vsel %vm972, %v2289, %v2285
        %2293 = vrot.lane.b32.xlu0 %v2263, 8
        %v2294 = vpop.permute.xlu0 %2293
        %2297 = vrot.lane.b32.xlu0 %v2267, 16
        %v2298 = vpop.permute.xlu0 %2297
        %2301 = vrot.lane.b32.xlu0 %v2271, 24
        %v2302 = vpop.permute.xlu0 %2301
        %2305 = vrot.lane.b32.xlu0 %v2279, 32
        %v2306 = vpop.permute.xlu0 %2305
        %2309 = vrot.lane.b32.xlu0 %v2283, 40
        %v2310 = vpop.permute.xlu0 %2309
        %2313 = vrot.lane.b32.xlu0 %v2287, 48
        %v2314 = vpop.permute.xlu0 %2313
        %2317 = vrot.lane.b32.xlu0 %v2291, 56
        %v2318 = vpop.permute.xlu0 %2317
        %v2320 = vsel %vm163, %v2259, %v2294
        %v2321 = vsel %vm165, %v2320, %v2298
        %v2322 = vsel %vm167, %v2321, %v2302
        %v2323 = vsel %vm169, %v2322, %v2306
        %v2324 = vsel %vm171, %v2323, %v2310
        %v2325 = vsel %vm173, %v2324, %v2314
        %v2326 = vsel %vm175, %v2325, %v2318
        %2328 = vrot.lane.b32.xlu0 %v1876, 64
        %v2329 = vpop.permute.xlu0 %2328
        %2332 = vrot.lane.b32.xlu0 %v2026, 64
        %v2333 = vpop.permute.xlu0 %2332
        %2336 = vrot.lane.b32.xlu0 %v2176, 64
        %v2337 = vpop.permute.xlu0 %2336
        %2340 = vrot.lane.b32.xlu0 %v2326, 64
        %v2341 = vpop.permute.xlu0 %2340
        %v2343 = vsel %vm396, %v1801, %v2329
        %v2344 = vsel %vm396, %v1951, %v2333
        %v2345 = vsel %vm396, %v2101, %v2337
        %v2346 = vsel %vm396, %v2251, %v2341
        %2347 = vst [vmem:[%s1530 + $0x40] sm:$0xff] %v2343
        %2348 = vst [vmem:[%s1530 + $0x48] sm:$0xff] %v2344
        %2349 = vst [vmem:[%s1530 + $0x50] sm:$0xff] %v2345
        %2350 = vst [vmem:[%s1530 + $0x58] sm:$0xff] %v2346
        %2351 = vrot.lane.b32.xlu0 %v1711, 60
        %v2352 = vpop.permute.xlu0 %2351
        %2354 = vrot.lane.b32.xlu0 %v1711, 44
        %v2355 = vpop.permute.xlu0 %2354
        %2357 = vrot.lane.b32.xlu0 %v1712, 28
        %v2358 = vpop.permute.xlu0 %2357
        %2360 = vrot.lane.b32.xlu0 %v1712, 20
        %v2361 = vpop.permute.xlu0 %2360
        %2363 = vrot.lane.b32.xlu0 %v1712, 12
        %v2364 = vpop.permute.xlu0 %2363
        %v2366 = vsel %vm163, %v2352, %v1729
        %v2367 = vsel %vm165, %v2366, %v2355
        %v2368 = vsel %vm167, %v2367, %v1736
        %v2369 = vsel %vm169, %v2368, %v2358
        %v2370 = vsel %vm171, %v2369, %v2361
        %v2371 = vsel %vm173, %v2370, %v2364
        %v2372 = vsel %vm175, %v2371, %v1752
        %2373 = vrot.lane.b32.xlu0 %v1713, 60
        %v2374 = vpop.permute.xlu0 %2373
        %2376 = vrot.lane.b32.xlu0 %v1713, 44
        %v2377 = vpop.permute.xlu0 %2376
        %2379 = vrot.lane.b32.xlu0 %v1714, 28
        %v2380 = vpop.permute.xlu0 %2379
        %2382 = vrot.lane.b32.xlu0 %v1714, 20
        %v2383 = vpop.permute.xlu0 %2382
        %2385 = vrot.lane.b32.xlu0 %v1714, 12
        %v2386 = vpop.permute.xlu0 %2385
        %v2388 = vsel %vm163, %v2374, %v1804
        %v2389 = vsel %vm165, %v2388, %v2377
        %v2390 = vsel %vm167, %v2389, %v1811
        %v2391 = vsel %vm169, %v2390, %v2380
        %v2392 = vsel %vm171, %v2391, %v2383
        %v2393 = vsel %vm173, %v2392, %v2386
        %v2394 = vsel %vm175, %v2393, %v1827
        %2395 = vrot.lane.b32.xlu0 %v1715, 60
        %v2396 = vpop.permute.xlu0 %2395
        %2398 = vrot.lane.b32.xlu0 %v1715, 44
        %v2399 = vpop.permute.xlu0 %2398
        %2401 = vrot.lane.b32.xlu0 %v1716, 28
        %v2402 = vpop.permute.xlu0 %2401
        %2404 = vrot.lane.b32.xlu0 %v1716, 20
        %v2405 = vpop.permute.xlu0 %2404
        %2407 = vrot.lane.b32.xlu0 %v1716, 12
        %v2408 = vpop.permute.xlu0 %2407
        %v2410 = vsel %vm163, %v2396, %v1879
        %v2411 = vsel %vm165, %v2410, %v2399
        %v2412 = vsel %vm167, %v2411, %v1886
        %v2413 = vsel %vm169, %v2412, %v2402
        %v2414 = vsel %vm171, %v2413, %v2405
        %v2415 = vsel %vm173, %v2414, %v2408
        %v2416 = vsel %vm175, %v2415, %v1902
        %2417 = vrot.lane.b32.xlu0 %v1717, 60
        %v2418 = vpop.permute.xlu0 %2417
        %2420 = vrot.lane.b32.xlu0 %v1717, 44
        %v2421 = vpop.permute.xlu0 %2420
        %2423 = vrot.lane.b32.xlu0 %v1718, 28
        %v2424 = vpop.permute.xlu0 %2423
        %2426 = vrot.lane.b32.xlu0 %v1718, 20
        %v2427 = vpop.permute.xlu0 %2426
        %2429 = vrot.lane.b32.xlu0 %v1718, 12
        %v2430 = vpop.permute.xlu0 %2429
        %v2432 = vsel %vm163, %v2418, %v1954
        %v2433 = vsel %vm165, %v2432, %v2421
        %v2434 = vsel %vm167, %v2433, %v1961
        %v2435 = vsel %vm169, %v2434, %v2424
        %v2436 = vsel %vm171, %v2435, %v2427
        %v2437 = vsel %vm173, %v2436, %v2430
        %v2438 = vsel %vm175, %v2437, %v1977
        %2439 = vrot.lane.b32.xlu0 %v1719, 60
        %v2440 = vpop.permute.xlu0 %2439
        %2442 = vrot.lane.b32.xlu0 %v1719, 44
        %v2443 = vpop.permute.xlu0 %2442
        %2445 = vrot.lane.b32.xlu0 %v1720, 28
        %v2446 = vpop.permute.xlu0 %2445
        %2448 = vrot.lane.b32.xlu0 %v1720, 20
        %v2449 = vpop.permute.xlu0 %2448
        %2451 = vrot.lane.b32.xlu0 %v1720, 12
        %v2452 = vpop.permute.xlu0 %2451
        %v2454 = vsel %vm163, %v2440, %v2029
        %v2455 = vsel %vm165, %v2454, %v2443
        %v2456 = vsel %vm167, %v2455, %v2036
        %v2457 = vsel %vm169, %v2456, %v2446
        %v2458 = vsel %vm171, %v2457, %v2449
        %v2459 = vsel %vm173, %v2458, %v2452
        %v2460 = vsel %vm175, %v2459, %v2052
        %2461 = vrot.lane.b32.xlu0 %v1721, 60
        %v2462 = vpop.permute.xlu0 %2461
        %2464 = vrot.lane.b32.xlu0 %v1721, 44
        %v2465 = vpop.permute.xlu0 %2464
        %2467 = vrot.lane.b32.xlu0 %v1722, 28
        %v2468 = vpop.permute.xlu0 %2467
        %2470 = vrot.lane.b32.xlu0 %v1722, 20
        %v2471 = vpop.permute.xlu0 %2470
        %2473 = vrot.lane.b32.xlu0 %v1722, 12
        %v2474 = vpop.permute.xlu0 %2473
        %v2476 = vsel %vm163, %v2462, %v2104
        %v2477 = vsel %vm165, %v2476, %v2465
        %v2478 = vsel %vm167, %v2477, %v2111
        %v2479 = vsel %vm169, %v2478, %v2468
        %v2480 = vsel %vm171, %v2479, %v2471
        %v2481 = vsel %vm173, %v2480, %v2474
        %v2482 = vsel %vm175, %v2481, %v2127
        %2483 = vrot.lane.b32.xlu0 %v1723, 60
        %v2484 = vpop.permute.xlu0 %2483
        %2486 = vrot.lane.b32.xlu0 %v1723, 44
        %v2487 = vpop.permute.xlu0 %2486
        %2489 = vrot.lane.b32.xlu0 %v1724, 28
        %v2490 = vpop.permute.xlu0 %2489
        %2492 = vrot.lane.b32.xlu0 %v1724, 20
        %v2493 = vpop.permute.xlu0 %2492
        %2495 = vrot.lane.b32.xlu0 %v1724, 12
        %v2496 = vpop.permute.xlu0 %2495
        %v2498 = vsel %vm163, %v2484, %v2179
        %v2499 = vsel %vm165, %v2498, %v2487
        %v2500 = vsel %vm167, %v2499, %v2186
        %v2501 = vsel %vm169, %v2500, %v2490
        %v2502 = vsel %vm171, %v2501, %v2493
        %v2503 = vsel %vm173, %v2502, %v2496
        %v2504 = vsel %vm175, %v2503, %v2202
        %2505 = vrot.lane.b32.xlu0 %v1725, 60
        %v2506 = vpop.permute.xlu0 %2505
        %2508 = vrot.lane.b32.xlu0 %v1725, 44
        %v2509 = vpop.permute.xlu0 %2508
        %2511 = vrot.lane.b32.xlu0 %v1726, 28
        %v2512 = vpop.permute.xlu0 %2511
        %2514 = vrot.lane.b32.xlu0 %v1726, 20
        %v2515 = vpop.permute.xlu0 %2514
        %2517 = vrot.lane.b32.xlu0 %v1726, 12
        %v2518 = vpop.permute.xlu0 %2517
        %v2520 = vsel %vm163, %v2506, %v2254
        %v2521 = vsel %vm165, %v2520, %v2509
        %v2522 = vsel %vm167, %v2521, %v2261
        %v2523 = vsel %vm169, %v2522, %v2512
        %v2524 = vsel %vm171, %v2523, %v2515
        %v2525 = vsel %vm173, %v2524, %v2518
        %v2526 = vsel %vm175, %v2525, %v2277
        %2528 = vrot.lane.b32.xlu0 %v2394, 64
        %v2529 = vpop.permute.xlu0 %2528
        %2532 = vrot.lane.b32.xlu0 %v2438, 64
        %v2533 = vpop.permute.xlu0 %2532
        %2536 = vrot.lane.b32.xlu0 %v2482, 64
        %v2537 = vpop.permute.xlu0 %2536
        %2540 = vrot.lane.b32.xlu0 %v2526, 64
        %v2541 = vpop.permute.xlu0 %2540
        %v2543 = vsel %vm396, %v2372, %v2529
        %v2544 = vsel %vm396, %v2416, %v2533
        %v2545 = vsel %vm396, %v2460, %v2537
        %v2546 = vsel %vm396, %v2504, %v2541
        %2547 = vst [vmem:[%s1530 + $0x60] sm:$0xff] %v2543
        %2548 = vst [vmem:[%s1530 + $0x68] sm:$0xff] %v2544
        %2549 = vst [vmem:[%s1530 + $0x70] sm:$0xff] %v2545
        %2550 = vst [vmem:[%s1530 + $0x78] sm:$0xff] %v2546
        %s2551 = sand.u32 %s52, 1
        %s2552 = scalar_lea.sflag [#allocation4], %s2551
        %s2553 = sand.u32 %s52, 1
        %s2554 = smul.addr %s2553, 256
        %s2555 = scalar_lea.vmem [#allocation5], %s2554
        // Predicated region
        $region29: #{tpu_custom_call.1} parent=23 // pred_check
          %p2556 = pneg %p62
        $region30: #{tpu_custom_call.1} parent=23 // pred_check_branch
          %2558 = sbr.rel (%p2556) target = $region32
        $region31: #{tpu_custom_call.1} parent=23 // pred_region
          %s2560 = ssub.s32 4096, 4096
          %2561 = vsyncadd %s2552, %s2560
          %s2562 = smul.addr %s18, 16
          %s2563 = smul.addr %s2562, 128
          %s2564 = scalar_lea.hbm %s1, %s2563
          %s2565 = sshll.u32 %s2555, 4
          %s2566 = int_to_ptr.vmem [resolvable:$true] %s2565
          %2571 = dma.vmem_to_hbm [thread:$0]  %s2566, 4096, %s2564, %s2552, 2048, 4096, 128
        $region32: #{tpu_custom_call.1} parent=23 // pred_fallthru
          _
      $region24: #{tpu_custom_call.1} parent=5 // pred_fallthru
        _
      %p2572 = scmp.le.s32.totalorder 2, %s13
      // Predicated region
      $region33: #{tpu_custom_call.1} parent=5 // pred_check
        %p2573 = pneg %p2572
      $region34: #{tpu_custom_call.1} parent=5 // pred_check_branch
        %2575 = sbr.rel (%p2573) target = $region36
      $region35: #{tpu_custom_call.1} parent=5 // pred_region
        %s2576 = ssub.s32 %s13, 2
        // Predicated region
        $region37: #{tpu_custom_call.1} parent=35 // pred_check
          %p2577 = pneg %p68
        $region38: #{tpu_custom_call.1} parent=35 // pred_check_branch
          %2579 = sbr.rel (%p2577) target = $region40
        $region39: #{tpu_custom_call.1} parent=35 // pred_region
          %s2580 = sand.u32 %s53, 1
          %s2581 = scalar_lea.sflag [#allocation4], %s2580
          %s2582 = sand.u32 %s53, 1
          %s2583 = smul.addr %s2582, 256
          %s2584 = scalar_lea.vmem [#allocation5], %s2583
          %2585 = dma.done %s2581, 4096
        $region40: #{tpu_custom_call.1} parent=35 // pred_fallthru
          _
      $region36: #{tpu_custom_call.1} parent=5 // pred_fallthru
        _
    $region6: #{tpu_custom_call.1} parent=1 // loop_footer
      %s17 = sadd.s32 1, %s13
    $region7: #{tpu_custom_call.1} parent=1 // loop_footer_branch
      %12 = sbr.rel target = $region3
    $region8: #{tpu_custom_call.1} parent=1 // loop_exit
      _
    %2586 = vsyncpa [#allocation3], 1
    %s2587 = scalar_lea.sflag [#allocation3], 1
    %2588 = vsyncpa %s2587, 1
    %2589 = vsyncpa [#allocation4], 1
    %s2590 = scalar_lea.sflag [#allocation4], 1
    %2591 = vsyncpa %s2590, 1

</llo_original>
